<compile_context>
chip_gen: v7x
topology: tpu7x:2x2x1
jax: 0.10.0
libtpu: 0.0.40
codegen_flags: <defaults>
</compile_context>

<pallas_src>
import jax
import jax.numpy as jnp
from jax.experimental import pallas as pl
from jax.experimental.pallas import tpu as pltpu

# ---------------- configuration (small, consistent with module) ----------------
B = 2            # batch
C_IN = 32        # input_shape[-1].channels
H = W = 8        # spatial size of last feature map
C = 16           # cfg.MODEL.FLOWSETNET.CODE_CHANNELS
E = 4            # cfg.MODEL.FLOWSETNET.ELEMENT_DIM   (out = E+1)
N = 8            # cfg.MODEL.FLOWSETNET.MAX_ELEMENT_NUM
G = 1            # cfg.MODEL.FLOWSETNET.GNN_ITERATION
HID = 512        # hidden width hard-coded in the module's MLPs
F32 = jnp.float32
BF16 = jnp.bfloat16


# ------------------------------- Pallas kernel ---------------------------------
def _exch_decoder_kernel(
    xf_ref, pool_ref,
    fiW1, fib1, fiW2, fib2, fiW3, fib3,
    rb_ref, em_ref,
    piW1, pib1, piW2, pib2,
    ri_ref, rj_ref,
    niW1, nib1, niW2, nib2,
    mj_ref,
    decW, decb,
    out_ref,
):
    # ---- AdaptiveAvgPool2d((1,1)) + flatten, as an MXU reduction -------------
    # pool_mat is a block-diagonal (B, B*H*W) matrix of 1/(H*W): keeps the
    # spatial mean off the XLU and lets it pipeline with the fiW1 matmul.
    pooled = jnp.dot(pool_ref[...], xf_ref[...], preferred_element_type=F32)    # (B, C_IN)

    # ---- fi_encoder: C_IN -> 512 -> 512 -> 2C (merged [scale | shift] head) --
    h = jnp.maximum(jnp.dot(pooled, fiW1[...].astype(F32),
                            preferred_element_type=F32) + fib1[...], 0.0)
    h = jnp.maximum(jnp.dot(h, fiW2[...].astype(F32),
                            preferred_element_type=F32) + fib2[...], 0.0)
    fi_code = jnp.dot(h, fiW3[...].astype(F32),
                      preferred_element_type=F32) + fib3[...]                   # (B, 2C)

    # Broadcast the per-batch code over the N set elements (tiny selection matmul).
    fi_rep = jnp.dot(rb_ref[...], fi_code, preferred_element_type=F32)          # (B*N, 2C)
    # em_encoder(init_ep) is input-independent: precomputed in the wrapper.
    x = fi_rep[:, :C] * em_ref[...] + fi_rep[:, C:]                             # (B*N, C)

    ri = ri_ref[...]          # (B*N*N, B*N)  x_rep[b,i,j]   = x[b,i]
    rj = rj_ref[...]          # (B*N*N, B*N)  pc_rep[b,i,j]  = pi_code[b,j]
    mj = mj_ref[...]          # (B*N, B*N*N)  mean over j

    # ---- PairwiseEmbedding, gnn_iter times (rows ordered (b, i, j)) ----------
    for g in range(G):
        hp = jnp.maximum(jnp.dot(x, piW1[g].astype(F32),
                                 preferred_element_type=F32) + pib1[g], 0.0)
        pi_code = jnp.dot(hp, piW2[g].astype(F32),
                          preferred_element_type=F32) + pib2[g]                 # (B*N, 2C)
        # Build the pairwise tensor directly in (B*N*N, C) layout with constant
        # selection matmuls — no (N, N, C) reshapes / relayouts.
        x_rep = jnp.dot(ri, x, preferred_element_type=F32)                      # (B*N*N, C)
        pc_rep = jnp.dot(rj, pi_code, preferred_element_type=F32)               # (B*N*N, 2C)
        y = pc_rep[:, :C] * x_rep + pc_rep[:, C:]                               # (B*N*N, C)
        hn = jnp.maximum(jnp.dot(y, niW1[g].astype(F32),
                                 preferred_element_type=F32) + nib1[g], 0.0)
        z = jnp.dot(hn, niW2[g].astype(F32),
                    preferred_element_type=F32) + nib2[g]                       # (B*N*N, C)
        # mean over j folded into an MXU matmul with a constant 1/N matrix.
        x = jnp.dot(mj, z, preferred_element_type=F32)                          # (B*N, C)

    # ---- decoder: C -> E+1 (sigmoid on the mask column applied in wrapper) ---
    out_ref[...] = jnp.dot(x, decW[...], preferred_element_type=F32) + decb[...]


# ------------------------------- host wrapper -----------------------------------
@jax.jit
def exchangeable_decoder(x_nchw, params):
    """x_nchw: (B, C_IN, H, W) float32. Returns (elements (B,N,E), mask (B,N))."""
    p = params
    HW = H * W

    # glue: NCHW -> (B*H*W, C_IN), channels in lanes
    xf = jnp.transpose(x_nchw, (0, 2, 3, 1)).reshape(B * HW, C_IN)

    # Hoisted: em_encoder depends only on parameters (init_ep is broadcast over
    # the batch), so compute it once here and tile over batch.
    ep = p["init_ep"][0]                                                        # (N, E+1)
    em = jax.nn.relu(ep @ p["emW1"] + p["emb1"]) @ p["emW2"] + p["emb2"]        # (N, C)
    em_tiled = jnp.tile(em, (B, 1))                                             # (B*N, C)

    # Merged [scale | shift] heads (columns reordered from the (..., C, 2) view).
    fiW3m = jnp.concatenate([p["fiW3s"], p["fiW3t"]], axis=1)                   # (HID, 2C) bf16
    fib3m = jnp.concatenate([p["fib3s"], p["fib3t"]], axis=1)                   # (1, 2C)
    piW2m = jnp.concatenate([p["piW2s"], p["piW2t"]], axis=2)                   # (G, HID, 2C) bf16
    pib2m = jnp.concatenate([p["pib2s"], p["pib2t"]], axis=2)                   # (G, 1, 2C)

    # Constant selection / averaging matrices (all tiny; keep everything on MXU).
    pool_mat = jnp.kron(jnp.eye(B, dtype=F32), jnp.full((1, HW), 1.0 / HW, F32))    # (B, B*HW)
    rb = jnp.kron(jnp.eye(B, dtype=F32), jnp.ones((N, 1), F32))                     # (B*N, B)
    ri = jnp.kron(jnp.eye(B * N, dtype=F32), jnp.ones((N, 1), F32))                 # (B*N*N, B*N)
    rj = jnp.kron(jnp.eye(B, dtype=F32),
                  jnp.kron(jnp.ones((N, 1), F32), jnp.eye(N, dtype=F32)))           # (B*N*N, B*N)
    mj = jnp.kron(jnp.eye(B * N, dtype=F32), jnp.full((1, N), 1.0 / N, F32))        # (B*N, B*N*N)

    args = (
        xf, pool_mat,
        p["fiW1"], p["fib1"], p["fiW2"], p["fib2"], fiW3m, fib3m,
        rb, em_tiled,
        p["piW1"], p["pib1"], piW2m, pib2m,
        ri, rj,
        p["niW1"], p["nib1"], p["niW2"], p["nib2"],
        mj,
        p["decW"], p["decb"],
    )

    flops = 2 * (
        B * HW * C_IN                                            # pooling matmul
        + B * (C_IN * HID + HID * HID + HID * 2 * C)             # fi encoder
        + B * N * B * 2 * C                                      # fi broadcast
        + G * (B * N * (C * HID + HID * 2 * C)                   # pi encoder
               + B * N * N * B * N * 3 * C                       # pair expansion
               + B * N * N * (C * HID + HID * C)                 # ni encoder
               + B * N * B * N * N * C)                          # mean over j
        + B * N * C * (E + 1)                                    # decoder
    )
    bytes_accessed = sum(int(a.size) * a.dtype.itemsize for a in args) \
        + B * N * (E + 1) * 4
    cost = pl.CostEstimate(flops=int(flops), transcendentals=0,
                           bytes_accessed=int(bytes_accessed))

    # Single invocation (no batch grid): on 1-TC chips (v5e/v6e) the batch grid
    # is a serial loop with per-step overhead; everything fits VMEM comfortably.
    out = pl.pallas_call(
        _exch_decoder_kernel,
        out_shape=jax.ShapeDtypeStruct((B * N, E + 1), F32),
        cost_estimate=cost,
    )(*args)

    out = out.reshape(B, N, E + 1)
    return out[..., :E], jax.nn.sigmoid(out[..., E])


# --------------------------- deterministic parameters ---------------------------
def make_params(key):
    keys = iter(jax.random.split(key, 128))

    def dense(i, o, scale=0.1):
        w = jax.random.normal(next(keys), (i, o), F32) * scale
        b = jax.random.normal(next(keys), (1, o), F32) * scale
        return w, b

    p = {}
    # fi_encoder: MLP(C_IN, 2C, [512, 512], out_shape=(C, 2))
    p["fiW1"], p["fib1"] = dense(C_IN, HID)
    p["fiW2"], p["fib2"] = dense(HID, HID)
    fiW3, fib3 = dense(HID, 2 * C)
    p["fiW3s"], p["fiW3t"] = fiW3[:, 0::2], fiW3[:, 1::2]     # (...,C,2) view: col 0 / col 1
    p["fib3s"], p["fib3t"] = fib3[:, 0::2], fib3[:, 1::2]
    # em_encoder: MLP(E+1, C, [512])  (hoisted out of the kernel; stays f32)
    p["emW1"], p["emb1"] = dense(E + 1, HID)
    p["emW2"], p["emb2"] = dense(HID, C)
    # PairwiseEmbedding x G (stacked along leading iteration axis)
    piW1, pib1, piW2s, pib2s, piW2t, pib2t = [], [], [], [], [], []
    niW1, nib1, niW2, nib2 = [], [], [], []
    for _ in range(G):
        w1, b1 = dense(C, HID); piW1.append(w1); pib1.append(b1)
        w2, b2 = dense(HID, 2 * C)
        piW2s.append(w2[:, 0::2]); piW2t.append(w2[:, 1::2])
        pib2s.append(b2[:, 0::2]); pib2t.append(b2[:, 1::2])
        nw1, nb1 = dense(C, HID); niW1.append(nw1); nib1.append(nb1)
        nw2, nb2 = dense(HID, C); niW2.append(nw2); nib2.append(nb2)
    p["piW1"], p["pib1"] = jnp.stack(piW1), jnp.stack(pib1)
    p["piW2s"], p["pib2s"] = jnp.stack(piW2s), jnp.stack(pib2s)
    p["piW2t"], p["pib2t"] = jnp.stack(piW2t), jnp.stack(pib2t)
    p["niW1"], p["nib1"] = jnp.stack(niW1), jnp.stack(nib1)
    p["niW2"], p["nib2"] = jnp.stack(niW2), jnp.stack(nib2)
    # decoder: MLP(C, E+1, [])  == single Linear
    p["decW"], p["decb"] = dense(C, E + 1)
    # init_ep ~ N(0, 1), shape (1, max_num, element_dim + 1)
    p["init_ep"] = jax.random.normal(next(keys), (1, N, E + 1), F32)

    # Store the heavy hidden-layer weights in bf16 (halves weight HBM traffic);
    # the kernel and the reference both upcast them to f32, so math stays f32.
    for name in ("fiW1", "fiW2", "fiW3s", "fiW3t",
                 "piW1", "piW2s", "piW2t", "niW1", "niW2"):
        p[name] = p[name].astype(BF16)
    return p


# ------------------------------- plain-JAX reference ----------------------------
def reference(x_nchw, p):
    q = {k: v.astype(F32) for k, v in p.items()}              # exact upcast of bf16 params
    pooled = jnp.mean(x_nchw, axis=(2, 3))                                    # (B, C_IN)
    h = jax.nn.relu(pooled @ q["fiW1"] + q["fib1"])
    h = jax.nn.relu(h @ q["fiW2"] + q["fib2"])
    fi_scale = h @ q["fiW3s"] + q["fib3s"]                                    # (B, C)
    fi_shift = h @ q["fiW3t"] + q["fib3t"]
    ep = jnp.broadcast_to(q["init_ep"], (B, N, E + 1))
    h = jax.nn.relu(ep @ q["emW1"] + q["emb1"])
    em = h @ q["emW2"] + q["emb2"]                                            # (B, N, C)
    x = fi_scale[:, None, :] * em + fi_shift[:, None, :]
    for g in range(G):
        hp = jax.nn.relu(x @ q["piW1"][g] + q["pib1"][g])
        pi_scale = hp @ q["piW2s"][g] + q["pib2s"][g]                         # (B, N, C)
        pi_shift = hp @ q["piW2t"][g] + q["pib2t"][g]
        y = pi_scale[:, None, :, :] * x[:, :, None, :] + pi_shift[:, None, :, :]  # (B,N,N,C)
        hn = jax.nn.relu(y @ q["niW1"][g] + q["nib1"][g])
        z = hn @ q["niW2"][g] + q["nib2"][g]
        x = jnp.mean(z, axis=2)                                               # mean(-2)
    out = x @ q["decW"] + q["decb"]                                           # (B, N, E+1)
    return out[..., :E], jax.nn.sigmoid(out[..., E])


# ------------------------------------- main -------------------------------------
if __name__ == "__main__":
    key = jax.random.PRNGKey(0)
    k_x, k_p = jax.random.split(key)
    x = jax.random.normal(k_x, (B, C_IN, H, W), F32)          # feature list's last entry (NCHW)
    params = make_params(k_p)

    elems, mask = exchangeable_decoder(x, params)
    jax.block_until_ready((elems, mask))

    ref_elems, ref_mask = reference(x, params)
    assert elems.shape == (B, N, E) and mask.shape == (B, N)
    assert jnp.allclose(elems, ref_elems, atol=3e-3, rtol=3e-3)
    assert jnp.allclose(mask, ref_mask, atol=3e-3, rtol=3e-3)

    print("KERNEL_OK")
</pallas_src>

<mosaic_0001>
module attributes {stable_mosaic.version = 11 : i64} {
  func.func @_exch_decoder_kernel(%arg0: memref<128x32xf32, #tpu.memory_space<vmem>>, %arg1: memref<2x128xf32, #tpu.memory_space<vmem>>, %arg2: memref<32x512xbf16, #tpu.memory_space<vmem>>, %arg3: memref<1x512xf32, #tpu.memory_space<vmem>>, %arg4: memref<512x512xbf16, #tpu.memory_space<vmem>>, %arg5: memref<1x512xf32, #tpu.memory_space<vmem>>, %arg6: memref<512x32xbf16, #tpu.memory_space<vmem>>, %arg7: memref<1x32xf32, #tpu.memory_space<vmem>>, %arg8: memref<16x2xf32, #tpu.memory_space<vmem>>, %arg9: memref<16x16xf32, #tpu.memory_space<vmem>>, %arg10: memref<1x16x512xbf16, #tpu.memory_space<vmem>>, %arg11: memref<1x1x512xf32, #tpu.memory_space<vmem>>, %arg12: memref<1x512x32xbf16, #tpu.memory_space<vmem>>, %arg13: memref<1x1x32xf32, #tpu.memory_space<vmem>>, %arg14: memref<128x16xf32, #tpu.memory_space<vmem>>, %arg15: memref<128x16xf32, #tpu.memory_space<vmem>>, %arg16: memref<1x16x512xbf16, #tpu.memory_space<vmem>>, %arg17: memref<1x1x512xf32, #tpu.memory_space<vmem>>, %arg18: memref<1x512x16xbf16, #tpu.memory_space<vmem>>, %arg19: memref<1x1x16xf32, #tpu.memory_space<vmem>>, %arg20: memref<16x128xf32, #tpu.memory_space<vmem>>, %arg21: memref<16x5xf32, #tpu.memory_space<vmem>>, %arg22: memref<1x5xf32, #tpu.memory_space<vmem>>, %arg23: memref<16x5xf32, #tpu.memory_space<vmem>>) attributes {dimension_semantics = [], scalar_prefetch = 0 : i64, scratch_operands = 0 : i64, tpu.core_type = #tpu.core_type<tc>} {
    %c0 = arith.constant 0 : index
    %c0_0 = arith.constant 0 : index
    %0 = vector.load %arg1[%c0, %c0_0] : memref<2x128xf32, #tpu.memory_space<vmem>>, vector<2x128xf32>
    %c0_1 = arith.constant 0 : index
    %c0_2 = arith.constant 0 : index
    %1 = vector.load %arg0[%c0_1, %c0_2] : memref<128x32xf32, #tpu.memory_space<vmem>>, vector<128x32xf32>
    %cst = arith.constant dense<0.000000e+00> : vector<2x32xf32>
    %2 = tpu.matmul %0, %1, %cst {dimension_numbers = #tpu.dot_dimension_numbers<[1], [0], [0], [1], [0, 0, 1, 1], [], []>} : vector<2x128xf32>, vector<128x32xf32>, vector<2x32xf32> -> vector<2x32xf32>
    %c0_3 = arith.constant 0 : index
    %c0_4 = arith.constant 0 : index
    %3 = vector.load %arg2[%c0_3, %c0_4] : memref<32x512xbf16, #tpu.memory_space<vmem>>, vector<32x512xbf16>
    %4 = arith.extf %3 : vector<32x512xbf16> to vector<32x512xf32>
    %cst_5 = arith.constant dense<0.000000e+00> : vector<2x512xf32>
    %5 = tpu.matmul %2, %4, %cst_5 {dimension_numbers = #tpu.dot_dimension_numbers<[1], [0], [0], [1], [0, 0, 1, 1], [], []>} : vector<2x32xf32>, vector<32x512xf32>, vector<2x512xf32> -> vector<2x512xf32>
    %c0_6 = arith.constant 0 : index
    %c0_7 = arith.constant 0 : index
    %6 = vector.load %arg3[%c0_6, %c0_7] : memref<1x512xf32, #tpu.memory_space<vmem>>, vector<1x512xf32>
    %7 = vector.broadcast %6 : vector<1x512xf32> to vector<2x512xf32>
    %8 = arith.addf %5, %7 : vector<2x512xf32>
    %cst_8 = arith.constant 0.000000e+00 : f32
    %9 = vector.broadcast %cst_8 : f32 to vector<2x512xf32>
    %10 = arith.maximumf %8, %9 : vector<2x512xf32>
    %c0_9 = arith.constant 0 : index
    %c0_10 = arith.constant 0 : index
    %11 = vector.load %arg4[%c0_9, %c0_10] : memref<512x512xbf16, #tpu.memory_space<vmem>>, vector<512x512xbf16>
    %12 = arith.extf %11 : vector<512x512xbf16> to vector<512x512xf32>
    %cst_11 = arith.constant dense<0.000000e+00> : vector<2x512xf32>
    %13 = tpu.matmul %10, %12, %cst_11 {dimension_numbers = #tpu.dot_dimension_numbers<[1], [0], [0], [1], [0, 0, 1, 1], [], []>} : vector<2x512xf32>, vector<512x512xf32>, vector<2x512xf32> -> vector<2x512xf32>
    %c0_12 = arith.constant 0 : index
    %c0_13 = arith.constant 0 : index
    %14 = vector.load %arg5[%c0_12, %c0_13] : memref<1x512xf32, #tpu.memory_space<vmem>>, vector<1x512xf32>
    %15 = vector.broadcast %14 : vector<1x512xf32> to vector<2x512xf32>
    %16 = arith.addf %13, %15 : vector<2x512xf32>
    %cst_14 = arith.constant 0.000000e+00 : f32
    %17 = vector.broadcast %cst_14 : f32 to vector<2x512xf32>
    %18 = arith.maximumf %16, %17 : vector<2x512xf32>
    %c0_15 = arith.constant 0 : index
    %c0_16 = arith.constant 0 : index
    %19 = vector.load %arg6[%c0_15, %c0_16] : memref<512x32xbf16, #tpu.memory_space<vmem>>, vector<512x32xbf16>
    %20 = arith.extf %19 : vector<512x32xbf16> to vector<512x32xf32>
    %cst_17 = arith.constant dense<0.000000e+00> : vector<2x32xf32>
    %21 = tpu.matmul %18, %20, %cst_17 {dimension_numbers = #tpu.dot_dimension_numbers<[1], [0], [0], [1], [0, 0, 1, 1], [], []>} : vector<2x512xf32>, vector<512x32xf32>, vector<2x32xf32> -> vector<2x32xf32>
    %c0_18 = arith.constant 0 : index
    %c0_19 = arith.constant 0 : index
    %22 = vector.load %arg7[%c0_18, %c0_19] : memref<1x32xf32, #tpu.memory_space<vmem>>, vector<1x32xf32>
    %23 = vector.broadcast %22 : vector<1x32xf32> to vector<2x32xf32>
    %24 = arith.addf %21, %23 : vector<2x32xf32>
    %c0_20 = arith.constant 0 : index
    %c0_21 = arith.constant 0 : index
    %25 = vector.load %arg8[%c0_20, %c0_21] : memref<16x2xf32, #tpu.memory_space<vmem>>, vector<16x2xf32>
    %cst_22 = arith.constant dense<0.000000e+00> : vector<16x32xf32>
    %26 = tpu.matmul %25, %24, %cst_22 {dimension_numbers = #tpu.dot_dimension_numbers<[1], [0], [0], [1], [0, 0, 1, 1], [], []>} : vector<16x2xf32>, vector<2x32xf32>, vector<16x32xf32> -> vector<16x32xf32>
    %27 = vector.extract_strided_slice %26 {offsets = [0, 0], sizes = [16, 16], strides = [1, 1]} : vector<16x32xf32> to vector<16x16xf32>
    %c0_23 = arith.constant 0 : index
    %c0_24 = arith.constant 0 : index
    %28 = vector.load %arg9[%c0_23, %c0_24] : memref<16x16xf32, #tpu.memory_space<vmem>>, vector<16x16xf32>
    %29 = arith.mulf %27, %28 : vector<16x16xf32>
    %30 = vector.extract_strided_slice %26 {offsets = [0, 16], sizes = [16, 16], strides = [1, 1]} : vector<16x32xf32> to vector<16x16xf32>
    %31 = arith.addf %29, %30 : vector<16x16xf32>
    %c0_25 = arith.constant 0 : index
    %c0_26 = arith.constant 0 : index
    %32 = vector.load %arg14[%c0_25, %c0_26] : memref<128x16xf32, #tpu.memory_space<vmem>>, vector<128x16xf32>
    %c0_27 = arith.constant 0 : index
    %c0_28 = arith.constant 0 : index
    %33 = vector.load %arg15[%c0_27, %c0_28] : memref<128x16xf32, #tpu.memory_space<vmem>>, vector<128x16xf32>
    %c0_29 = arith.constant 0 : index
    %c0_30 = arith.constant 0 : index
    %34 = vector.load %arg20[%c0_29, %c0_30] : memref<16x128xf32, #tpu.memory_space<vmem>>, vector<16x128xf32>
    %c0_31 = arith.constant 0 : index
    %c0_32 = arith.constant 0 : index
    %c0_33 = arith.constant 0 : index
    %35 = vector.load %arg10[%c0_31, %c0_32, %c0_33] : memref<1x16x512xbf16, #tpu.memory_space<vmem>>, vector<1x16x512xbf16>
    %36 = vector.shape_cast %35 : vector<1x16x512xbf16> to vector<16x512xbf16>
    %37 = arith.extf %36 : vector<16x512xbf16> to vector<16x512xf32>
    %cst_34 = arith.constant dense<0.000000e+00> : vector<16x512xf32>
    %38 = tpu.matmul %31, %37, %cst_34 {dimension_numbers = #tpu.dot_dimension_numbers<[1], [0], [0], [1], [0, 0, 1, 1], [], []>} : vector<16x16xf32>, vector<16x512xf32>, vector<16x512xf32> -> vector<16x512xf32>
    %c0_35 = arith.constant 0 : index
    %c0_36 = arith.constant 0 : index
    %c0_37 = arith.constant 0 : index
    %39 = vector.load %arg11[%c0_35, %c0_36, %c0_37] : memref<1x1x512xf32, #tpu.memory_space<vmem>>, vector<1x1x512xf32>
    %40 = vector.shape_cast %39 : vector<1x1x512xf32> to vector<1x512xf32>
    %41 = vector.broadcast %40 : vector<1x512xf32> to vector<16x512xf32>
    %42 = arith.addf %38, %41 : vector<16x512xf32>
    %cst_38 = arith.constant 0.000000e+00 : f32
    %43 = vector.broadcast %cst_38 : f32 to vector<16x512xf32>
    %44 = arith.maximumf %42, %43 : vector<16x512xf32>
    %c0_39 = arith.constant 0 : index
    %c0_40 = arith.constant 0 : index
    %c0_41 = arith.constant 0 : index
    %45 = vector.load %arg12[%c0_39, %c0_40, %c0_41] : memref<1x512x32xbf16, #tpu.memory_space<vmem>>, vector<1x512x32xbf16>
    %46 = vector.shape_cast %45 : vector<1x512x32xbf16> to vector<512x32xbf16>
    %47 = arith.extf %46 : vector<512x32xbf16> to vector<512x32xf32>
    %cst_42 = arith.constant dense<0.000000e+00> : vector<16x32xf32>
    %48 = tpu.matmul %44, %47, %cst_42 {dimension_numbers = #tpu.dot_dimension_numbers<[1], [0], [0], [1], [0, 0, 1, 1], [], []>} : vector<16x512xf32>, vector<512x32xf32>, vector<16x32xf32> -> vector<16x32xf32>
    %c0_43 = arith.constant 0 : index
    %c0_44 = arith.constant 0 : index
    %c0_45 = arith.constant 0 : index
    %49 = vector.load %arg13[%c0_43, %c0_44, %c0_45] : memref<1x1x32xf32, #tpu.memory_space<vmem>>, vector<1x1x32xf32>
    %50 = vector.shape_cast %49 : vector<1x1x32xf32> to vector<1x32xf32>
    %51 = vector.broadcast %50 : vector<1x32xf32> to vector<16x32xf32>
    %52 = arith.addf %48, %51 : vector<16x32xf32>
    %cst_46 = arith.constant dense<0.000000e+00> : vector<128x16xf32>
    %53 = tpu.matmul %32, %31, %cst_46 {dimension_numbers = #tpu.dot_dimension_numbers<[1], [0], [0], [1], [0, 0, 1, 1], [], []>} : vector<128x16xf32>, vector<16x16xf32>, vector<128x16xf32> -> vector<128x16xf32>
    %cst_47 = arith.constant dense<0.000000e+00> : vector<128x32xf32>
    %54 = tpu.matmul %33, %52, %cst_47 {dimension_numbers = #tpu.dot_dimension_numbers<[1], [0], [0], [1], [0, 0, 1, 1], [], []>} : vector<128x16xf32>, vector<16x32xf32>, vector<128x32xf32> -> vector<128x32xf32>
    %55 = vector.extract_strided_slice %54 {offsets = [0, 0], sizes = [128, 16], strides = [1, 1]} : vector<128x32xf32> to vector<128x16xf32>
    %56 = arith.mulf %55, %53 : vector<128x16xf32>
    %57 = vector.extract_strided_slice %54 {offsets = [0, 16], sizes = [128, 16], strides = [1, 1]} : vector<128x32xf32> to vector<128x16xf32>
    %58 = arith.addf %56, %57 : vector<128x16xf32>
    %c0_48 = arith.constant 0 : index
    %c0_49 = arith.constant 0 : index
    %c0_50 = arith.constant 0 : index
    %59 = vector.load %arg16[%c0_48, %c0_49, %c0_50] : memref<1x16x512xbf16, #tpu.memory_space<vmem>>, vector<1x16x512xbf16>
    %60 = vector.shape_cast %59 : vector<1x16x512xbf16> to vector<16x512xbf16>
    %61 = arith.extf %60 : vector<16x512xbf16> to vector<16x512xf32>
    %cst_51 = arith.constant dense<0.000000e+00> : vector<128x512xf32>
    %62 = tpu.matmul %58, %61, %cst_51 {dimension_numbers = #tpu.dot_dimension_numbers<[1], [0], [0], [1], [0, 0, 1, 1], [], []>} : vector<128x16xf32>, vector<16x512xf32>, vector<128x512xf32> -> vector<128x512xf32>
    %c0_52 = arith.constant 0 : index
    %c0_53 = arith.constant 0 : index
    %c0_54 = arith.constant 0 : index
    %63 = vector.load %arg17[%c0_52, %c0_53, %c0_54] : memref<1x1x512xf32, #tpu.memory_space<vmem>>, vector<1x1x512xf32>
    %64 = vector.shape_cast %63 : vector<1x1x512xf32> to vector<1x512xf32>
    %65 = vector.broadcast %64 : vector<1x512xf32> to vector<128x512xf32>
    %66 = arith.addf %62, %65 : vector<128x512xf32>
    %cst_55 = arith.constant 0.000000e+00 : f32
    %67 = vector.broadcast %cst_55 : f32 to vector<128x512xf32>
    %68 = arith.maximumf %66, %67 : vector<128x512xf32>
    %c0_56 = arith.constant 0 : index
    %c0_57 = arith.constant 0 : index
    %c0_58 = arith.constant 0 : index
    %69 = vector.load %arg18[%c0_56, %c0_57, %c0_58] : memref<1x512x16xbf16, #tpu.memory_space<vmem>>, vector<1x512x16xbf16>
    %70 = vector.shape_cast %69 : vector<1x512x16xbf16> to vector<512x16xbf16>
    %71 = arith.extf %70 : vector<512x16xbf16> to vector<512x16xf32>
    %cst_59 = arith.constant dense<0.000000e+00> : vector<128x16xf32>
    %72 = tpu.matmul %68, %71, %cst_59 {dimension_numbers = #tpu.dot_dimension_numbers<[1], [0], [0], [1], [0, 0, 1, 1], [], []>} : vector<128x512xf32>, vector<512x16xf32>, vector<128x16xf32> -> vector<128x16xf32>
    %c0_60 = arith.constant 0 : index
    %c0_61 = arith.constant 0 : index
    %c0_62 = arith.constant 0 : index
    %73 = vector.load %arg19[%c0_60, %c0_61, %c0_62] : memref<1x1x16xf32, #tpu.memory_space<vmem>>, vector<1x1x16xf32>
    %74 = vector.shape_cast %73 : vector<1x1x16xf32> to vector<1x16xf32>
    %75 = vector.broadcast %74 : vector<1x16xf32> to vector<128x16xf32>
    %76 = arith.addf %72, %75 : vector<128x16xf32>
    %cst_63 = arith.constant dense<0.000000e+00> : vector<16x16xf32>
    %77 = tpu.matmul %34, %76, %cst_63 {dimension_numbers = #tpu.dot_dimension_numbers<[1], [0], [0], [1], [0, 0, 1, 1], [], []>} : vector<16x128xf32>, vector<128x16xf32>, vector<16x16xf32> -> vector<16x16xf32>
    %c0_64 = arith.constant 0 : index
    %c0_65 = arith.constant 0 : index
    %78 = vector.load %arg21[%c0_64, %c0_65] : memref<16x5xf32, #tpu.memory_space<vmem>>, vector<16x5xf32>
    %cst_66 = arith.constant dense<0.000000e+00> : vector<16x5xf32>
    %79 = tpu.matmul %77, %78, %cst_66 {dimension_numbers = #tpu.dot_dimension_numbers<[1], [0], [0], [1], [0, 0, 1, 1], [], []>} : vector<16x16xf32>, vector<16x5xf32>, vector<16x5xf32> -> vector<16x5xf32>
    %c0_67 = arith.constant 0 : index
    %c0_68 = arith.constant 0 : index
    %80 = vector.load %arg22[%c0_67, %c0_68] : memref<1x5xf32, #tpu.memory_space<vmem>>, vector<1x5xf32>
    %81 = vector.broadcast %80 : vector<1x5xf32> to vector<16x5xf32>
    %82 = arith.addf %79, %81 : vector<16x5xf32>
    %c0_69 = arith.constant 0 : index
    %c0_70 = arith.constant 0 : index
    %83 = vector.load %arg23[%c0_69, %c0_70] : memref<16x5xf32, #tpu.memory_space<vmem>>, vector<16x5xf32>
    tpu.vector_store %arg23[%c0_69, %c0_70], %82 {strides = array<i32>} : memref<16x5xf32, #tpu.memory_space<vmem>>, vector<16x5xf32>,
    return
  }
}

</mosaic_0001>

<llo_original>
// kernel: exchangeable_decoder.1
$region0: #{exchangeable_decoder.1}
  #allocation0 [shape = 'u32[]', space=smem, size = 0x4, offset = 0x4, fixed_abs, tag = 'smem constant byte address 0x4 - core index']
  #allocation1 [shape = 'u32[144,128]{1,0:T(1,128)}', space=vmem, size = 0x12000, scoped, tag = 'internal scratch']
  %s0 = inlined_call_operand.vmem [shape: f32[128,32], index: 0, kind: input, shape index: {}]
  %s1 = inlined_call_operand.vmem [shape: f32[2,128], index: 1, kind: input, shape index: {}]
  %s2 = inlined_call_operand.vmem [shape: bf16[32,512], index: 2, kind: input, shape index: {}]
  %s3 = inlined_call_operand.vmem [shape: f32[1,512], index: 3, kind: input, shape index: {}]
  %s4 = inlined_call_operand.vmem [shape: bf16[512,512], index: 4, kind: input, shape index: {}]
  %s5 = inlined_call_operand.vmem [shape: f32[1,512], index: 5, kind: input, shape index: {}]
  %s6 = inlined_call_operand.vmem [shape: bf16[512,32], index: 6, kind: input, shape index: {}]
  %s7 = inlined_call_operand.vmem [shape: f32[1,32], index: 7, kind: input, shape index: {}]
  %s8 = inlined_call_operand.vmem [shape: f32[16,2], index: 8, kind: input, shape index: {}]
  %s9 = inlined_call_operand.vmem [shape: f32[16,16], index: 9, kind: input, shape index: {}]
  %s10 = inlined_call_operand.vmem [shape: bf16[1,16,512], index: 10, kind: input, shape index: {}]
  %s11 = inlined_call_operand.vmem [shape: f32[1,1,512], index: 11, kind: input, shape index: {}]
  %s12 = inlined_call_operand.vmem [shape: bf16[1,512,32], index: 12, kind: input, shape index: {}]
  %s13 = inlined_call_operand.vmem [shape: f32[1,1,32], index: 13, kind: input, shape index: {}]
  %s14 = inlined_call_operand.vmem [shape: f32[128,16], index: 14, kind: input, shape index: {}]
  %s15 = inlined_call_operand.vmem [shape: f32[128,16], index: 15, kind: input, shape index: {}]
  %s16 = inlined_call_operand.vmem [shape: bf16[1,16,512], index: 16, kind: input, shape index: {}]
  %s17 = inlined_call_operand.vmem [shape: f32[1,1,512], index: 17, kind: input, shape index: {}]
  %s18 = inlined_call_operand.vmem [shape: bf16[1,512,16], index: 18, kind: input, shape index: {}]
  %s19 = inlined_call_operand.vmem [shape: f32[1,1,16], index: 19, kind: input, shape index: {}]
  %s20 = inlined_call_operand.vmem [shape: f32[16,128], index: 20, kind: input, shape index: {}]
  %s21 = inlined_call_operand.vmem [shape: f32[16,5], index: 21, kind: input, shape index: {}]
  %s22 = inlined_call_operand.vmem [shape: f32[1,5], index: 22, kind: input, shape index: {}]
  %s23 = inlined_call_operand.vmem [shape: f32[16,5], index: 23, kind: output, shape index: {}]
  %s24 = sld [smem:[#allocation0]]
  $region102: #{exchangeable_decoder.1} parent=0
    _
  %s26 = ssub.s32 1, %s24
  %s27 = scalar_select 0, %s26, %s24
  // Predicated region
  $region2: #{exchangeable_decoder.1} parent=0 // pred_check
    _
  $region3: #{exchangeable_decoder.1} parent=0 // pred_check_branch
    %29 = sbr.rel (0) target = $region5
  $region4: #{exchangeable_decoder.1} parent=0 // pred_region
    _
  $region5: #{exchangeable_decoder.1} parent=0 // pred_fallthru
    _
  // Predicated region
  $region6: #{exchangeable_decoder.1} parent=0 // pred_check
    _
  $region7: #{exchangeable_decoder.1} parent=0 // pred_check_branch
    %31 = sbr.rel (0) target = $region9
  $region8: #{exchangeable_decoder.1} parent=0 // pred_region
    _
  $region9: #{exchangeable_decoder.1} parent=0 // pred_fallthru
    _
  // Predicated region
  $region10: #{exchangeable_decoder.1} parent=0 // pred_check
    _
  $region11: #{exchangeable_decoder.1} parent=0 // pred_check_branch
    %33 = sbr.rel (0) target = $region13
  $region12: #{exchangeable_decoder.1} parent=0 // pred_region
    _
  $region13: #{exchangeable_decoder.1} parent=0 // pred_fallthru
    _
  // Predicated region
  $region14: #{exchangeable_decoder.1} parent=0 // pred_check
    _
  $region15: #{exchangeable_decoder.1} parent=0 // pred_check_branch
    %35 = sbr.rel (0) target = $region17
  $region16: #{exchangeable_decoder.1} parent=0 // pred_region
    _
  $region17: #{exchangeable_decoder.1} parent=0 // pred_fallthru
    _
  // Predicated region
  $region18: #{exchangeable_decoder.1} parent=0 // pred_check
    _
  $region19: #{exchangeable_decoder.1} parent=0 // pred_check_branch
    %37 = sbr.rel (0) target = $region21
  $region20: #{exchangeable_decoder.1} parent=0 // pred_region
    _
  $region21: #{exchangeable_decoder.1} parent=0 // pred_fallthru
    _
  // Predicated region
  $region22: #{exchangeable_decoder.1} parent=0 // pred_check
    _
  $region23: #{exchangeable_decoder.1} parent=0 // pred_check_branch
    %39 = sbr.rel (0) target = $region25
  $region24: #{exchangeable_decoder.1} parent=0 // pred_region
    _
  $region25: #{exchangeable_decoder.1} parent=0 // pred_fallthru
    _
  // Predicated region
  $region26: #{exchangeable_decoder.1} parent=0 // pred_check
    _
  $region27: #{exchangeable_decoder.1} parent=0 // pred_check_branch
    %41 = sbr.rel (0) target = $region29
  $region28: #{exchangeable_decoder.1} parent=0 // pred_region
    _
  $region29: #{exchangeable_decoder.1} parent=0 // pred_fallthru
    _
  // Predicated region
  $region30: #{exchangeable_decoder.1} parent=0 // pred_check
    _
  $region31: #{exchangeable_decoder.1} parent=0 // pred_check_branch
    %43 = sbr.rel (0) target = $region33
  $region32: #{exchangeable_decoder.1} parent=0 // pred_region
    _
  $region33: #{exchangeable_decoder.1} parent=0 // pred_fallthru
    _
  // Predicated region
  $region34: #{exchangeable_decoder.1} parent=0 // pred_check
    _
  $region35: #{exchangeable_decoder.1} parent=0 // pred_check_branch
    %45 = sbr.rel (0) target = $region37
  $region36: #{exchangeable_decoder.1} parent=0 // pred_region
    _
  $region37: #{exchangeable_decoder.1} parent=0 // pred_fallthru
    _
  // Predicated region
  $region38: #{exchangeable_decoder.1} parent=0 // pred_check
    _
  $region39: #{exchangeable_decoder.1} parent=0 // pred_check_branch
    %47 = sbr.rel (0) target = $region41
  $region40: #{exchangeable_decoder.1} parent=0 // pred_region
    _
  $region41: #{exchangeable_decoder.1} parent=0 // pred_fallthru
    _
  // Predicated region
  $region42: #{exchangeable_decoder.1} parent=0 // pred_check
    _
  $region43: #{exchangeable_decoder.1} parent=0 // pred_check_branch
    %49 = sbr.rel (0) target = $region45
  $region44: #{exchangeable_decoder.1} parent=0 // pred_region
    _
  $region45: #{exchangeable_decoder.1} parent=0 // pred_fallthru
    _
  // Predicated region
  $region46: #{exchangeable_decoder.1} parent=0 // pred_check
    _
  $region47: #{exchangeable_decoder.1} parent=0 // pred_check_branch
    %51 = sbr.rel (0) target = $region49
  $region48: #{exchangeable_decoder.1} parent=0 // pred_region
    _
  $region49: #{exchangeable_decoder.1} parent=0 // pred_fallthru
    _
  // Predicated region
  $region50: #{exchangeable_decoder.1} parent=0 // pred_check
    _
  $region51: #{exchangeable_decoder.1} parent=0 // pred_check_branch
    %53 = sbr.rel (0) target = $region53
  $region52: #{exchangeable_decoder.1} parent=0 // pred_region
    _
  $region53: #{exchangeable_decoder.1} parent=0 // pred_fallthru
    _
  // Predicated region
  $region54: #{exchangeable_decoder.1} parent=0 // pred_check
    _
  $region55: #{exchangeable_decoder.1} parent=0 // pred_check_branch
    %55 = sbr.rel (0) target = $region57
  $region56: #{exchangeable_decoder.1} parent=0 // pred_region
    _
  $region57: #{exchangeable_decoder.1} parent=0 // pred_fallthru
    _
  // Predicated region
  $region58: #{exchangeable_decoder.1} parent=0 // pred_check
    _
  $region59: #{exchangeable_decoder.1} parent=0 // pred_check_branch
    %57 = sbr.rel (0) target = $region61
  $region60: #{exchangeable_decoder.1} parent=0 // pred_region
    _
  $region61: #{exchangeable_decoder.1} parent=0 // pred_fallthru
    _
  // Predicated region
  $region62: #{exchangeable_decoder.1} parent=0 // pred_check
    _
  $region63: #{exchangeable_decoder.1} parent=0 // pred_check_branch
    %59 = sbr.rel (0) target = $region65
  $region64: #{exchangeable_decoder.1} parent=0 // pred_region
    _
  $region65: #{exchangeable_decoder.1} parent=0 // pred_fallthru
    _
  // Predicated region
  $region66: #{exchangeable_decoder.1} parent=0 // pred_check
    _
  $region67: #{exchangeable_decoder.1} parent=0 // pred_check_branch
    %61 = sbr.rel (0) target = $region69
  $region68: #{exchangeable_decoder.1} parent=0 // pred_region
    _
  $region69: #{exchangeable_decoder.1} parent=0 // pred_fallthru
    _
  // Predicated region
  $region70: #{exchangeable_decoder.1} parent=0 // pred_check
    _
  $region71: #{exchangeable_decoder.1} parent=0 // pred_check_branch
    %63 = sbr.rel (0) target = $region73
  $region72: #{exchangeable_decoder.1} parent=0 // pred_region
    _
  $region73: #{exchangeable_decoder.1} parent=0 // pred_fallthru
    _
  // Predicated region
  $region74: #{exchangeable_decoder.1} parent=0 // pred_check
    _
  $region75: #{exchangeable_decoder.1} parent=0 // pred_check_branch
    %65 = sbr.rel (0) target = $region77
  $region76: #{exchangeable_decoder.1} parent=0 // pred_region
    _
  $region77: #{exchangeable_decoder.1} parent=0 // pred_fallthru
    _
  // Predicated region
  $region78: #{exchangeable_decoder.1} parent=0 // pred_check
    _
  $region79: #{exchangeable_decoder.1} parent=0 // pred_check_branch
    %67 = sbr.rel (0) target = $region81
  $region80: #{exchangeable_decoder.1} parent=0 // pred_region
    _
  $region81: #{exchangeable_decoder.1} parent=0 // pred_fallthru
    _
  // Predicated region
  $region82: #{exchangeable_decoder.1} parent=0 // pred_check
    _
  $region83: #{exchangeable_decoder.1} parent=0 // pred_check_branch
    %69 = sbr.rel (0) target = $region85
  $region84: #{exchangeable_decoder.1} parent=0 // pred_region
    _
  $region85: #{exchangeable_decoder.1} parent=0 // pred_fallthru
    _
  // Predicated region
  $region86: #{exchangeable_decoder.1} parent=0 // pred_check
    _
  $region87: #{exchangeable_decoder.1} parent=0 // pred_check_branch
    %71 = sbr.rel (0) target = $region89
  $region88: #{exchangeable_decoder.1} parent=0 // pred_region
    _
  $region89: #{exchangeable_decoder.1} parent=0 // pred_fallthru
    _
  // Predicated region
  $region90: #{exchangeable_decoder.1} parent=0 // pred_check
    _
  $region91: #{exchangeable_decoder.1} parent=0 // pred_check_branch
    %73 = sbr.rel (0) target = $region93
  $region92: #{exchangeable_decoder.1} parent=0 // pred_region
    _
  $region93: #{exchangeable_decoder.1} parent=0 // pred_fallthru
    _
  %v74 = vld [vmem:[%s1] sm:$0x3]
  %v75 = vld [vmem:[%s0] sm:$0xff]
  %v76 = vld [vmem:[%s0 + $0x8] sm:$0xff]
  %v77 = vld [vmem:[%s0 + $0x10] sm:$0xff]
  %v78 = vld [vmem:[%s0 + $0x18] sm:$0xff]
  %v79 = vld [vmem:[%s0 + $0x20] sm:$0xff]
  %v80 = vld [vmem:[%s0 + $0x28] sm:$0xff]
  %v81 = vld [vmem:[%s0 + $0x30] sm:$0xff]
  %v82 = vld [vmem:[%s0 + $0x38] sm:$0xff]
  %v83 = vld [vmem:[%s0 + $0x40] sm:$0xff]
  %v84 = vld [vmem:[%s0 + $0x48] sm:$0xff]
  %v85 = vld [vmem:[%s0 + $0x50] sm:$0xff]
  %v86 = vld [vmem:[%s0 + $0x58] sm:$0xff]
  %v87 = vld [vmem:[%s0 + $0x60] sm:$0xff]
  %v88 = vld [vmem:[%s0 + $0x68] sm:$0xff]
  %v89 = vld [vmem:[%s0 + $0x70] sm:$0xff]
  %v90 = vld [vmem:[%s0 + $0x78] sm:$0xff]
  %91 = vmatprep.subr.mxu0 0.0
  %92 = vmatpush1.msra.mxu0 %v75
  %93 = vmatprep.subr.mxu0 0.0
  %94 = vmatpush1.msra.mxu0 %v76
  %95 = vmatprep.subr.mxu0 0.0
  %96 = vmatpush1.msra.mxu0 %v77
  %97 = vmatprep.subr.mxu0 0.0
  %98 = vmatpush1.msra.mxu0 %v78
  %99 = vmatprep.subr.mxu0 0.0
  %100 = vmatpush1.msra.mxu0 %v79
  %101 = vmatprep.subr.mxu0 0.0
  %102 = vmatpush1.msra.mxu0 %v80
  %103 = vmatprep.subr.mxu0 0.0
  %104 = vmatpush1.msra.mxu0 %v81
  %105 = vmatprep.subr.mxu0 0.0
  %106 = vmatpush1.msra.mxu0 %v82
  %107 = vmatprep.subr.mxu0 0.0
  %108 = vmatpush1.msra.mxu0 %v83
  %109 = vmatprep.subr.mxu0 0.0
  %110 = vmatpush1.msra.mxu0 %v84
  %111 = vmatprep.subr.mxu0 0.0
  %112 = vmatpush1.msra.mxu0 %v85
  %113 = vmatprep.subr.mxu0 0.0
  %114 = vmatpush1.msra.mxu0 %v86
  %115 = vmatprep.subr.mxu0 0.0
  %116 = vmatpush1.msra.mxu0 %v87
  %117 = vmatprep.subr.mxu0 0.0
  %118 = vmatpush1.msra.mxu0 %v88
  %119 = vmatprep.subr.mxu0 0.0
  %120 = vmatpush1.msra.mxu0 %v89
  %121 = vmatprep.subr.mxu0 0.0
  %122 = vmatpush1.msra.mxu0 %v90
  %123 = vmatprep.subr.mxu0 0.0
  %124 = vmatpush1.msra.mxu0 0.0
  %125 = vmatprep.subr.mxu0 0.0
  %126 = vmatpush1.msra.mxu0 0.0
  %127 = vmatprep.subr.mxu0 0.0
  %128 = vmatpush1.msra.mxu0 0.0
  %129 = vmatprep.subr.mxu0 0.0
  %130 = vmatpush1.msra.mxu0 0.0
  %131 = vmatprep.subr.mxu0 0.0
  %132 = vmatpush1.msra.mxu0 0.0
  %133 = vmatprep.subr.mxu0 0.0
  %134 = vmatpush1.msra.mxu0 0.0
  %135 = vmatprep.subr.mxu0 0.0
  %136 = vmatpush1.msra.mxu0 0.0
  %137 = vmatprep.subr.mxu0 0.0
  %138 = vmatpush1.msra.mxu0 0.0
  %139 = vmatprep.subr.mxu0 0.0
  %140 = vmatpush1.msra.mxu0 0.0
  %141 = vmatprep.subr.mxu0 0.0
  %142 = vmatpush1.msra.mxu0 0.0
  %143 = vmatprep.subr.mxu0 0.0
  %144 = vmatpush1.msra.mxu0 0.0
  %145 = vmatprep.subr.mxu0 0.0
  %146 = vmatpush1.msra.mxu0 0.0
  %147 = vmatprep.subr.mxu0 0.0
  %148 = vmatpush1.msra.mxu0 0.0
  %149 = vmatprep.subr.mxu0 0.0
  %150 = vmatpush1.msra.mxu0 0.0
  %151 = vmatprep.subr.mxu0 0.0
  %152 = vmatpush1.msra.mxu0 0.0
  %153 = vmatprep.subr.mxu0 0.0
  %154 = vmatpush1.msra.mxu0 0.0
  %155 = vmatprep.mubr.f32.mxu0 0.0
  %156 = vmatmul.mubr.f32.gmra.mrb[0].mxu0 %v74
  %v157 = vpop.f32.mrb[0].mxu0
  %v158 = vadd.f32 0.0, %v157
  %v159 = vpop.f32.mrb[0].mxu0
  %160 = vdwg.mxu0
  %v161 = vld [vmem:[%s2] sm:$0xff]
  %v162 = vld [vmem:[%s2 + $0x8] sm:$0xff]
  %v163 = vld [vmem:[%s2 + $0x10] sm:$0xff]
  %v164 = vld [vmem:[%s2 + $0x18] sm:$0xff]
  %v165 = vld [vmem:[%s2 + $0x20] sm:$0xff]
  %v166 = vld [vmem:[%s2 + $0x28] sm:$0xff]
  %v167 = vld [vmem:[%s2 + $0x30] sm:$0xff]
  %v168 = vld [vmem:[%s2 + $0x38] sm:$0xff]
  %v169 = vunpack.c.l.bf16 %v161
  %v170 = vunpack.c.h.bf16 %v161
  %v171 = vunpack.c.l.bf16 %v162
  %v172 = vunpack.c.h.bf16 %v162
  %v173 = vunpack.c.l.bf16 %v163
  %v174 = vunpack.c.h.bf16 %v163
  %v175 = vunpack.c.l.bf16 %v164
  %v176 = vunpack.c.h.bf16 %v164
  %v177 = vunpack.c.l.bf16 %v165
  %v178 = vunpack.c.h.bf16 %v165
  %v179 = vunpack.c.l.bf16 %v166
  %v180 = vunpack.c.h.bf16 %v166
  %v181 = vunpack.c.l.bf16 %v167
  %v182 = vunpack.c.h.bf16 %v167
  %v183 = vunpack.c.l.bf16 %v168
  %v184 = vunpack.c.h.bf16 %v168
  %v185 = vld [vmem:[%s3] sm:$0xf]
  %v187 = vlaneseq
  %v188 = vshrl.u32 %v187, 7
  %v189 = vsub.s32 0, %v188
  %v190 = vrot.slane %v185, %v189
  %v191 = vlaneseq
  %v192 = vshrl.u32 %v191, 7
  %v193 = vsub.s32 1, %v192
  %v194 = vrot.slane %v185, %v193
  %v195 = vlaneseq
  %v196 = vshrl.u32 %v195, 7
  %v197 = vsub.s32 2, %v196
  %v198 = vrot.slane %v185, %v197
  %v199 = vlaneseq
  %v200 = vshrl.u32 %v199, 7
  %v201 = vsub.s32 3, %v200
  %v202 = vrot.slane %v185, %v201
  %vm207 = vcmask 261120
  %v209 = vsel %vm207, %v158, 0
  %211 = vmatprep.subr.mxu0 %v170
  %212 = vmatpush1.msra.mxu0 %v169
  %213 = vmatprep.subr.mxu0 %v174
  %214 = vmatpush1.msra.mxu0 %v173
  %215 = vmatprep.subr.mxu0 %v178
  %216 = vmatpush1.msra.mxu0 %v177
  %217 = vmatprep.subr.mxu0 %v182
  %218 = vmatpush1.msra.mxu0 %v181
  %219 = vmatprep.subr.mxu0 0.0
  %220 = vmatpush1.msra.mxu0 0.0
  %221 = vmatprep.subr.mxu0 0.0
  %222 = vmatpush1.msra.mxu0 0.0
  %223 = vmatprep.subr.mxu0 0.0
  %224 = vmatpush1.msra.mxu0 0.0
  %225 = vmatprep.subr.mxu0 0.0
  %226 = vmatpush1.msra.mxu0 0.0
  %227 = vmatprep.subr.mxu0 0.0
  %228 = vmatpush1.msra.mxu0 0.0
  %229 = vmatprep.subr.mxu0 0.0
  %230 = vmatpush1.msra.mxu0 0.0
  %231 = vmatprep.subr.mxu0 0.0
  %232 = vmatpush1.msra.mxu0 0.0
  %233 = vmatprep.subr.mxu0 0.0
  %234 = vmatpush1.msra.mxu0 0.0
  %235 = vmatprep.subr.mxu0 0.0
  %236 = vmatpush1.msra.mxu0 0.0
  %237 = vmatprep.subr.mxu0 0.0
  %238 = vmatpush1.msra.mxu0 0.0
  %239 = vmatprep.subr.mxu0 0.0
  %240 = vmatpush1.msra.mxu0 0.0
  %241 = vmatprep.subr.mxu0 0.0
  %242 = vmatpush1.msra.mxu0 0.0
  %243 = vmatprep.subr.mxu0 0.0
  %244 = vmatpush1.msra.mxu0 0.0
  %245 = vmatprep.subr.mxu0 0.0
  %246 = vmatpush1.msra.mxu0 0.0
  %247 = vmatprep.subr.mxu0 0.0
  %248 = vmatpush1.msra.mxu0 0.0
  %249 = vmatprep.subr.mxu0 0.0
  %250 = vmatpush1.msra.mxu0 0.0
  %251 = vmatprep.subr.mxu0 0.0
  %252 = vmatpush1.msra.mxu0 0.0
  %253 = vmatprep.subr.mxu0 0.0
  %254 = vmatpush1.msra.mxu0 0.0
  %255 = vmatprep.subr.mxu0 0.0
  %256 = vmatpush1.msra.mxu0 0.0
  %257 = vmatprep.subr.mxu0 0.0
  %258 = vmatpush1.msra.mxu0 0.0
  %259 = vmatprep.subr.mxu0 0.0
  %260 = vmatpush1.msra.mxu0 0.0
  %261 = vmatprep.subr.mxu0 0.0
  %262 = vmatpush1.msra.mxu0 0.0
  %263 = vmatprep.subr.mxu0 0.0
  %264 = vmatpush1.msra.mxu0 0.0
  %265 = vmatprep.subr.mxu0 0.0
  %266 = vmatpush1.msra.mxu0 0.0
  %267 = vmatprep.subr.mxu0 0.0
  %268 = vmatpush1.msra.mxu0 0.0
  %269 = vmatprep.subr.mxu0 0.0
  %270 = vmatpush1.msra.mxu0 0.0
  %271 = vmatprep.subr.mxu0 0.0
  %272 = vmatpush1.msra.mxu0 0.0
  %273 = vmatprep.subr.mxu0 0.0
  %274 = vmatpush1.msra.mxu0 0.0
  %275 = vmatprep.mubr.f32.mxu0 0.0
  %276 = vmatmul.mubr.f32.gmra.mrb[0].mxu0 %v209
  %v277 = vpop.f32.mrb[0].mxu0
  %v278 = vadd.f32 %v190, %v277
  %v279 = vpop.f32.mrb[0].mxu0
  %v280 = vadd.f32 %v194, %v279
  %281 = vdwg.mxu0
  %282 = vmatprep.subr.mxu0 %v172
  %283 = vmatpush1.msra.mxu0 %v171
  %284 = vmatprep.subr.mxu0 %v176
  %285 = vmatpush1.msra.mxu0 %v175
  %286 = vmatprep.subr.mxu0 %v180
  %287 = vmatpush1.msra.mxu0 %v179
  %288 = vmatprep.subr.mxu0 %v184
  %289 = vmatpush1.msra.mxu0 %v183
  %290 = vmatprep.subr.mxu0 0.0
  %291 = vmatpush1.msra.mxu0 0.0
  %292 = vmatprep.subr.mxu0 0.0
  %293 = vmatpush1.msra.mxu0 0.0
  %294 = vmatprep.subr.mxu0 0.0
  %295 = vmatpush1.msra.mxu0 0.0
  %296 = vmatprep.subr.mxu0 0.0
  %297 = vmatpush1.msra.mxu0 0.0
  %298 = vmatprep.subr.mxu0 0.0
  %299 = vmatpush1.msra.mxu0 0.0
  %300 = vmatprep.subr.mxu0 0.0
  %301 = vmatpush1.msra.mxu0 0.0
  %302 = vmatprep.subr.mxu0 0.0
  %303 = vmatpush1.msra.mxu0 0.0
  %304 = vmatprep.subr.mxu0 0.0
  %305 = vmatpush1.msra.mxu0 0.0
  %306 = vmatprep.subr.mxu0 0.0
  %307 = vmatpush1.msra.mxu0 0.0
  %308 = vmatprep.subr.mxu0 0.0
  %309 = vmatpush1.msra.mxu0 0.0
  %310 = vmatprep.subr.mxu0 0.0
  %311 = vmatpush1.msra.mxu0 0.0
  %312 = vmatprep.subr.mxu0 0.0
  %313 = vmatpush1.msra.mxu0 0.0
  %314 = vmatprep.subr.mxu0 0.0
  %315 = vmatpush1.msra.mxu0 0.0
  %316 = vmatprep.subr.mxu0 0.0
  %317 = vmatpush1.msra.mxu0 0.0
  %318 = vmatprep.subr.mxu0 0.0
  %319 = vmatpush1.msra.mxu0 0.0
  %320 = vmatprep.subr.mxu0 0.0
  %321 = vmatpush1.msra.mxu0 0.0
  %322 = vmatprep.subr.mxu0 0.0
  %323 = vmatpush1.msra.mxu0 0.0
  %324 = vmatprep.subr.mxu0 0.0
  %325 = vmatpush1.msra.mxu0 0.0
  %326 = vmatprep.subr.mxu0 0.0
  %327 = vmatpush1.msra.mxu0 0.0
  %328 = vmatprep.subr.mxu0 0.0
  %329 = vmatpush1.msra.mxu0 0.0
  %330 = vmatprep.subr.mxu0 0.0
  %331 = vmatpush1.msra.mxu0 0.0
  %332 = vmatprep.subr.mxu0 0.0
  %333 = vmatpush1.msra.mxu0 0.0
  %334 = vmatprep.subr.mxu0 0.0
  %335 = vmatpush1.msra.mxu0 0.0
  %336 = vmatprep.subr.mxu0 0.0
  %337 = vmatpush1.msra.mxu0 0.0
  %338 = vmatprep.subr.mxu0 0.0
  %339 = vmatpush1.msra.mxu0 0.0
  %340 = vmatprep.subr.mxu0 0.0
  %341 = vmatpush1.msra.mxu0 0.0
  %342 = vmatprep.subr.mxu0 0.0
  %343 = vmatpush1.msra.mxu0 0.0
  %344 = vmatprep.subr.mxu0 0.0
  %345 = vmatpush1.msra.mxu0 0.0
  %346 = vmatprep.mubr.f32.mxu0 0.0
  %347 = vmatmul.mubr.f32.gmra.mrb[0].mxu0 %v209
  %v348 = vpop.f32.mrb[0].mxu0
  %v349 = vadd.f32 %v198, %v348
  %v350 = vpop.f32.mrb[0].mxu0
  %v351 = vadd.f32 %v202, %v350
  %352 = vdwg.mxu0
  %v353 = vmax.f32 %v278, 0.0
  %v354 = vmax.f32 %v280, 0.0
  %v355 = vmax.f32 %v349, 0.0
  %v356 = vmax.f32 %v351, 0.0
  %v357 = vld [vmem:[%s4] sm:$0xff]
  %v358 = vld [vmem:[%s4 + $0x8] sm:$0xff]
  %v359 = vld [vmem:[%s4 + $0x10] sm:$0xff]
  %v360 = vld [vmem:[%s4 + $0x18] sm:$0xff]
  %v361 = vld [vmem:[%s4 + $0x20] sm:$0xff]
  %v362 = vld [vmem:[%s4 + $0x28] sm:$0xff]
  %v363 = vld [vmem:[%s4 + $0x30] sm:$0xff]
  %v364 = vld [vmem:[%s4 + $0x38] sm:$0xff]
  %v365 = vld [vmem:[%s4 + $0x40] sm:$0xff]
  %v366 = vld [vmem:[%s4 + $0x48] sm:$0xff]
  %v367 = vld [vmem:[%s4 + $0x50] sm:$0xff]
  %v368 = vld [vmem:[%s4 + $0x58] sm:$0xff]
  %v369 = vld [vmem:[%s4 + $0x60] sm:$0xff]
  %v370 = vld [vmem:[%s4 + $0x68] sm:$0xff]
  %v371 = vld [vmem:[%s4 + $0x70] sm:$0xff]
  %v372 = vld [vmem:[%s4 + $0x78] sm:$0xff]
  %v373 = vld [vmem:[%s4 + $0x80] sm:$0xff]
  %v374 = vld [vmem:[%s4 + $0x88] sm:$0xff]
  %v375 = vld [vmem:[%s4 + $0x90] sm:$0xff]
  %v376 = vld [vmem:[%s4 + $0x98] sm:$0xff]
  %v377 = vld [vmem:[%s4 + $0xa0] sm:$0xff]
  %v378 = vld [vmem:[%s4 + $0xa8] sm:$0xff]
  %v379 = vld [vmem:[%s4 + $0xb0] sm:$0xff]
  %v380 = vld [vmem:[%s4 + $0xb8] sm:$0xff]
  %v381 = vld [vmem:[%s4 + $0xc0] sm:$0xff]
  %v382 = vld [vmem:[%s4 + $0xc8] sm:$0xff]
  %v383 = vld [vmem:[%s4 + $0xd0] sm:$0xff]
  %v384 = vld [vmem:[%s4 + $0xd8] sm:$0xff]
  %v385 = vld [vmem:[%s4 + $0xe0] sm:$0xff]
  %v386 = vld [vmem:[%s4 + $0xe8] sm:$0xff]
  %v387 = vld [vmem:[%s4 + $0xf0] sm:$0xff]
  %v388 = vld [vmem:[%s4 + $0xf8] sm:$0xff]
  %v389 = vld [vmem:[%s4 + $0x100] sm:$0xff]
  %v390 = vld [vmem:[%s4 + $0x108] sm:$0xff]
  %v391 = vld [vmem:[%s4 + $0x110] sm:$0xff]
  %v392 = vld [vmem:[%s4 + $0x118] sm:$0xff]
  %v393 = vld [vmem:[%s4 + $0x120] sm:$0xff]
  %v394 = vld [vmem:[%s4 + $0x128] sm:$0xff]
  %v395 = vld [vmem:[%s4 + $0x130] sm:$0xff]
  %v396 = vld [vmem:[%s4 + $0x138] sm:$0xff]
  %v397 = vld [vmem:[%s4 + $0x140] sm:$0xff]
  %v398 = vld [vmem:[%s4 + $0x148] sm:$0xff]
  %v399 = vld [vmem:[%s4 + $0x150] sm:$0xff]
  %v400 = vld [vmem:[%s4 + $0x158] sm:$0xff]
  %v401 = vld [vmem:[%s4 + $0x160] sm:$0xff]
  %v402 = vld [vmem:[%s4 + $0x168] sm:$0xff]
  %v403 = vld [vmem:[%s4 + $0x170] sm:$0xff]
  %v404 = vld [vmem:[%s4 + $0x178] sm:$0xff]
  %v405 = vld [vmem:[%s4 + $0x180] sm:$0xff]
  %v406 = vld [vmem:[%s4 + $0x188] sm:$0xff]
  %v407 = vld [vmem:[%s4 + $0x190] sm:$0xff]
  %v408 = vld [vmem:[%s4 + $0x198] sm:$0xff]
  %v409 = vld [vmem:[%s4 + $0x1a0] sm:$0xff]
  %v410 = vld [vmem:[%s4 + $0x1a8] sm:$0xff]
  %v411 = vld [vmem:[%s4 + $0x1b0] sm:$0xff]
  %v412 = vld [vmem:[%s4 + $0x1b8] sm:$0xff]
  %v413 = vld [vmem:[%s4 + $0x1c0] sm:$0xff]
  %v414 = vld [vmem:[%s4 + $0x1c8] sm:$0xff]
  %v415 = vld [vmem:[%s4 + $0x1d0] sm:$0xff]
  %v416 = vld [vmem:[%s4 + $0x1d8] sm:$0xff]
  %v417 = vld [vmem:[%s4 + $0x1e0] sm:$0xff]
  %v418 = vld [vmem:[%s4 + $0x1e8] sm:$0xff]
  %v419 = vld [vmem:[%s4 + $0x1f0] sm:$0xff]
  %v420 = vld [vmem:[%s4 + $0x1f8] sm:$0xff]
  %v421 = vld [vmem:[%s4 + $0x200] sm:$0xff]
  %v422 = vld [vmem:[%s4 + $0x208] sm:$0xff]
  %v423 = vld [vmem:[%s4 + $0x210] sm:$0xff]
  %v424 = vld [vmem:[%s4 + $0x218] sm:$0xff]
  %v425 = vld [vmem:[%s4 + $0x220] sm:$0xff]
  %v426 = vld [vmem:[%s4 + $0x228] sm:$0xff]
  %v427 = vld [vmem:[%s4 + $0x230] sm:$0xff]
  %v428 = vld [vmem:[%s4 + $0x238] sm:$0xff]
  %v429 = vld [vmem:[%s4 + $0x240] sm:$0xff]
  %v430 = vld [vmem:[%s4 + $0x248] sm:$0xff]
  %v431 = vld [vmem:[%s4 + $0x250] sm:$0xff]
  %v432 = vld [vmem:[%s4 + $0x258] sm:$0xff]
  %v433 = vld [vmem:[%s4 + $0x260] sm:$0xff]
  %v434 = vld [vmem:[%s4 + $0x268] sm:$0xff]
  %v435 = vld [vmem:[%s4 + $0x270] sm:$0xff]
  %v436 = vld [vmem:[%s4 + $0x278] sm:$0xff]
  %v437 = vld [vmem:[%s4 + $0x280] sm:$0xff]
  %v438 = vld [vmem:[%s4 + $0x288] sm:$0xff]
  %v439 = vld [vmem:[%s4 + $0x290] sm:$0xff]
  %v440 = vld [vmem:[%s4 + $0x298] sm:$0xff]
  %v441 = vld [vmem:[%s4 + $0x2a0] sm:$0xff]
  %v442 = vld [vmem:[%s4 + $0x2a8] sm:$0xff]
  %v443 = vld [vmem:[%s4 + $0x2b0] sm:$0xff]
  %v444 = vld [vmem:[%s4 + $0x2b8] sm:$0xff]
  %v445 = vld [vmem:[%s4 + $0x2c0] sm:$0xff]
  %v446 = vld [vmem:[%s4 + $0x2c8] sm:$0xff]
  %v447 = vld [vmem:[%s4 + $0x2d0] sm:$0xff]
  %v448 = vld [vmem:[%s4 + $0x2d8] sm:$0xff]
  %v449 = vld [vmem:[%s4 + $0x2e0] sm:$0xff]
  %v450 = vld [vmem:[%s4 + $0x2e8] sm:$0xff]
  %v451 = vld [vmem:[%s4 + $0x2f0] sm:$0xff]
  %v452 = vld [vmem:[%s4 + $0x2f8] sm:$0xff]
  %v453 = vld [vmem:[%s4 + $0x300] sm:$0xff]
  %v454 = vld [vmem:[%s4 + $0x308] sm:$0xff]
  %v455 = vld [vmem:[%s4 + $0x310] sm:$0xff]
  %v456 = vld [vmem:[%s4 + $0x318] sm:$0xff]
  %v457 = vld [vmem:[%s4 + $0x320] sm:$0xff]
  %v458 = vld [vmem:[%s4 + $0x328] sm:$0xff]
  %v459 = vld [vmem:[%s4 + $0x330] sm:$0xff]
  %v460 = vld [vmem:[%s4 + $0x338] sm:$0xff]
  %v461 = vld [vmem:[%s4 + $0x340] sm:$0xff]
  %v462 = vld [vmem:[%s4 + $0x348] sm:$0xff]
  %v463 = vld [vmem:[%s4 + $0x350] sm:$0xff]
  %v464 = vld [vmem:[%s4 + $0x358] sm:$0xff]
  %v465 = vld [vmem:[%s4 + $0x360] sm:$0xff]
  %v466 = vld [vmem:[%s4 + $0x368] sm:$0xff]
  %v467 = vld [vmem:[%s4 + $0x370] sm:$0xff]
  %v468 = vld [vmem:[%s4 + $0x378] sm:$0xff]
  %v469 = vld [vmem:[%s4 + $0x380] sm:$0xff]
  %v470 = vld [vmem:[%s4 + $0x388] sm:$0xff]
  %v471 = vld [vmem:[%s4 + $0x390] sm:$0xff]
  %v472 = vld [vmem:[%s4 + $0x398] sm:$0xff]
  %v473 = vld [vmem:[%s4 + $0x3a0] sm:$0xff]
  %v474 = vld [vmem:[%s4 + $0x3a8] sm:$0xff]
  %v475 = vld [vmem:[%s4 + $0x3b0] sm:$0xff]
  %v476 = vld [vmem:[%s4 + $0x3b8] sm:$0xff]
  %v477 = vld [vmem:[%s4 + $0x3c0] sm:$0xff]
  %v478 = vld [vmem:[%s4 + $0x3c8] sm:$0xff]
  %v479 = vld [vmem:[%s4 + $0x3d0] sm:$0xff]
  %v480 = vld [vmem:[%s4 + $0x3d8] sm:$0xff]
  %v481 = vld [vmem:[%s4 + $0x3e0] sm:$0xff]
  %v482 = vld [vmem:[%s4 + $0x3e8] sm:$0xff]
  %v483 = vld [vmem:[%s4 + $0x3f0] sm:$0xff]
  %v484 = vld [vmem:[%s4 + $0x3f8] sm:$0xff]
  %v485 = vunpack.c.l.bf16 %v357
  %v486 = vunpack.c.h.bf16 %v357
  %v487 = vunpack.c.l.bf16 %v358
  %v488 = vunpack.c.h.bf16 %v358
  %v489 = vunpack.c.l.bf16 %v359
  %v490 = vunpack.c.h.bf16 %v359
  %v491 = vunpack.c.l.bf16 %v360
  %v492 = vunpack.c.h.bf16 %v360
  %v493 = vunpack.c.l.bf16 %v361
  %v494 = vunpack.c.h.bf16 %v361
  %v495 = vunpack.c.l.bf16 %v362
  %v496 = vunpack.c.h.bf16 %v362
  %v497 = vunpack.c.l.bf16 %v363
  %v498 = vunpack.c.h.bf16 %v363
  %v499 = vunpack.c.l.bf16 %v364
  %v500 = vunpack.c.h.bf16 %v364
  %v501 = vunpack.c.l.bf16 %v365
  %v502 = vunpack.c.h.bf16 %v365
  %v503 = vunpack.c.l.bf16 %v366
  %v504 = vunpack.c.h.bf16 %v366
  %v505 = vunpack.c.l.bf16 %v367
  %v506 = vunpack.c.h.bf16 %v367
  %v507 = vunpack.c.l.bf16 %v368
  %v508 = vunpack.c.h.bf16 %v368
  %v509 = vunpack.c.l.bf16 %v369
  %v510 = vunpack.c.h.bf16 %v369
  %v511 = vunpack.c.l.bf16 %v370
  %v512 = vunpack.c.h.bf16 %v370
  %v513 = vunpack.c.l.bf16 %v371
  %v514 = vunpack.c.h.bf16 %v371
  %v515 = vunpack.c.l.bf16 %v372
  %v516 = vunpack.c.h.bf16 %v372
  %v517 = vunpack.c.l.bf16 %v373
  %v518 = vunpack.c.h.bf16 %v373
  %v519 = vunpack.c.l.bf16 %v374
  %v520 = vunpack.c.h.bf16 %v374
  %v521 = vunpack.c.l.bf16 %v375
  %v522 = vunpack.c.h.bf16 %v375
  %v523 = vunpack.c.l.bf16 %v376
  %v524 = vunpack.c.h.bf16 %v376
  %v525 = vunpack.c.l.bf16 %v377
  %v526 = vunpack.c.h.bf16 %v377
  %v527 = vunpack.c.l.bf16 %v378
  %v528 = vunpack.c.h.bf16 %v378
  %v529 = vunpack.c.l.bf16 %v379
  %v530 = vunpack.c.h.bf16 %v379
  %v531 = vunpack.c.l.bf16 %v380
  %v532 = vunpack.c.h.bf16 %v380
  %v533 = vunpack.c.l.bf16 %v381
  %v534 = vunpack.c.h.bf16 %v381
  %v535 = vunpack.c.l.bf16 %v382
  %v536 = vunpack.c.h.bf16 %v382
  %v537 = vunpack.c.l.bf16 %v383
  %v538 = vunpack.c.h.bf16 %v383
  %v539 = vunpack.c.l.bf16 %v384
  %v540 = vunpack.c.h.bf16 %v384
  %v541 = vunpack.c.l.bf16 %v385
  %v542 = vunpack.c.h.bf16 %v385
  %v543 = vunpack.c.l.bf16 %v386
  %v544 = vunpack.c.h.bf16 %v386
  %v545 = vunpack.c.l.bf16 %v387
  %v546 = vunpack.c.h.bf16 %v387
  %v547 = vunpack.c.l.bf16 %v388
  %v548 = vunpack.c.h.bf16 %v388
  %v549 = vunpack.c.l.bf16 %v389
  %v550 = vunpack.c.h.bf16 %v389
  %v551 = vunpack.c.l.bf16 %v390
  %v552 = vunpack.c.h.bf16 %v390
  %v553 = vunpack.c.l.bf16 %v391
  %v554 = vunpack.c.h.bf16 %v391
  %v555 = vunpack.c.l.bf16 %v392
  %v556 = vunpack.c.h.bf16 %v392
  %v557 = vunpack.c.l.bf16 %v393
  %v558 = vunpack.c.h.bf16 %v393
  %v559 = vunpack.c.l.bf16 %v394
  %v560 = vunpack.c.h.bf16 %v394
  %v561 = vunpack.c.l.bf16 %v395
  %v562 = vunpack.c.h.bf16 %v395
  %v563 = vunpack.c.l.bf16 %v396
  %v564 = vunpack.c.h.bf16 %v396
  %v565 = vunpack.c.l.bf16 %v397
  %v566 = vunpack.c.h.bf16 %v397
  %v567 = vunpack.c.l.bf16 %v398
  %v568 = vunpack.c.h.bf16 %v398
  %v569 = vunpack.c.l.bf16 %v399
  %v570 = vunpack.c.h.bf16 %v399
  %v571 = vunpack.c.l.bf16 %v400
  %v572 = vunpack.c.h.bf16 %v400
  %v573 = vunpack.c.l.bf16 %v401
  %v574 = vunpack.c.h.bf16 %v401
  %v575 = vunpack.c.l.bf16 %v402
  %v576 = vunpack.c.h.bf16 %v402
  %v577 = vunpack.c.l.bf16 %v403
  %v578 = vunpack.c.h.bf16 %v403
  %v579 = vunpack.c.l.bf16 %v404
  %v580 = vunpack.c.h.bf16 %v404
  %v581 = vunpack.c.l.bf16 %v405
  %v582 = vunpack.c.h.bf16 %v405
  %v583 = vunpack.c.l.bf16 %v406
  %v584 = vunpack.c.h.bf16 %v406
  %v585 = vunpack.c.l.bf16 %v407
  %v586 = vunpack.c.h.bf16 %v407
  %v587 = vunpack.c.l.bf16 %v408
  %v588 = vunpack.c.h.bf16 %v408
  %v589 = vunpack.c.l.bf16 %v409
  %v590 = vunpack.c.h.bf16 %v409
  %v591 = vunpack.c.l.bf16 %v410
  %v592 = vunpack.c.h.bf16 %v410
  %v593 = vunpack.c.l.bf16 %v411
  %v594 = vunpack.c.h.bf16 %v411
  %v595 = vunpack.c.l.bf16 %v412
  %v596 = vunpack.c.h.bf16 %v412
  %v597 = vunpack.c.l.bf16 %v413
  %v598 = vunpack.c.h.bf16 %v413
  %v599 = vunpack.c.l.bf16 %v414
  %v600 = vunpack.c.h.bf16 %v414
  %v601 = vunpack.c.l.bf16 %v415
  %v602 = vunpack.c.h.bf16 %v415
  %v603 = vunpack.c.l.bf16 %v416
  %v604 = vunpack.c.h.bf16 %v416
  %v605 = vunpack.c.l.bf16 %v417
  %v606 = vunpack.c.h.bf16 %v417
  %v607 = vunpack.c.l.bf16 %v418
  %v608 = vunpack.c.h.bf16 %v418
  %v609 = vunpack.c.l.bf16 %v419
  %v610 = vunpack.c.h.bf16 %v419
  %v611 = vunpack.c.l.bf16 %v420
  %v612 = vunpack.c.h.bf16 %v420
  %v613 = vunpack.c.l.bf16 %v421
  %v614 = vunpack.c.h.bf16 %v421
  %v615 = vunpack.c.l.bf16 %v422
  %v616 = vunpack.c.h.bf16 %v422
  %v617 = vunpack.c.l.bf16 %v423
  %v618 = vunpack.c.h.bf16 %v423
  %v619 = vunpack.c.l.bf16 %v424
  %v620 = vunpack.c.h.bf16 %v424
  %v621 = vunpack.c.l.bf16 %v425
  %v622 = vunpack.c.h.bf16 %v425
  %v623 = vunpack.c.l.bf16 %v426
  %v624 = vunpack.c.h.bf16 %v426
  %v625 = vunpack.c.l.bf16 %v427
  %v626 = vunpack.c.h.bf16 %v427
  %v627 = vunpack.c.l.bf16 %v428
  %v628 = vunpack.c.h.bf16 %v428
  %v629 = vunpack.c.l.bf16 %v429
  %v630 = vunpack.c.h.bf16 %v429
  %v631 = vunpack.c.l.bf16 %v430
  %v632 = vunpack.c.h.bf16 %v430
  %v633 = vunpack.c.l.bf16 %v431
  %v634 = vunpack.c.h.bf16 %v431
  %v635 = vunpack.c.l.bf16 %v432
  %v636 = vunpack.c.h.bf16 %v432
  %v637 = vunpack.c.l.bf16 %v433
  %v638 = vunpack.c.h.bf16 %v433
  %v639 = vunpack.c.l.bf16 %v434
  %v640 = vunpack.c.h.bf16 %v434
  %v641 = vunpack.c.l.bf16 %v435
  %v642 = vunpack.c.h.bf16 %v435
  %v643 = vunpack.c.l.bf16 %v436
  %v644 = vunpack.c.h.bf16 %v436
  %v645 = vunpack.c.l.bf16 %v437
  %v646 = vunpack.c.h.bf16 %v437
  %v647 = vunpack.c.l.bf16 %v438
  %v648 = vunpack.c.h.bf16 %v438
  %v649 = vunpack.c.l.bf16 %v439
  %v650 = vunpack.c.h.bf16 %v439
  %v651 = vunpack.c.l.bf16 %v440
  %v652 = vunpack.c.h.bf16 %v440
  %v653 = vunpack.c.l.bf16 %v441
  %v654 = vunpack.c.h.bf16 %v441
  %v655 = vunpack.c.l.bf16 %v442
  %v656 = vunpack.c.h.bf16 %v442
  %v657 = vunpack.c.l.bf16 %v443
  %v658 = vunpack.c.h.bf16 %v443
  %v659 = vunpack.c.l.bf16 %v444
  %v660 = vunpack.c.h.bf16 %v444
  %v661 = vunpack.c.l.bf16 %v445
  %v662 = vunpack.c.h.bf16 %v445
  %v663 = vunpack.c.l.bf16 %v446
  %v664 = vunpack.c.h.bf16 %v446
  %v665 = vunpack.c.l.bf16 %v447
  %v666 = vunpack.c.h.bf16 %v447
  %v667 = vunpack.c.l.bf16 %v448
  %v668 = vunpack.c.h.bf16 %v448
  %v669 = vunpack.c.l.bf16 %v449
  %v670 = vunpack.c.h.bf16 %v449
  %v671 = vunpack.c.l.bf16 %v450
  %v672 = vunpack.c.h.bf16 %v450
  %v673 = vunpack.c.l.bf16 %v451
  %v674 = vunpack.c.h.bf16 %v451
  %v675 = vunpack.c.l.bf16 %v452
  %v676 = vunpack.c.h.bf16 %v452
  %v677 = vunpack.c.l.bf16 %v453
  %v678 = vunpack.c.h.bf16 %v453
  %v679 = vunpack.c.l.bf16 %v454
  %v680 = vunpack.c.h.bf16 %v454
  %v681 = vunpack.c.l.bf16 %v455
  %v682 = vunpack.c.h.bf16 %v455
  %v683 = vunpack.c.l.bf16 %v456
  %v684 = vunpack.c.h.bf16 %v456
  %v685 = vunpack.c.l.bf16 %v457
  %v686 = vunpack.c.h.bf16 %v457
  %v687 = vunpack.c.l.bf16 %v458
  %v688 = vunpack.c.h.bf16 %v458
  %v689 = vunpack.c.l.bf16 %v459
  %v690 = vunpack.c.h.bf16 %v459
  %v691 = vunpack.c.l.bf16 %v460
  %v692 = vunpack.c.h.bf16 %v460
  %v693 = vunpack.c.l.bf16 %v461
  %v694 = vunpack.c.h.bf16 %v461
  %v695 = vunpack.c.l.bf16 %v462
  %v696 = vunpack.c.h.bf16 %v462
  %v697 = vunpack.c.l.bf16 %v463
  %v698 = vunpack.c.h.bf16 %v463
  %v699 = vunpack.c.l.bf16 %v464
  %v700 = vunpack.c.h.bf16 %v464
  %v701 = vunpack.c.l.bf16 %v465
  %v702 = vunpack.c.h.bf16 %v465
  %v703 = vunpack.c.l.bf16 %v466
  %v704 = vunpack.c.h.bf16 %v466
  %v705 = vunpack.c.l.bf16 %v467
  %v706 = vunpack.c.h.bf16 %v467
  %v707 = vunpack.c.l.bf16 %v468
  %v708 = vunpack.c.h.bf16 %v468
  %v709 = vunpack.c.l.bf16 %v469
  %v710 = vunpack.c.h.bf16 %v469
  %v711 = vunpack.c.l.bf16 %v470
  %v712 = vunpack.c.h.bf16 %v470
  %v713 = vunpack.c.l.bf16 %v471
  %v714 = vunpack.c.h.bf16 %v471
  %v715 = vunpack.c.l.bf16 %v472
  %v716 = vunpack.c.h.bf16 %v472
  %v717 = vunpack.c.l.bf16 %v473
  %v718 = vunpack.c.h.bf16 %v473
  %v719 = vunpack.c.l.bf16 %v474
  %v720 = vunpack.c.h.bf16 %v474
  %v721 = vunpack.c.l.bf16 %v475
  %v722 = vunpack.c.h.bf16 %v475
  %v723 = vunpack.c.l.bf16 %v476
  %v724 = vunpack.c.h.bf16 %v476
  %v725 = vunpack.c.l.bf16 %v477
  %v726 = vunpack.c.h.bf16 %v477
  %v727 = vunpack.c.l.bf16 %v478
  %v728 = vunpack.c.h.bf16 %v478
  %v729 = vunpack.c.l.bf16 %v479
  %v730 = vunpack.c.h.bf16 %v479
  %v731 = vunpack.c.l.bf16 %v480
  %v732 = vunpack.c.h.bf16 %v480
  %v733 = vunpack.c.l.bf16 %v481
  %v734 = vunpack.c.h.bf16 %v481
  %v735 = vunpack.c.l.bf16 %v482
  %v736 = vunpack.c.h.bf16 %v482
  %v737 = vunpack.c.l.bf16 %v483
  %v738 = vunpack.c.h.bf16 %v483
  %v739 = vunpack.c.l.bf16 %v484
  %v740 = vunpack.c.h.bf16 %v484
  %v741 = vld [vmem:[%s5] sm:$0xf]
  %v743 = vlaneseq
  %v744 = vshrl.u32 %v743, 7
  %v745 = vsub.s32 0, %v744
  %v746 = vrot.slane %v741, %v745
  %v747 = vlaneseq
  %v748 = vshrl.u32 %v747, 7
  %v749 = vsub.s32 1, %v748
  %v750 = vrot.slane %v741, %v749
  %v751 = vlaneseq
  %v752 = vshrl.u32 %v751, 7
  %v753 = vsub.s32 2, %v752
  %v754 = vrot.slane %v741, %v753
  %v755 = vlaneseq
  %v756 = vshrl.u32 %v755, 7
  %v757 = vsub.s32 3, %v756
  %v758 = vrot.slane %v741, %v757
  %763 = vmatprep.subr.mxu0 %v486
  %764 = vmatpush1.msra.mxu0 %v485
  %765 = vmatprep.subr.mxu0 %v490
  %766 = vmatpush1.msra.mxu0 %v489
  %767 = vmatprep.subr.mxu0 %v494
  %768 = vmatpush1.msra.mxu0 %v493
  %769 = vmatprep.subr.mxu0 %v498
  %770 = vmatpush1.msra.mxu0 %v497
  %771 = vmatprep.subr.mxu0 %v502
  %772 = vmatpush1.msra.mxu0 %v501
  %773 = vmatprep.subr.mxu0 %v506
  %774 = vmatpush1.msra.mxu0 %v505
  %775 = vmatprep.subr.mxu0 %v510
  %776 = vmatpush1.msra.mxu0 %v509
  %777 = vmatprep.subr.mxu0 %v514
  %778 = vmatpush1.msra.mxu0 %v513
  %779 = vmatprep.subr.mxu0 %v518
  %780 = vmatpush1.msra.mxu0 %v517
  %781 = vmatprep.subr.mxu0 %v522
  %782 = vmatpush1.msra.mxu0 %v521
  %783 = vmatprep.subr.mxu0 %v526
  %784 = vmatpush1.msra.mxu0 %v525
  %785 = vmatprep.subr.mxu0 %v530
  %786 = vmatpush1.msra.mxu0 %v529
  %787 = vmatprep.subr.mxu0 %v534
  %788 = vmatpush1.msra.mxu0 %v533
  %789 = vmatprep.subr.mxu0 %v538
  %790 = vmatpush1.msra.mxu0 %v537
  %791 = vmatprep.subr.mxu0 %v542
  %792 = vmatpush1.msra.mxu0 %v541
  %793 = vmatprep.subr.mxu0 %v546
  %794 = vmatpush1.msra.mxu0 %v545
  %795 = vmatprep.subr.mxu0 %v550
  %796 = vmatpush1.msra.mxu0 %v549
  %797 = vmatprep.subr.mxu0 %v554
  %798 = vmatpush1.msra.mxu0 %v553
  %799 = vmatprep.subr.mxu0 %v558
  %800 = vmatpush1.msra.mxu0 %v557
  %801 = vmatprep.subr.mxu0 %v562
  %802 = vmatpush1.msra.mxu0 %v561
  %803 = vmatprep.subr.mxu0 %v566
  %804 = vmatpush1.msra.mxu0 %v565
  %805 = vmatprep.subr.mxu0 %v570
  %806 = vmatpush1.msra.mxu0 %v569
  %807 = vmatprep.subr.mxu0 %v574
  %808 = vmatpush1.msra.mxu0 %v573
  %809 = vmatprep.subr.mxu0 %v578
  %810 = vmatpush1.msra.mxu0 %v577
  %811 = vmatprep.subr.mxu0 %v582
  %812 = vmatpush1.msra.mxu0 %v581
  %813 = vmatprep.subr.mxu0 %v586
  %814 = vmatpush1.msra.mxu0 %v585
  %815 = vmatprep.subr.mxu0 %v590
  %816 = vmatpush1.msra.mxu0 %v589
  %817 = vmatprep.subr.mxu0 %v594
  %818 = vmatpush1.msra.mxu0 %v593
  %819 = vmatprep.subr.mxu0 %v598
  %820 = vmatpush1.msra.mxu0 %v597
  %821 = vmatprep.subr.mxu0 %v602
  %822 = vmatpush1.msra.mxu0 %v601
  %823 = vmatprep.subr.mxu0 %v606
  %824 = vmatpush1.msra.mxu0 %v605
  %825 = vmatprep.subr.mxu0 %v610
  %826 = vmatpush1.msra.mxu0 %v609
  %827 = vmatprep.mubr.f32.mxu0 %v354
  %828 = vmatmul.mubr.f32.gmra.mrb[0].mxu0 %v353
  %v829 = vpop.f32.mrb[0].mxu0
  %v830 = vadd.f32 %v746, %v829
  %v831 = vpop.f32.mrb[0].mxu0
  %v832 = vadd.f32 %v750, %v831
  %833 = vdwg.mxu0
  %834 = vmatprep.subr.mxu0 %v614
  %835 = vmatpush1.msra.mxu0 %v613
  %836 = vmatprep.subr.mxu0 %v618
  %837 = vmatpush1.msra.mxu0 %v617
  %838 = vmatprep.subr.mxu0 %v622
  %839 = vmatpush1.msra.mxu0 %v621
  %840 = vmatprep.subr.mxu0 %v626
  %841 = vmatpush1.msra.mxu0 %v625
  %842 = vmatprep.subr.mxu0 %v630
  %843 = vmatpush1.msra.mxu0 %v629
  %844 = vmatprep.subr.mxu0 %v634
  %845 = vmatpush1.msra.mxu0 %v633
  %846 = vmatprep.subr.mxu0 %v638
  %847 = vmatpush1.msra.mxu0 %v637
  %848 = vmatprep.subr.mxu0 %v642
  %849 = vmatpush1.msra.mxu0 %v641
  %850 = vmatprep.subr.mxu0 %v646
  %851 = vmatpush1.msra.mxu0 %v645
  %852 = vmatprep.subr.mxu0 %v650
  %853 = vmatpush1.msra.mxu0 %v649
  %854 = vmatprep.subr.mxu0 %v654
  %855 = vmatpush1.msra.mxu0 %v653
  %856 = vmatprep.subr.mxu0 %v658
  %857 = vmatpush1.msra.mxu0 %v657
  %858 = vmatprep.subr.mxu0 %v662
  %859 = vmatpush1.msra.mxu0 %v661
  %860 = vmatprep.subr.mxu0 %v666
  %861 = vmatpush1.msra.mxu0 %v665
  %862 = vmatprep.subr.mxu0 %v670
  %863 = vmatpush1.msra.mxu0 %v669
  %864 = vmatprep.subr.mxu0 %v674
  %865 = vmatpush1.msra.mxu0 %v673
  %866 = vmatprep.subr.mxu0 %v678
  %867 = vmatpush1.msra.mxu0 %v677
  %868 = vmatprep.subr.mxu0 %v682
  %869 = vmatpush1.msra.mxu0 %v681
  %870 = vmatprep.subr.mxu0 %v686
  %871 = vmatpush1.msra.mxu0 %v685
  %872 = vmatprep.subr.mxu0 %v690
  %873 = vmatpush1.msra.mxu0 %v689
  %874 = vmatprep.subr.mxu0 %v694
  %875 = vmatpush1.msra.mxu0 %v693
  %876 = vmatprep.subr.mxu0 %v698
  %877 = vmatpush1.msra.mxu0 %v697
  %878 = vmatprep.subr.mxu0 %v702
  %879 = vmatpush1.msra.mxu0 %v701
  %880 = vmatprep.subr.mxu0 %v706
  %881 = vmatpush1.msra.mxu0 %v705
  %882 = vmatprep.subr.mxu0 %v710
  %883 = vmatpush1.msra.mxu0 %v709
  %884 = vmatprep.subr.mxu0 %v714
  %885 = vmatpush1.msra.mxu0 %v713
  %886 = vmatprep.subr.mxu0 %v718
  %887 = vmatpush1.msra.mxu0 %v717
  %888 = vmatprep.subr.mxu0 %v722
  %889 = vmatpush1.msra.mxu0 %v721
  %890 = vmatprep.subr.mxu0 %v726
  %891 = vmatpush1.msra.mxu0 %v725
  %892 = vmatprep.subr.mxu0 %v730
  %893 = vmatpush1.msra.mxu0 %v729
  %894 = vmatprep.subr.mxu0 %v734
  %895 = vmatpush1.msra.mxu0 %v733
  %896 = vmatprep.subr.mxu0 %v738
  %897 = vmatpush1.msra.mxu0 %v737
  %898 = vmatprep.mubr.f32.mxu0 %v356
  %899 = vmatmul.mubr.f32.gmra.mrb[0].mxu0 %v355
  %v900 = vpop.f32.mrb[0].mxu0
  %v901 = vadd.f32 %v830, %v900
  %v902 = vpop.f32.mrb[0].mxu0
  %v903 = vadd.f32 %v832, %v902
  %904 = vdwg.mxu0
  %905 = vmatprep.subr.mxu0 %v488
  %906 = vmatpush1.msra.mxu0 %v487
  %907 = vmatprep.subr.mxu0 %v492
  %908 = vmatpush1.msra.mxu0 %v491
  %909 = vmatprep.subr.mxu0 %v496
  %910 = vmatpush1.msra.mxu0 %v495
  %911 = vmatprep.subr.mxu0 %v500
  %912 = vmatpush1.msra.mxu0 %v499
  %913 = vmatprep.subr.mxu0 %v504
  %914 = vmatpush1.msra.mxu0 %v503
  %915 = vmatprep.subr.mxu0 %v508
  %916 = vmatpush1.msra.mxu0 %v507
  %917 = vmatprep.subr.mxu0 %v512
  %918 = vmatpush1.msra.mxu0 %v511
  %919 = vmatprep.subr.mxu0 %v516
  %920 = vmatpush1.msra.mxu0 %v515
  %921 = vmatprep.subr.mxu0 %v520
  %922 = vmatpush1.msra.mxu0 %v519
  %923 = vmatprep.subr.mxu0 %v524
  %924 = vmatpush1.msra.mxu0 %v523
  %925 = vmatprep.subr.mxu0 %v528
  %926 = vmatpush1.msra.mxu0 %v527
  %927 = vmatprep.subr.mxu0 %v532
  %928 = vmatpush1.msra.mxu0 %v531
  %929 = vmatprep.subr.mxu0 %v536
  %930 = vmatpush1.msra.mxu0 %v535
  %931 = vmatprep.subr.mxu0 %v540
  %932 = vmatpush1.msra.mxu0 %v539
  %933 = vmatprep.subr.mxu0 %v544
  %934 = vmatpush1.msra.mxu0 %v543
  %935 = vmatprep.subr.mxu0 %v548
  %936 = vmatpush1.msra.mxu0 %v547
  %937 = vmatprep.subr.mxu0 %v552
  %938 = vmatpush1.msra.mxu0 %v551
  %939 = vmatprep.subr.mxu0 %v556
  %940 = vmatpush1.msra.mxu0 %v555
  %941 = vmatprep.subr.mxu0 %v560
  %942 = vmatpush1.msra.mxu0 %v559
  %943 = vmatprep.subr.mxu0 %v564
  %944 = vmatpush1.msra.mxu0 %v563
  %945 = vmatprep.subr.mxu0 %v568
  %946 = vmatpush1.msra.mxu0 %v567
  %947 = vmatprep.subr.mxu0 %v572
  %948 = vmatpush1.msra.mxu0 %v571
  %949 = vmatprep.subr.mxu0 %v576
  %950 = vmatpush1.msra.mxu0 %v575
  %951 = vmatprep.subr.mxu0 %v580
  %952 = vmatpush1.msra.mxu0 %v579
  %953 = vmatprep.subr.mxu0 %v584
  %954 = vmatpush1.msra.mxu0 %v583
  %955 = vmatprep.subr.mxu0 %v588
  %956 = vmatpush1.msra.mxu0 %v587
  %957 = vmatprep.subr.mxu0 %v592
  %958 = vmatpush1.msra.mxu0 %v591
  %959 = vmatprep.subr.mxu0 %v596
  %960 = vmatpush1.msra.mxu0 %v595
  %961 = vmatprep.subr.mxu0 %v600
  %962 = vmatpush1.msra.mxu0 %v599
  %963 = vmatprep.subr.mxu0 %v604
  %964 = vmatpush1.msra.mxu0 %v603
  %965 = vmatprep.subr.mxu0 %v608
  %966 = vmatpush1.msra.mxu0 %v607
  %967 = vmatprep.subr.mxu0 %v612
  %968 = vmatpush1.msra.mxu0 %v611
  %969 = vmatprep.mubr.f32.mxu0 %v354
  %970 = vmatmul.mubr.f32.gmra.mrb[0].mxu0 %v353
  %v971 = vpop.f32.mrb[0].mxu0
  %v972 = vadd.f32 %v754, %v971
  %v973 = vpop.f32.mrb[0].mxu0
  %v974 = vadd.f32 %v758, %v973
  %975 = vdwg.mxu0
  %976 = vmatprep.subr.mxu0 %v616
  %977 = vmatpush1.msra.mxu0 %v615
  %978 = vmatprep.subr.mxu0 %v620
  %979 = vmatpush1.msra.mxu0 %v619
  %980 = vmatprep.subr.mxu0 %v624
  %981 = vmatpush1.msra.mxu0 %v623
  %982 = vmatprep.subr.mxu0 %v628
  %983 = vmatpush1.msra.mxu0 %v627
  %984 = vmatprep.subr.mxu0 %v632
  %985 = vmatpush1.msra.mxu0 %v631
  %986 = vmatprep.subr.mxu0 %v636
  %987 = vmatpush1.msra.mxu0 %v635
  %988 = vmatprep.subr.mxu0 %v640
  %989 = vmatpush1.msra.mxu0 %v639
  %990 = vmatprep.subr.mxu0 %v644
  %991 = vmatpush1.msra.mxu0 %v643
  %992 = vmatprep.subr.mxu0 %v648
  %993 = vmatpush1.msra.mxu0 %v647
  %994 = vmatprep.subr.mxu0 %v652
  %995 = vmatpush1.msra.mxu0 %v651
  %996 = vmatprep.subr.mxu0 %v656
  %997 = vmatpush1.msra.mxu0 %v655
  %998 = vmatprep.subr.mxu0 %v660
  %999 = vmatpush1.msra.mxu0 %v659
  %1000 = vmatprep.subr.mxu0 %v664
  %1001 = vmatpush1.msra.mxu0 %v663
  %1002 = vmatprep.subr.mxu0 %v668
  %1003 = vmatpush1.msra.mxu0 %v667
  %1004 = vmatprep.subr.mxu0 %v672
  %1005 = vmatpush1.msra.mxu0 %v671
  %1006 = vmatprep.subr.mxu0 %v676
  %1007 = vmatpush1.msra.mxu0 %v675
  %1008 = vmatprep.subr.mxu0 %v680
  %1009 = vmatpush1.msra.mxu0 %v679
  %1010 = vmatprep.subr.mxu0 %v684
  %1011 = vmatpush1.msra.mxu0 %v683
  %1012 = vmatprep.subr.mxu0 %v688
  %1013 = vmatpush1.msra.mxu0 %v687
  %1014 = vmatprep.subr.mxu0 %v692
  %1015 = vmatpush1.msra.mxu0 %v691
  %1016 = vmatprep.subr.mxu0 %v696
  %1017 = vmatpush1.msra.mxu0 %v695
  %1018 = vmatprep.subr.mxu0 %v700
  %1019 = vmatpush1.msra.mxu0 %v699
  %1020 = vmatprep.subr.mxu0 %v704
  %1021 = vmatpush1.msra.mxu0 %v703
  %1022 = vmatprep.subr.mxu0 %v708
  %1023 = vmatpush1.msra.mxu0 %v707
  %1024 = vmatprep.subr.mxu0 %v712
  %1025 = vmatpush1.msra.mxu0 %v711
  %1026 = vmatprep.subr.mxu0 %v716
  %1027 = vmatpush1.msra.mxu0 %v715
  %1028 = vmatprep.subr.mxu0 %v720
  %1029 = vmatpush1.msra.mxu0 %v719
  %1030 = vmatprep.subr.mxu0 %v724
  %1031 = vmatpush1.msra.mxu0 %v723
  %1032 = vmatprep.subr.mxu0 %v728
  %1033 = vmatpush1.msra.mxu0 %v727
  %1034 = vmatprep.subr.mxu0 %v732
  %1035 = vmatpush1.msra.mxu0 %v731
  %1036 = vmatprep.subr.mxu0 %v736
  %1037 = vmatpush1.msra.mxu0 %v735
  %1038 = vmatprep.subr.mxu0 %v740
  %1039 = vmatpush1.msra.mxu0 %v739
  %1040 = vmatprep.mubr.f32.mxu0 %v356
  %1041 = vmatmul.mubr.f32.gmra.mrb[0].mxu0 %v355
  %v1042 = vpop.f32.mrb[0].mxu0
  %v1043 = vadd.f32 %v972, %v1042
  %v1044 = vpop.f32.mrb[0].mxu0
  %v1045 = vadd.f32 %v974, %v1044
  %1046 = vdwg.mxu0
  %v1047 = vmax.f32 %v901, 0.0
  %v1048 = vmax.f32 %v903, 0.0
  %v1049 = vmax.f32 %v1043, 0.0
  %v1050 = vmax.f32 %v1045, 0.0
  %v1051 = vld [vmem:[%s6] sm:$0xf]
  %v1052 = vld [vmem:[%s6 + $0x4] sm:$0xf]
  %v1053 = vld [vmem:[%s6 + $0x8] sm:$0xf]
  %v1054 = vld [vmem:[%s6 + $0xc] sm:$0xf]
  %v1055 = vld [vmem:[%s6 + $0x10] sm:$0xf]
  %v1056 = vld [vmem:[%s6 + $0x14] sm:$0xf]
  %v1057 = vld [vmem:[%s6 + $0x18] sm:$0xf]
  %v1058 = vld [vmem:[%s6 + $0x1c] sm:$0xf]
  %v1059 = vld [vmem:[%s6 + $0x20] sm:$0xf]
  %v1060 = vld [vmem:[%s6 + $0x24] sm:$0xf]
  %v1061 = vld [vmem:[%s6 + $0x28] sm:$0xf]
  %v1062 = vld [vmem:[%s6 + $0x2c] sm:$0xf]
  %v1063 = vld [vmem:[%s6 + $0x30] sm:$0xf]
  %v1064 = vld [vmem:[%s6 + $0x34] sm:$0xf]
  %v1065 = vld [vmem:[%s6 + $0x38] sm:$0xf]
  %v1066 = vld [vmem:[%s6 + $0x3c] sm:$0xf]
  %v1067 = vld [vmem:[%s6 + $0x40] sm:$0xf]
  %v1068 = vld [vmem:[%s6 + $0x44] sm:$0xf]
  %v1069 = vld [vmem:[%s6 + $0x48] sm:$0xf]
  %v1070 = vld [vmem:[%s6 + $0x4c] sm:$0xf]
  %v1071 = vld [vmem:[%s6 + $0x50] sm:$0xf]
  %v1072 = vld [vmem:[%s6 + $0x54] sm:$0xf]
  %v1073 = vld [vmem:[%s6 + $0x58] sm:$0xf]
  %v1074 = vld [vmem:[%s6 + $0x5c] sm:$0xf]
  %v1075 = vld [vmem:[%s6 + $0x60] sm:$0xf]
  %v1076 = vld [vmem:[%s6 + $0x64] sm:$0xf]
  %v1077 = vld [vmem:[%s6 + $0x68] sm:$0xf]
  %v1078 = vld [vmem:[%s6 + $0x6c] sm:$0xf]
  %v1079 = vld [vmem:[%s6 + $0x70] sm:$0xf]
  %v1080 = vld [vmem:[%s6 + $0x74] sm:$0xf]
  %v1081 = vld [vmem:[%s6 + $0x78] sm:$0xf]
  %v1082 = vld [vmem:[%s6 + $0x7c] sm:$0xf]
  %v1083 = vld [vmem:[%s6 + $0x80] sm:$0xf]
  %v1084 = vld [vmem:[%s6 + $0x84] sm:$0xf]
  %v1085 = vld [vmem:[%s6 + $0x88] sm:$0xf]
  %v1086 = vld [vmem:[%s6 + $0x8c] sm:$0xf]
  %v1087 = vld [vmem:[%s6 + $0x90] sm:$0xf]
  %v1088 = vld [vmem:[%s6 + $0x94] sm:$0xf]
  %v1089 = vld [vmem:[%s6 + $0x98] sm:$0xf]
  %v1090 = vld [vmem:[%s6 + $0x9c] sm:$0xf]
  %v1091 = vld [vmem:[%s6 + $0xa0] sm:$0xf]
  %v1092 = vld [vmem:[%s6 + $0xa4] sm:$0xf]
  %v1093 = vld [vmem:[%s6 + $0xa8] sm:$0xf]
  %v1094 = vld [vmem:[%s6 + $0xac] sm:$0xf]
  %v1095 = vld [vmem:[%s6 + $0xb0] sm:$0xf]
  %v1096 = vld [vmem:[%s6 + $0xb4] sm:$0xf]
  %v1097 = vld [vmem:[%s6 + $0xb8] sm:$0xf]
  %v1098 = vld [vmem:[%s6 + $0xbc] sm:$0xf]
  %v1099 = vld [vmem:[%s6 + $0xc0] sm:$0xf]
  %v1100 = vld [vmem:[%s6 + $0xc4] sm:$0xf]
  %v1101 = vld [vmem:[%s6 + $0xc8] sm:$0xf]
  %v1102 = vld [vmem:[%s6 + $0xcc] sm:$0xf]
  %v1103 = vld [vmem:[%s6 + $0xd0] sm:$0xf]
  %v1104 = vld [vmem:[%s6 + $0xd4] sm:$0xf]
  %v1105 = vld [vmem:[%s6 + $0xd8] sm:$0xf]
  %v1106 = vld [vmem:[%s6 + $0xdc] sm:$0xf]
  %v1107 = vld [vmem:[%s6 + $0xe0] sm:$0xf]
  %v1108 = vld [vmem:[%s6 + $0xe4] sm:$0xf]
  %v1109 = vld [vmem:[%s6 + $0xe8] sm:$0xf]
  %v1110 = vld [vmem:[%s6 + $0xec] sm:$0xf]
  %v1111 = vld [vmem:[%s6 + $0xf0] sm:$0xf]
  %v1112 = vld [vmem:[%s6 + $0xf4] sm:$0xf]
  %v1113 = vld [vmem:[%s6 + $0xf8] sm:$0xf]
  %v1114 = vld [vmem:[%s6 + $0xfc] sm:$0xf]
  %v1115 = vunpack.c.l.bf16 %v1051
  %v1116 = vunpack.c.l.bf16 %v1052
  %v1117 = vunpack.c.l.bf16 %v1053
  %v1118 = vunpack.c.l.bf16 %v1054
  %v1119 = vunpack.c.l.bf16 %v1055
  %v1120 = vunpack.c.l.bf16 %v1056
  %v1121 = vunpack.c.l.bf16 %v1057
  %v1122 = vunpack.c.l.bf16 %v1058
  %v1123 = vunpack.c.l.bf16 %v1059
  %v1124 = vunpack.c.l.bf16 %v1060
  %v1125 = vunpack.c.l.bf16 %v1061
  %v1126 = vunpack.c.l.bf16 %v1062
  %v1127 = vunpack.c.l.bf16 %v1063
  %v1128 = vunpack.c.l.bf16 %v1064
  %v1129 = vunpack.c.l.bf16 %v1065
  %v1130 = vunpack.c.l.bf16 %v1066
  %v1131 = vunpack.c.l.bf16 %v1067
  %v1132 = vunpack.c.l.bf16 %v1068
  %v1133 = vunpack.c.l.bf16 %v1069
  %v1134 = vunpack.c.l.bf16 %v1070
  %v1135 = vunpack.c.l.bf16 %v1071
  %v1136 = vunpack.c.l.bf16 %v1072
  %v1137 = vunpack.c.l.bf16 %v1073
  %v1138 = vunpack.c.l.bf16 %v1074
  %v1139 = vunpack.c.l.bf16 %v1075
  %v1140 = vunpack.c.l.bf16 %v1076
  %v1141 = vunpack.c.l.bf16 %v1077
  %v1142 = vunpack.c.l.bf16 %v1078
  %v1143 = vunpack.c.l.bf16 %v1079
  %v1144 = vunpack.c.l.bf16 %v1080
  %v1145 = vunpack.c.l.bf16 %v1081
  %v1146 = vunpack.c.l.bf16 %v1082
  %v1147 = vunpack.c.l.bf16 %v1083
  %v1148 = vunpack.c.l.bf16 %v1084
  %v1149 = vunpack.c.l.bf16 %v1085
  %v1150 = vunpack.c.l.bf16 %v1086
  %v1151 = vunpack.c.l.bf16 %v1087
  %v1152 = vunpack.c.l.bf16 %v1088
  %v1153 = vunpack.c.l.bf16 %v1089
  %v1154 = vunpack.c.l.bf16 %v1090
  %v1155 = vunpack.c.l.bf16 %v1091
  %v1156 = vunpack.c.l.bf16 %v1092
  %v1157 = vunpack.c.l.bf16 %v1093
  %v1158 = vunpack.c.l.bf16 %v1094
  %v1159 = vunpack.c.l.bf16 %v1095
  %v1160 = vunpack.c.l.bf16 %v1096
  %v1161 = vunpack.c.l.bf16 %v1097
  %v1162 = vunpack.c.l.bf16 %v1098
  %v1163 = vunpack.c.l.bf16 %v1099
  %v1164 = vunpack.c.l.bf16 %v1100
  %v1165 = vunpack.c.l.bf16 %v1101
  %v1166 = vunpack.c.l.bf16 %v1102
  %v1167 = vunpack.c.l.bf16 %v1103
  %v1168 = vunpack.c.l.bf16 %v1104
  %v1169 = vunpack.c.l.bf16 %v1105
  %v1170 = vunpack.c.l.bf16 %v1106
  %v1171 = vunpack.c.l.bf16 %v1107
  %v1172 = vunpack.c.l.bf16 %v1108
  %v1173 = vunpack.c.l.bf16 %v1109
  %v1174 = vunpack.c.l.bf16 %v1110
  %v1175 = vunpack.c.l.bf16 %v1111
  %v1176 = vunpack.c.l.bf16 %v1112
  %v1177 = vunpack.c.l.bf16 %v1113
  %v1178 = vunpack.c.l.bf16 %v1114
  %v1179 = vld [vmem:[%s7] sm:$0x1]
  %v1181 = vlaneseq
  %v1182 = vshrl.u32 %v1181, 7
  %v1183 = vsub.s32 0, %v1182
  %v1184 = vrot.slane %v1179, %v1183
  %1186 = vmatprep.subr.mxu0 0.0
  %1187 = vmatpush1.msra.mxu0 %v1115
  %1188 = vmatprep.subr.mxu0 0.0
  %1189 = vmatpush1.msra.mxu0 %v1116
  %1190 = vmatprep.subr.mxu0 0.0
  %1191 = vmatpush1.msra.mxu0 %v1117
  %1192 = vmatprep.subr.mxu0 0.0
  %1193 = vmatpush1.msra.mxu0 %v1118
  %1194 = vmatprep.subr.mxu0 0.0
  %1195 = vmatpush1.msra.mxu0 %v1119
  %1196 = vmatprep.subr.mxu0 0.0
  %1197 = vmatpush1.msra.mxu0 %v1120
  %1198 = vmatprep.subr.mxu0 0.0
  %1199 = vmatpush1.msra.mxu0 %v1121
  %1200 = vmatprep.subr.mxu0 0.0
  %1201 = vmatpush1.msra.mxu0 %v1122
  %1202 = vmatprep.subr.mxu0 0.0
  %1203 = vmatpush1.msra.mxu0 %v1123
  %1204 = vmatprep.subr.mxu0 0.0
  %1205 = vmatpush1.msra.mxu0 %v1124
  %1206 = vmatprep.subr.mxu0 0.0
  %1207 = vmatpush1.msra.mxu0 %v1125
  %1208 = vmatprep.subr.mxu0 0.0
  %1209 = vmatpush1.msra.mxu0 %v1126
  %1210 = vmatprep.subr.mxu0 0.0
  %1211 = vmatpush1.msra.mxu0 %v1127
  %1212 = vmatprep.subr.mxu0 0.0
  %1213 = vmatpush1.msra.mxu0 %v1128
  %1214 = vmatprep.subr.mxu0 0.0
  %1215 = vmatpush1.msra.mxu0 %v1129
  %1216 = vmatprep.subr.mxu0 0.0
  %1217 = vmatpush1.msra.mxu0 %v1130
  %1218 = vmatprep.subr.mxu0 0.0
  %1219 = vmatpush1.msra.mxu0 %v1131
  %1220 = vmatprep.subr.mxu0 0.0
  %1221 = vmatpush1.msra.mxu0 %v1132
  %1222 = vmatprep.subr.mxu0 0.0
  %1223 = vmatpush1.msra.mxu0 %v1133
  %1224 = vmatprep.subr.mxu0 0.0
  %1225 = vmatpush1.msra.mxu0 %v1134
  %1226 = vmatprep.subr.mxu0 0.0
  %1227 = vmatpush1.msra.mxu0 %v1135
  %1228 = vmatprep.subr.mxu0 0.0
  %1229 = vmatpush1.msra.mxu0 %v1136
  %1230 = vmatprep.subr.mxu0 0.0
  %1231 = vmatpush1.msra.mxu0 %v1137
  %1232 = vmatprep.subr.mxu0 0.0
  %1233 = vmatpush1.msra.mxu0 %v1138
  %1234 = vmatprep.subr.mxu0 0.0
  %1235 = vmatpush1.msra.mxu0 %v1139
  %1236 = vmatprep.subr.mxu0 0.0
  %1237 = vmatpush1.msra.mxu0 %v1140
  %1238 = vmatprep.subr.mxu0 0.0
  %1239 = vmatpush1.msra.mxu0 %v1141
  %1240 = vmatprep.subr.mxu0 0.0
  %1241 = vmatpush1.msra.mxu0 %v1142
  %1242 = vmatprep.subr.mxu0 0.0
  %1243 = vmatpush1.msra.mxu0 %v1143
  %1244 = vmatprep.subr.mxu0 0.0
  %1245 = vmatpush1.msra.mxu0 %v1144
  %1246 = vmatprep.subr.mxu0 0.0
  %1247 = vmatpush1.msra.mxu0 %v1145
  %1248 = vmatprep.subr.mxu0 0.0
  %1249 = vmatpush1.msra.mxu0 %v1146
  %1250 = vmatprep.mubr.f32.mxu0 %v1048
  %1251 = vmatmul.mubr.f32.gmra.mrb[0].mxu0 %v1047
  %v1252 = vpop.f32.mrb[0].mxu0
  %v1253 = vadd.f32 %v1184, %v1252
  %v1254 = vpop.f32.mrb[0].mxu0
  %1255 = vdwg.mxu0
  %1256 = vmatprep.subr.mxu0 0.0
  %1257 = vmatpush1.msra.mxu0 %v1147
  %1258 = vmatprep.subr.mxu0 0.0
  %1259 = vmatpush1.msra.mxu0 %v1148
  %1260 = vmatprep.subr.mxu0 0.0
  %1261 = vmatpush1.msra.mxu0 %v1149
  %1262 = vmatprep.subr.mxu0 0.0
  %1263 = vmatpush1.msra.mxu0 %v1150
  %1264 = vmatprep.subr.mxu0 0.0
  %1265 = vmatpush1.msra.mxu0 %v1151
  %1266 = vmatprep.subr.mxu0 0.0
  %1267 = vmatpush1.msra.mxu0 %v1152
  %1268 = vmatprep.subr.mxu0 0.0
  %1269 = vmatpush1.msra.mxu0 %v1153
  %1270 = vmatprep.subr.mxu0 0.0
  %1271 = vmatpush1.msra.mxu0 %v1154
  %1272 = vmatprep.subr.mxu0 0.0
  %1273 = vmatpush1.msra.mxu0 %v1155
  %1274 = vmatprep.subr.mxu0 0.0
  %1275 = vmatpush1.msra.mxu0 %v1156
  %1276 = vmatprep.subr.mxu0 0.0
  %1277 = vmatpush1.msra.mxu0 %v1157
  %1278 = vmatprep.subr.mxu0 0.0
  %1279 = vmatpush1.msra.mxu0 %v1158
  %1280 = vmatprep.subr.mxu0 0.0
  %1281 = vmatpush1.msra.mxu0 %v1159
  %1282 = vmatprep.subr.mxu0 0.0
  %1283 = vmatpush1.msra.mxu0 %v1160
  %1284 = vmatprep.subr.mxu0 0.0
  %1285 = vmatpush1.msra.mxu0 %v1161
  %1286 = vmatprep.subr.mxu0 0.0
  %1287 = vmatpush1.msra.mxu0 %v1162
  %1288 = vmatprep.subr.mxu0 0.0
  %1289 = vmatpush1.msra.mxu0 %v1163
  %1290 = vmatprep.subr.mxu0 0.0
  %1291 = vmatpush1.msra.mxu0 %v1164
  %1292 = vmatprep.subr.mxu0 0.0
  %1293 = vmatpush1.msra.mxu0 %v1165
  %1294 = vmatprep.subr.mxu0 0.0
  %1295 = vmatpush1.msra.mxu0 %v1166
  %1296 = vmatprep.subr.mxu0 0.0
  %1297 = vmatpush1.msra.mxu0 %v1167
  %1298 = vmatprep.subr.mxu0 0.0
  %1299 = vmatpush1.msra.mxu0 %v1168
  %1300 = vmatprep.subr.mxu0 0.0
  %1301 = vmatpush1.msra.mxu0 %v1169
  %1302 = vmatprep.subr.mxu0 0.0
  %1303 = vmatpush1.msra.mxu0 %v1170
  %1304 = vmatprep.subr.mxu0 0.0
  %1305 = vmatpush1.msra.mxu0 %v1171
  %1306 = vmatprep.subr.mxu0 0.0
  %1307 = vmatpush1.msra.mxu0 %v1172
  %1308 = vmatprep.subr.mxu0 0.0
  %1309 = vmatpush1.msra.mxu0 %v1173
  %1310 = vmatprep.subr.mxu0 0.0
  %1311 = vmatpush1.msra.mxu0 %v1174
  %1312 = vmatprep.subr.mxu0 0.0
  %1313 = vmatpush1.msra.mxu0 %v1175
  %1314 = vmatprep.subr.mxu0 0.0
  %1315 = vmatpush1.msra.mxu0 %v1176
  %1316 = vmatprep.subr.mxu0 0.0
  %1317 = vmatpush1.msra.mxu0 %v1177
  %1318 = vmatprep.subr.mxu0 0.0
  %1319 = vmatpush1.msra.mxu0 %v1178
  %1320 = vmatprep.mubr.f32.mxu0 %v1050
  %1321 = vmatmul.mubr.f32.gmra.mrb[0].mxu0 %v1049
  %v1322 = vpop.f32.mrb[0].mxu0
  %v1323 = vadd.f32 %v1253, %v1322
  %v1324 = vpop.f32.mrb[0].mxu0
  %1325 = vdwg.mxu0
  %v1326 = vld [vmem:[%s8] sm:$0xff]
  %v1327 = vld [vmem:[%s8 + $0x8] sm:$0xff]
  %vm1328 = vcmask 15360
  %v1330 = vsel %vm1328, %v1326, 0
  %v1333 = vsel %vm1328, %v1327, 0
  %vm1335 = vcmask 1041408
  %v1337 = vsel %vm1335, %v1323, 0
  %1339 = vmatprep.subr.mxu0 0.0
  %1340 = vmatpush1.msra.mxu0 %v1337
  %1341 = vmatprep.subr.mxu0 0.0
  %1342 = vmatpush1.msra.mxu0 0.0
  %1343 = vmatprep.subr.mxu0 0.0
  %1344 = vmatpush1.msra.mxu0 0.0
  %1345 = vmatprep.subr.mxu0 0.0
  %1346 = vmatpush1.msra.mxu0 0.0
  %1347 = vmatprep.subr.mxu0 0.0
  %1348 = vmatpush1.msra.mxu0 0.0
  %1349 = vmatprep.subr.mxu0 0.0
  %1350 = vmatpush1.msra.mxu0 0.0
  %1351 = vmatprep.subr.mxu0 0.0
  %1352 = vmatpush1.msra.mxu0 0.0
  %1353 = vmatprep.subr.mxu0 0.0
  %1354 = vmatpush1.msra.mxu0 0.0
  %1355 = vmatprep.subr.mxu0 0.0
  %1356 = vmatpush1.msra.mxu0 0.0
  %1357 = vmatprep.subr.mxu0 0.0
  %1358 = vmatpush1.msra.mxu0 0.0
  %1359 = vmatprep.subr.mxu0 0.0
  %1360 = vmatpush1.msra.mxu0 0.0
  %1361 = vmatprep.subr.mxu0 0.0
  %1362 = vmatpush1.msra.mxu0 0.0
  %1363 = vmatprep.subr.mxu0 0.0
  %1364 = vmatpush1.msra.mxu0 0.0
  %1365 = vmatprep.subr.mxu0 0.0
  %1366 = vmatpush1.msra.mxu0 0.0
  %1367 = vmatprep.subr.mxu0 0.0
  %1368 = vmatpush1.msra.mxu0 0.0
  %1369 = vmatprep.subr.mxu0 0.0
  %1370 = vmatpush1.msra.mxu0 0.0
  %1371 = vmatprep.subr.mxu0 0.0
  %1372 = vmatpush1.msra.mxu0 0.0
  %1373 = vmatprep.subr.mxu0 0.0
  %1374 = vmatpush1.msra.mxu0 0.0
  %1375 = vmatprep.subr.mxu0 0.0
  %1376 = vmatpush1.msra.mxu0 0.0
  %1377 = vmatprep.subr.mxu0 0.0
  %1378 = vmatpush1.msra.mxu0 0.0
  %1379 = vmatprep.subr.mxu0 0.0
  %1380 = vmatpush1.msra.mxu0 0.0
  %1381 = vmatprep.subr.mxu0 0.0
  %1382 = vmatpush1.msra.mxu0 0.0
  %1383 = vmatprep.subr.mxu0 0.0
  %1384 = vmatpush1.msra.mxu0 0.0
  %1385 = vmatprep.subr.mxu0 0.0
  %1386 = vmatpush1.msra.mxu0 0.0
  %1387 = vmatprep.subr.mxu0 0.0
  %1388 = vmatpush1.msra.mxu0 0.0
  %1389 = vmatprep.subr.mxu0 0.0
  %1390 = vmatpush1.msra.mxu0 0.0
  %1391 = vmatprep.subr.mxu0 0.0
  %1392 = vmatpush1.msra.mxu0 0.0
  %1393 = vmatprep.subr.mxu0 0.0
  %1394 = vmatpush1.msra.mxu0 0.0
  %1395 = vmatprep.subr.mxu0 0.0
  %1396 = vmatpush1.msra.mxu0 0.0
  %1397 = vmatprep.subr.mxu0 0.0
  %1398 = vmatpush1.msra.mxu0 0.0
  %1399 = vmatprep.subr.mxu0 0.0
  %1400 = vmatpush1.msra.mxu0 0.0
  %1401 = vmatprep.subr.mxu0 0.0
  %1402 = vmatpush1.msra.mxu0 0.0
  %1403 = vmatprep.mubr.f32.mxu0 0.0
  %1404 = vmatmul.mubr.f32.gmra.mrb[0].mxu0 %v1330
  %v1405 = vpop.f32.mrb[0].mxu0
  %v1406 = vadd.f32 0.0, %v1405
  %v1407 = vpop.f32.mrb[0].mxu0
  %1408 = vmatprep.mubr.f32.mxu0 0.0
  %1409 = vmatmul.mubr.f32.gmra.mrb[0].mxu0 %v1333
  %v1410 = vpop.f32.mrb[0].mxu0
  %v1411 = vadd.f32 0.0, %v1410
  %v1412 = vpop.f32.mrb[0].mxu0
  %1413 = vdwg.mxu0
  %v1414 = vld [vmem:[%s9] sm:$0xff]
  %v1415 = vld [vmem:[%s9 + $0x8] sm:$0xff]
  %v1416 = vmul.f32 %v1406, %v1414
  %v1417 = vmul.f32 %v1411, %v1415
  %1420 = vrot.lane.b32.xlu0 %v1406, 112
  %v1421 = vpop.permute.xlu0 %1420
  %1422 = vrot.lane.b32.xlu0 %v1411, 112
  %v1423 = vpop.permute.xlu0 %1422
  %v1426 = vadd.f32 %v1416, %v1421
  %v1427 = vadd.f32 %v1417, %v1423
  %v1428 = vld [vmem:[%s14] sm:$0xff]
  %v1429 = vld [vmem:[%s14 + $0x8] sm:$0xff]
  %v1430 = vld [vmem:[%s14 + $0x10] sm:$0xff]
  %v1431 = vld [vmem:[%s14 + $0x18] sm:$0xff]
  %v1432 = vld [vmem:[%s14 + $0x20] sm:$0xff]
  %v1433 = vld [vmem:[%s14 + $0x28] sm:$0xff]
  %v1434 = vld [vmem:[%s14 + $0x30] sm:$0xff]
  %v1435 = vld [vmem:[%s14 + $0x38] sm:$0xff]
  %v1436 = vld [vmem:[%s14 + $0x40] sm:$0xff]
  %v1437 = vld [vmem:[%s14 + $0x48] sm:$0xff]
  %v1438 = vld [vmem:[%s14 + $0x50] sm:$0xff]
  %v1439 = vld [vmem:[%s14 + $0x58] sm:$0xff]
  %v1440 = vld [vmem:[%s14 + $0x60] sm:$0xff]
  %v1441 = vld [vmem:[%s14 + $0x68] sm:$0xff]
  %v1442 = vld [vmem:[%s14 + $0x70] sm:$0xff]
  %v1443 = vld [vmem:[%s14 + $0x78] sm:$0xff]
  %v1444 = vld [vmem:[%s15] sm:$0xff]
  %v1445 = vld [vmem:[%s15 + $0x8] sm:$0xff]
  %v1446 = vld [vmem:[%s15 + $0x10] sm:$0xff]
  %v1447 = vld [vmem:[%s15 + $0x18] sm:$0xff]
  %v1448 = vld [vmem:[%s15 + $0x20] sm:$0xff]
  %v1449 = vld [vmem:[%s15 + $0x28] sm:$0xff]
  %v1450 = vld [vmem:[%s15 + $0x30] sm:$0xff]
  %v1451 = vld [vmem:[%s15 + $0x38] sm:$0xff]
  %v1452 = vld [vmem:[%s15 + $0x40] sm:$0xff]
  %v1453 = vld [vmem:[%s15 + $0x48] sm:$0xff]
  %v1454 = vld [vmem:[%s15 + $0x50] sm:$0xff]
  %v1455 = vld [vmem:[%s15 + $0x58] sm:$0xff]
  %v1456 = vld [vmem:[%s15 + $0x60] sm:$0xff]
  %v1457 = vld [vmem:[%s15 + $0x68] sm:$0xff]
  %v1458 = vld [vmem:[%s15 + $0x70] sm:$0xff]
  %v1459 = vld [vmem:[%s15 + $0x78] sm:$0xff]
  %v1460 = vld [vmem:[%s20] sm:$0xff]
  %v1461 = vld [vmem:[%s20 + $0x8] sm:$0xff]
  %v1462 = vld [vmem:[%s10] sm:$0xff]
  %v1463 = vld [vmem:[%s10 + $0x8] sm:$0xff]
  %v1464 = vld [vmem:[%s10 + $0x10] sm:$0xff]
  %v1465 = vld [vmem:[%s10 + $0x18] sm:$0xff]
  %v1466 = vunpack.c.l.bf16 %v1462
  %v1467 = vunpack.c.h.bf16 %v1462
  %v1468 = vunpack.c.l.bf16 %v1463
  %v1469 = vunpack.c.h.bf16 %v1463
  %v1470 = vunpack.c.l.bf16 %v1464
  %v1471 = vunpack.c.h.bf16 %v1464
  %v1472 = vunpack.c.l.bf16 %v1465
  %v1473 = vunpack.c.h.bf16 %v1465
  %v1474 = vld [vmem:[%s11] sm:$0xf]
  %v1476 = vlaneseq
  %v1477 = vshrl.u32 %v1476, 7
  %v1478 = vsub.s32 0, %v1477
  %v1479 = vrot.slane %v1474, %v1478
  %v1480 = vlaneseq
  %v1481 = vshrl.u32 %v1480, 7
  %v1482 = vsub.s32 1, %v1481
  %v1483 = vrot.slane %v1474, %v1482
  %v1484 = vlaneseq
  %v1485 = vshrl.u32 %v1484, 7
  %v1486 = vsub.s32 2, %v1485
  %v1487 = vrot.slane %v1474, %v1486
  %v1488 = vlaneseq
  %v1489 = vshrl.u32 %v1488, 7
  %v1490 = vsub.s32 3, %v1489
  %v1491 = vrot.slane %v1474, %v1490
  %vm1496 = vcmask 130048
  %v1498 = vsel %vm1496, %v1426, 0
  %v1501 = vsel %vm1496, %v1427, 0
  %1503 = vmatprep.subr.mxu0 %v1467
  %1504 = vmatpush1.msra.mxu0 %v1466
  %1505 = vmatprep.subr.mxu0 %v1471
  %1506 = vmatpush1.msra.mxu0 %v1470
  %1507 = vmatprep.subr.mxu0 0.0
  %1508 = vmatpush1.msra.mxu0 0.0
  %1509 = vmatprep.subr.mxu0 0.0
  %1510 = vmatpush1.msra.mxu0 0.0
  %1511 = vmatprep.subr.mxu0 0.0
  %1512 = vmatpush1.msra.mxu0 0.0
  %1513 = vmatprep.subr.mxu0 0.0
  %1514 = vmatpush1.msra.mxu0 0.0
  %1515 = vmatprep.subr.mxu0 0.0
  %1516 = vmatpush1.msra.mxu0 0.0
  %1517 = vmatprep.subr.mxu0 0.0
  %1518 = vmatpush1.msra.mxu0 0.0
  %1519 = vmatprep.subr.mxu0 0.0
  %1520 = vmatpush1.msra.mxu0 0.0
  %1521 = vmatprep.subr.mxu0 0.0
  %1522 = vmatpush1.msra.mxu0 0.0
  %1523 = vmatprep.subr.mxu0 0.0
  %1524 = vmatpush1.msra.mxu0 0.0
  %1525 = vmatprep.subr.mxu0 0.0
  %1526 = vmatpush1.msra.mxu0 0.0
  %1527 = vmatprep.subr.mxu0 0.0
  %1528 = vmatpush1.msra.mxu0 0.0
  %1529 = vmatprep.subr.mxu0 0.0
  %1530 = vmatpush1.msra.mxu0 0.0
  %1531 = vmatprep.subr.mxu0 0.0
  %1532 = vmatpush1.msra.mxu0 0.0
  %1533 = vmatprep.subr.mxu0 0.0
  %1534 = vmatpush1.msra.mxu0 0.0
  %1535 = vmatprep.subr.mxu0 0.0
  %1536 = vmatpush1.msra.mxu0 0.0
  %1537 = vmatprep.subr.mxu0 0.0
  %1538 = vmatpush1.msra.mxu0 0.0
  %1539 = vmatprep.subr.mxu0 0.0
  %1540 = vmatpush1.msra.mxu0 0.0
  %1541 = vmatprep.subr.mxu0 0.0
  %1542 = vmatpush1.msra.mxu0 0.0
  %1543 = vmatprep.subr.mxu0 0.0
  %1544 = vmatpush1.msra.mxu0 0.0
  %1545 = vmatprep.subr.mxu0 0.0
  %1546 = vmatpush1.msra.mxu0 0.0
  %1547 = vmatprep.subr.mxu0 0.0
  %1548 = vmatpush1.msra.mxu0 0.0
  %1549 = vmatprep.subr.mxu0 0.0
  %1550 = vmatpush1.msra.mxu0 0.0
  %1551 = vmatprep.subr.mxu0 0.0
  %1552 = vmatpush1.msra.mxu0 0.0
  %1553 = vmatprep.subr.mxu0 0.0
  %1554 = vmatpush1.msra.mxu0 0.0
  %1555 = vmatprep.subr.mxu0 0.0
  %1556 = vmatpush1.msra.mxu0 0.0
  %1557 = vmatprep.subr.mxu0 0.0
  %1558 = vmatpush1.msra.mxu0 0.0
  %1559 = vmatprep.subr.mxu0 0.0
  %1560 = vmatpush1.msra.mxu0 0.0
  %1561 = vmatprep.subr.mxu0 0.0
  %1562 = vmatpush1.msra.mxu0 0.0
  %1563 = vmatprep.subr.mxu0 0.0
  %1564 = vmatpush1.msra.mxu0 0.0
  %1565 = vmatprep.subr.mxu0 0.0
  %1566 = vmatpush1.msra.mxu0 0.0
  %1567 = vmatprep.mubr.f32.mxu0 0.0
  %1568 = vmatmul.mubr.f32.gmra.mrb[0].mxu0 %v1498
  %v1569 = vpop.f32.mrb[0].mxu0
  %v1570 = vadd.f32 %v1479, %v1569
  %v1571 = vpop.f32.mrb[0].mxu0
  %v1572 = vadd.f32 %v1483, %v1571
  %1573 = vmatprep.mubr.f32.mxu0 0.0
  %1574 = vmatmul.mubr.f32.gmra.mrb[0].mxu0 %v1501
  %v1575 = vpop.f32.mrb[0].mxu0
  %v1576 = vadd.f32 %v1479, %v1575
  %v1577 = vpop.f32.mrb[0].mxu0
  %v1578 = vadd.f32 %v1483, %v1577
  %1579 = vdwg.mxu0
  %1580 = vmatprep.subr.mxu0 %v1469
  %1581 = vmatpush1.msra.mxu0 %v1468
  %1582 = vmatprep.subr.mxu0 %v1473
  %1583 = vmatpush1.msra.mxu0 %v1472
  %1584 = vmatprep.subr.mxu0 0.0
  %1585 = vmatpush1.msra.mxu0 0.0
  %1586 = vmatprep.subr.mxu0 0.0
  %1587 = vmatpush1.msra.mxu0 0.0
  %1588 = vmatprep.subr.mxu0 0.0
  %1589 = vmatpush1.msra.mxu0 0.0
  %1590 = vmatprep.subr.mxu0 0.0
  %1591 = vmatpush1.msra.mxu0 0.0
  %1592 = vmatprep.subr.mxu0 0.0
  %1593 = vmatpush1.msra.mxu0 0.0
  %1594 = vmatprep.subr.mxu0 0.0
  %1595 = vmatpush1.msra.mxu0 0.0
  %1596 = vmatprep.subr.mxu0 0.0
  %1597 = vmatpush1.msra.mxu0 0.0
  %1598 = vmatprep.subr.mxu0 0.0
  %1599 = vmatpush1.msra.mxu0 0.0
  %1600 = vmatprep.subr.mxu0 0.0
  %1601 = vmatpush1.msra.mxu0 0.0
  %1602 = vmatprep.subr.mxu0 0.0
  %1603 = vmatpush1.msra.mxu0 0.0
  %1604 = vmatprep.subr.mxu0 0.0
  %1605 = vmatpush1.msra.mxu0 0.0
  %1606 = vmatprep.subr.mxu0 0.0
  %1607 = vmatpush1.msra.mxu0 0.0
  %1608 = vmatprep.subr.mxu0 0.0
  %1609 = vmatpush1.msra.mxu0 0.0
  %1610 = vmatprep.subr.mxu0 0.0
  %1611 = vmatpush1.msra.mxu0 0.0
  %1612 = vmatprep.subr.mxu0 0.0
  %1613 = vmatpush1.msra.mxu0 0.0
  %1614 = vmatprep.subr.mxu0 0.0
  %1615 = vmatpush1.msra.mxu0 0.0
  %1616 = vmatprep.subr.mxu0 0.0
  %1617 = vmatpush1.msra.mxu0 0.0
  %1618 = vmatprep.subr.mxu0 0.0
  %1619 = vmatpush1.msra.mxu0 0.0
  %1620 = vmatprep.subr.mxu0 0.0
  %1621 = vmatpush1.msra.mxu0 0.0
  %1622 = vmatprep.subr.mxu0 0.0
  %1623 = vmatpush1.msra.mxu0 0.0
  %1624 = vmatprep.subr.mxu0 0.0
  %1625 = vmatpush1.msra.mxu0 0.0
  %1626 = vmatprep.subr.mxu0 0.0
  %1627 = vmatpush1.msra.mxu0 0.0
  %1628 = vmatprep.subr.mxu0 0.0
  %1629 = vmatpush1.msra.mxu0 0.0
  %1630 = vmatprep.subr.mxu0 0.0
  %1631 = vmatpush1.msra.mxu0 0.0
  %1632 = vmatprep.subr.mxu0 0.0
  %1633 = vmatpush1.msra.mxu0 0.0
  %1634 = vmatprep.subr.mxu0 0.0
  %1635 = vmatpush1.msra.mxu0 0.0
  %1636 = vmatprep.subr.mxu0 0.0
  %1637 = vmatpush1.msra.mxu0 0.0
  %1638 = vmatprep.subr.mxu0 0.0
  %1639 = vmatpush1.msra.mxu0 0.0
  %1640 = vmatprep.subr.mxu0 0.0
  %1641 = vmatpush1.msra.mxu0 0.0
  %1642 = vmatprep.subr.mxu0 0.0
  %1643 = vmatpush1.msra.mxu0 0.0
  %1644 = vmatprep.mubr.f32.mxu0 0.0
  %1645 = vmatmul.mubr.f32.gmra.mrb[0].mxu0 %v1498
  %v1646 = vpop.f32.mrb[0].mxu0
  %v1647 = vadd.f32 %v1487, %v1646
  %v1648 = vpop.f32.mrb[0].mxu0
  %v1649 = vadd.f32 %v1491, %v1648
  %1650 = vmatprep.mubr.f32.mxu0 0.0
  %1651 = vmatmul.mubr.f32.gmra.mrb[0].mxu0 %v1501
  %v1652 = vpop.f32.mrb[0].mxu0
  %v1653 = vadd.f32 %v1487, %v1652
  %v1654 = vpop.f32.mrb[0].mxu0
  %v1655 = vadd.f32 %v1491, %v1654
  %1656 = vdwg.mxu0
  %v1657 = vmax.f32 %v1570, 0.0
  %v1658 = vmax.f32 %v1572, 0.0
  %v1659 = vmax.f32 %v1647, 0.0
  %v1660 = vmax.f32 %v1649, 0.0
  %v1661 = vmax.f32 %v1576, 0.0
  %v1662 = vmax.f32 %v1578, 0.0
  %v1663 = vmax.f32 %v1653, 0.0
  %v1664 = vmax.f32 %v1655, 0.0
  %v1665 = vld [vmem:[%s12] sm:$0xf]
  %v1666 = vld [vmem:[%s12 + $0x4] sm:$0xf]
  %v1667 = vld [vmem:[%s12 + $0x8] sm:$0xf]
  %v1668 = vld [vmem:[%s12 + $0xc] sm:$0xf]
  %v1669 = vld [vmem:[%s12 + $0x10] sm:$0xf]
  %v1670 = vld [vmem:[%s12 + $0x14] sm:$0xf]
  %v1671 = vld [vmem:[%s12 + $0x18] sm:$0xf]
  %v1672 = vld [vmem:[%s12 + $0x1c] sm:$0xf]
  %v1673 = vld [vmem:[%s12 + $0x20] sm:$0xf]
  %v1674 = vld [vmem:[%s12 + $0x24] sm:$0xf]
  %v1675 = vld [vmem:[%s12 + $0x28] sm:$0xf]
  %v1676 = vld [vmem:[%s12 + $0x2c] sm:$0xf]
  %v1677 = vld [vmem:[%s12 + $0x30] sm:$0xf]
  %v1678 = vld [vmem:[%s12 + $0x34] sm:$0xf]
  %v1679 = vld [vmem:[%s12 + $0x38] sm:$0xf]
  %v1680 = vld [vmem:[%s12 + $0x3c] sm:$0xf]
  %v1681 = vld [vmem:[%s12 + $0x40] sm:$0xf]
  %v1682 = vld [vmem:[%s12 + $0x44] sm:$0xf]
  %v1683 = vld [vmem:[%s12 + $0x48] sm:$0xf]
  %v1684 = vld [vmem:[%s12 + $0x4c] sm:$0xf]
  %v1685 = vld [vmem:[%s12 + $0x50] sm:$0xf]
  %v1686 = vld [vmem:[%s12 + $0x54] sm:$0xf]
  %v1687 = vld [vmem:[%s12 + $0x58] sm:$0xf]
  %v1688 = vld [vmem:[%s12 + $0x5c] sm:$0xf]
  %v1689 = vld [vmem:[%s12 + $0x60] sm:$0xf]
  %v1690 = vld [vmem:[%s12 + $0x64] sm:$0xf]
  %v1691 = vld [vmem:[%s12 + $0x68] sm:$0xf]
  %v1692 = vld [vmem:[%s12 + $0x6c] sm:$0xf]
  %v1693 = vld [vmem:[%s12 + $0x70] sm:$0xf]
  %v1694 = vld [vmem:[%s12 + $0x74] sm:$0xf]
  %v1695 = vld [vmem:[%s12 + $0x78] sm:$0xf]
  %v1696 = vld [vmem:[%s12 + $0x7c] sm:$0xf]
  %v1697 = vld [vmem:[%s12 + $0x80] sm:$0xf]
  %v1698 = vld [vmem:[%s12 + $0x84] sm:$0xf]
  %v1699 = vld [vmem:[%s12 + $0x88] sm:$0xf]
  %v1700 = vld [vmem:[%s12 + $0x8c] sm:$0xf]
  %v1701 = vld [vmem:[%s12 + $0x90] sm:$0xf]
  %v1702 = vld [vmem:[%s12 + $0x94] sm:$0xf]
  %v1703 = vld [vmem:[%s12 + $0x98] sm:$0xf]
  %v1704 = vld [vmem:[%s12 + $0x9c] sm:$0xf]
  %v1705 = vld [vmem:[%s12 + $0xa0] sm:$0xf]
  %v1706 = vld [vmem:[%s12 + $0xa4] sm:$0xf]
  %v1707 = vld [vmem:[%s12 + $0xa8] sm:$0xf]
  %v1708 = vld [vmem:[%s12 + $0xac] sm:$0xf]
  %v1709 = vld [vmem:[%s12 + $0xb0] sm:$0xf]
  %v1710 = vld [vmem:[%s12 + $0xb4] sm:$0xf]
  %v1711 = vld [vmem:[%s12 + $0xb8] sm:$0xf]
  %v1712 = vld [vmem:[%s12 + $0xbc] sm:$0xf]
  %v1713 = vld [vmem:[%s12 + $0xc0] sm:$0xf]
  %v1714 = vld [vmem:[%s12 + $0xc4] sm:$0xf]
  %v1715 = vld [vmem:[%s12 + $0xc8] sm:$0xf]
  %v1716 = vld [vmem:[%s12 + $0xcc] sm:$0xf]
  %v1717 = vld [vmem:[%s12 + $0xd0] sm:$0xf]
  %v1718 = vld [vmem:[%s12 + $0xd4] sm:$0xf]
  %v1719 = vld [vmem:[%s12 + $0xd8] sm:$0xf]
  %v1720 = vld [vmem:[%s12 + $0xdc] sm:$0xf]
  %v1721 = vld [vmem:[%s12 + $0xe0] sm:$0xf]
  %v1722 = vld [vmem:[%s12 + $0xe4] sm:$0xf]
  %v1723 = vld [vmem:[%s12 + $0xe8] sm:$0xf]
  %v1724 = vld [vmem:[%s12 + $0xec] sm:$0xf]
  %v1725 = vld [vmem:[%s12 + $0xf0] sm:$0xf]
  %v1726 = vld [vmem:[%s12 + $0xf4] sm:$0xf]
  %v1727 = vld [vmem:[%s12 + $0xf8] sm:$0xf]
  %v1728 = vld [vmem:[%s12 + $0xfc] sm:$0xf]
  %v1729 = vunpack.c.l.bf16 %v1665
  %v1730 = vunpack.c.l.bf16 %v1666
  %v1731 = vunpack.c.l.bf16 %v1667
  %v1732 = vunpack.c.l.bf16 %v1668
  %v1733 = vunpack.c.l.bf16 %v1669
  %v1734 = vunpack.c.l.bf16 %v1670
  %v1735 = vunpack.c.l.bf16 %v1671
  %v1736 = vunpack.c.l.bf16 %v1672
  %v1737 = vunpack.c.l.bf16 %v1673
  %v1738 = vunpack.c.l.bf16 %v1674
  %v1739 = vunpack.c.l.bf16 %v1675
  %v1740 = vunpack.c.l.bf16 %v1676
  %v1741 = vunpack.c.l.bf16 %v1677
  %v1742 = vunpack.c.l.bf16 %v1678
  %v1743 = vunpack.c.l.bf16 %v1679
  %v1744 = vunpack.c.l.bf16 %v1680
  %v1745 = vunpack.c.l.bf16 %v1681
  %v1746 = vunpack.c.l.bf16 %v1682
  %v1747 = vunpack.c.l.bf16 %v1683
  %v1748 = vunpack.c.l.bf16 %v1684
  %v1749 = vunpack.c.l.bf16 %v1685
  %v1750 = vunpack.c.l.bf16 %v1686
  %v1751 = vunpack.c.l.bf16 %v1687
  %v1752 = vunpack.c.l.bf16 %v1688
  %v1753 = vunpack.c.l.bf16 %v1689
  %v1754 = vunpack.c.l.bf16 %v1690
  %v1755 = vunpack.c.l.bf16 %v1691
  %v1756 = vunpack.c.l.bf16 %v1692
  %v1757 = vunpack.c.l.bf16 %v1693
  %v1758 = vunpack.c.l.bf16 %v1694
  %v1759 = vunpack.c.l.bf16 %v1695
  %v1760 = vunpack.c.l.bf16 %v1696
  %v1761 = vunpack.c.l.bf16 %v1697
  %v1762 = vunpack.c.l.bf16 %v1698
  %v1763 = vunpack.c.l.bf16 %v1699
  %v1764 = vunpack.c.l.bf16 %v1700
  %v1765 = vunpack.c.l.bf16 %v1701
  %v1766 = vunpack.c.l.bf16 %v1702
  %v1767 = vunpack.c.l.bf16 %v1703
  %v1768 = vunpack.c.l.bf16 %v1704
  %v1769 = vunpack.c.l.bf16 %v1705
  %v1770 = vunpack.c.l.bf16 %v1706
  %v1771 = vunpack.c.l.bf16 %v1707
  %v1772 = vunpack.c.l.bf16 %v1708
  %v1773 = vunpack.c.l.bf16 %v1709
  %v1774 = vunpack.c.l.bf16 %v1710
  %v1775 = vunpack.c.l.bf16 %v1711
  %v1776 = vunpack.c.l.bf16 %v1712
  %v1777 = vunpack.c.l.bf16 %v1713
  %v1778 = vunpack.c.l.bf16 %v1714
  %v1779 = vunpack.c.l.bf16 %v1715
  %v1780 = vunpack.c.l.bf16 %v1716
  %v1781 = vunpack.c.l.bf16 %v1717
  %v1782 = vunpack.c.l.bf16 %v1718
  %v1783 = vunpack.c.l.bf16 %v1719
  %v1784 = vunpack.c.l.bf16 %v1720
  %v1785 = vunpack.c.l.bf16 %v1721
  %v1786 = vunpack.c.l.bf16 %v1722
  %v1787 = vunpack.c.l.bf16 %v1723
  %v1788 = vunpack.c.l.bf16 %v1724
  %v1789 = vunpack.c.l.bf16 %v1725
  %v1790 = vunpack.c.l.bf16 %v1726
  %v1791 = vunpack.c.l.bf16 %v1727
  %v1792 = vunpack.c.l.bf16 %v1728
  %v1793 = vld [vmem:[%s13] sm:$0x1]
  %v1795 = vlaneseq
  %v1796 = vshrl.u32 %v1795, 7
  %v1797 = vsub.s32 0, %v1796
  %v1798 = vrot.slane %v1793, %v1797
  %1800 = vmatprep.subr.mxu0 0.0
  %1801 = vmatpush1.msra.mxu0 %v1729
  %1802 = vmatprep.subr.mxu0 0.0
  %1803 = vmatpush1.msra.mxu0 %v1730
  %1804 = vmatprep.subr.mxu0 0.0
  %1805 = vmatpush1.msra.mxu0 %v1731
  %1806 = vmatprep.subr.mxu0 0.0
  %1807 = vmatpush1.msra.mxu0 %v1732
  %1808 = vmatprep.subr.mxu0 0.0
  %1809 = vmatpush1.msra.mxu0 %v1733
  %1810 = vmatprep.subr.mxu0 0.0
  %1811 = vmatpush1.msra.mxu0 %v1734
  %1812 = vmatprep.subr.mxu0 0.0
  %1813 = vmatpush1.msra.mxu0 %v1735
  %1814 = vmatprep.subr.mxu0 0.0
  %1815 = vmatpush1.msra.mxu0 %v1736
  %1816 = vmatprep.subr.mxu0 0.0
  %1817 = vmatpush1.msra.mxu0 %v1737
  %1818 = vmatprep.subr.mxu0 0.0
  %1819 = vmatpush1.msra.mxu0 %v1738
  %1820 = vmatprep.subr.mxu0 0.0
  %1821 = vmatpush1.msra.mxu0 %v1739
  %1822 = vmatprep.subr.mxu0 0.0
  %1823 = vmatpush1.msra.mxu0 %v1740
  %1824 = vmatprep.subr.mxu0 0.0
  %1825 = vmatpush1.msra.mxu0 %v1741
  %1826 = vmatprep.subr.mxu0 0.0
  %1827 = vmatpush1.msra.mxu0 %v1742
  %1828 = vmatprep.subr.mxu0 0.0
  %1829 = vmatpush1.msra.mxu0 %v1743
  %1830 = vmatprep.subr.mxu0 0.0
  %1831 = vmatpush1.msra.mxu0 %v1744
  %1832 = vmatprep.subr.mxu0 0.0
  %1833 = vmatpush1.msra.mxu0 %v1745
  %1834 = vmatprep.subr.mxu0 0.0
  %1835 = vmatpush1.msra.mxu0 %v1746
  %1836 = vmatprep.subr.mxu0 0.0
  %1837 = vmatpush1.msra.mxu0 %v1747
  %1838 = vmatprep.subr.mxu0 0.0
  %1839 = vmatpush1.msra.mxu0 %v1748
  %1840 = vmatprep.subr.mxu0 0.0
  %1841 = vmatpush1.msra.mxu0 %v1749
  %1842 = vmatprep.subr.mxu0 0.0
  %1843 = vmatpush1.msra.mxu0 %v1750
  %1844 = vmatprep.subr.mxu0 0.0
  %1845 = vmatpush1.msra.mxu0 %v1751
  %1846 = vmatprep.subr.mxu0 0.0
  %1847 = vmatpush1.msra.mxu0 %v1752
  %1848 = vmatprep.subr.mxu0 0.0
  %1849 = vmatpush1.msra.mxu0 %v1753
  %1850 = vmatprep.subr.mxu0 0.0
  %1851 = vmatpush1.msra.mxu0 %v1754
  %1852 = vmatprep.subr.mxu0 0.0
  %1853 = vmatpush1.msra.mxu0 %v1755
  %1854 = vmatprep.subr.mxu0 0.0
  %1855 = vmatpush1.msra.mxu0 %v1756
  %1856 = vmatprep.subr.mxu0 0.0
  %1857 = vmatpush1.msra.mxu0 %v1757
  %1858 = vmatprep.subr.mxu0 0.0
  %1859 = vmatpush1.msra.mxu0 %v1758
  %1860 = vmatprep.subr.mxu0 0.0
  %1861 = vmatpush1.msra.mxu0 %v1759
  %1862 = vmatprep.subr.mxu0 0.0
  %1863 = vmatpush1.msra.mxu0 %v1760
  %1864 = vmatprep.mubr.f32.mxu0 %v1658
  %1865 = vmatmul.mubr.f32.gmra.mrb[0].mxu0 %v1657
  %v1866 = vpop.f32.mrb[0].mxu0
  %v1867 = vadd.f32 %v1798, %v1866
  %v1868 = vpop.f32.mrb[0].mxu0
  %1869 = vmatprep.mubr.f32.mxu0 %v1662
  %1870 = vmatmul.mubr.f32.gmra.mrb[0].mxu0 %v1661
  %v1871 = vpop.f32.mrb[0].mxu0
  %v1872 = vadd.f32 %v1798, %v1871
  %v1873 = vpop.f32.mrb[0].mxu0
  %1874 = vdwg.mxu0
  %1875 = vmatprep.subr.mxu0 0.0
  %1876 = vmatpush1.msra.mxu0 %v1761
  %1877 = vmatprep.subr.mxu0 0.0
  %1878 = vmatpush1.msra.mxu0 %v1762
  %1879 = vmatprep.subr.mxu0 0.0
  %1880 = vmatpush1.msra.mxu0 %v1763
  %1881 = vmatprep.subr.mxu0 0.0
  %1882 = vmatpush1.msra.mxu0 %v1764
  %1883 = vmatprep.subr.mxu0 0.0
  %1884 = vmatpush1.msra.mxu0 %v1765
  %1885 = vmatprep.subr.mxu0 0.0
  %1886 = vmatpush1.msra.mxu0 %v1766
  %1887 = vmatprep.subr.mxu0 0.0
  %1888 = vmatpush1.msra.mxu0 %v1767
  %1889 = vmatprep.subr.mxu0 0.0
  %1890 = vmatpush1.msra.mxu0 %v1768
  %1891 = vmatprep.subr.mxu0 0.0
  %1892 = vmatpush1.msra.mxu0 %v1769
  %1893 = vmatprep.subr.mxu0 0.0
  %1894 = vmatpush1.msra.mxu0 %v1770
  %1895 = vmatprep.subr.mxu0 0.0
  %1896 = vmatpush1.msra.mxu0 %v1771
  %1897 = vmatprep.subr.mxu0 0.0
  %1898 = vmatpush1.msra.mxu0 %v1772
  %1899 = vmatprep.subr.mxu0 0.0
  %1900 = vmatpush1.msra.mxu0 %v1773
  %1901 = vmatprep.subr.mxu0 0.0
  %1902 = vmatpush1.msra.mxu0 %v1774
  %1903 = vmatprep.subr.mxu0 0.0
  %1904 = vmatpush1.msra.mxu0 %v1775
  %1905 = vmatprep.subr.mxu0 0.0
  %1906 = vmatpush1.msra.mxu0 %v1776
  %1907 = vmatprep.subr.mxu0 0.0
  %1908 = vmatpush1.msra.mxu0 %v1777
  %1909 = vmatprep.subr.mxu0 0.0
  %1910 = vmatpush1.msra.mxu0 %v1778
  %1911 = vmatprep.subr.mxu0 0.0
  %1912 = vmatpush1.msra.mxu0 %v1779
  %1913 = vmatprep.subr.mxu0 0.0
  %1914 = vmatpush1.msra.mxu0 %v1780
  %1915 = vmatprep.subr.mxu0 0.0
  %1916 = vmatpush1.msra.mxu0 %v1781
  %1917 = vmatprep.subr.mxu0 0.0
  %1918 = vmatpush1.msra.mxu0 %v1782
  %1919 = vmatprep.subr.mxu0 0.0
  %1920 = vmatpush1.msra.mxu0 %v1783
  %1921 = vmatprep.subr.mxu0 0.0
  %1922 = vmatpush1.msra.mxu0 %v1784
  %1923 = vmatprep.subr.mxu0 0.0
  %1924 = vmatpush1.msra.mxu0 %v1785
  %1925 = vmatprep.subr.mxu0 0.0
  %1926 = vmatpush1.msra.mxu0 %v1786
  %1927 = vmatprep.subr.mxu0 0.0
  %1928 = vmatpush1.msra.mxu0 %v1787
  %1929 = vmatprep.subr.mxu0 0.0
  %1930 = vmatpush1.msra.mxu0 %v1788
  %1931 = vmatprep.subr.mxu0 0.0
  %1932 = vmatpush1.msra.mxu0 %v1789
  %1933 = vmatprep.subr.mxu0 0.0
  %1934 = vmatpush1.msra.mxu0 %v1790
  %1935 = vmatprep.subr.mxu0 0.0
  %1936 = vmatpush1.msra.mxu0 %v1791
  %1937 = vmatprep.subr.mxu0 0.0
  %1938 = vmatpush1.msra.mxu0 %v1792
  %1939 = vmatprep.mubr.f32.mxu0 %v1660
  %1940 = vmatmul.mubr.f32.gmra.mrb[0].mxu0 %v1659
  %v1941 = vpop.f32.mrb[0].mxu0
  %v1942 = vadd.f32 %v1867, %v1941
  %v1943 = vpop.f32.mrb[0].mxu0
  %1944 = vmatprep.mubr.f32.mxu0 %v1664
  %1945 = vmatmul.mubr.f32.gmra.mrb[0].mxu0 %v1663
  %v1946 = vpop.f32.mrb[0].mxu0
  %v1947 = vadd.f32 %v1872, %v1946
  %v1948 = vpop.f32.mrb[0].mxu0
  %1949 = vdwg.mxu0
  %v1951 = vsel %vm1496, %v1428, 0
  %v1954 = vsel %vm1496, %v1429, 0
  %v1957 = vsel %vm1496, %v1430, 0
  %v1960 = vsel %vm1496, %v1431, 0
  %v1963 = vsel %vm1496, %v1432, 0
  %v1966 = vsel %vm1496, %v1433, 0
  %v1969 = vsel %vm1496, %v1434, 0
  %v1972 = vsel %vm1496, %v1435, 0
  %v1975 = vsel %vm1496, %v1436, 0
  %v1978 = vsel %vm1496, %v1437, 0
  %v1981 = vsel %vm1496, %v1438, 0
  %v1984 = vsel %vm1496, %v1439, 0
  %v1987 = vsel %vm1496, %v1440, 0
  %v1990 = vsel %vm1496, %v1441, 0
  %v1993 = vsel %vm1496, %v1442, 0
  %v1996 = vsel %vm1496, %v1443, 0
  %1998 = vmatprep.subr.mxu0 0.0
  %1999 = vmatpush1.msra.mxu0 %v1426
  %2000 = vmatprep.subr.mxu0 0.0
  %2001 = vmatpush1.msra.mxu0 %v1427
  %2002 = vmatprep.subr.mxu0 0.0
  %2003 = vmatpush1.msra.mxu0 0.0
  %2004 = vmatprep.subr.mxu0 0.0
  %2005 = vmatpush1.msra.mxu0 0.0
  %2006 = vmatprep.subr.mxu0 0.0
  %2007 = vmatpush1.msra.mxu0 0.0
  %2008 = vmatprep.subr.mxu0 0.0
  %2009 = vmatpush1.msra.mxu0 0.0
  %2010 = vmatprep.subr.mxu0 0.0
  %2011 = vmatpush1.msra.mxu0 0.0
  %2012 = vmatprep.subr.mxu0 0.0
  %2013 = vmatpush1.msra.mxu0 0.0
  %2014 = vmatprep.subr.mxu0 0.0
  %2015 = vmatpush1.msra.mxu0 0.0
  %2016 = vmatprep.subr.mxu0 0.0
  %2017 = vmatpush1.msra.mxu0 0.0
  %2018 = vmatprep.subr.mxu0 0.0
  %2019 = vmatpush1.msra.mxu0 0.0
  %2020 = vmatprep.subr.mxu0 0.0
  %2021 = vmatpush1.msra.mxu0 0.0
  %2022 = vmatprep.subr.mxu0 0.0
  %2023 = vmatpush1.msra.mxu0 0.0
  %2024 = vmatprep.subr.mxu0 0.0
  %2025 = vmatpush1.msra.mxu0 0.0
  %2026 = vmatprep.subr.mxu0 0.0
  %2027 = vmatpush1.msra.mxu0 0.0
  %2028 = vmatprep.subr.mxu0 0.0
  %2029 = vmatpush1.msra.mxu0 0.0
  %2030 = vmatprep.subr.mxu0 0.0
  %2031 = vmatpush1.msra.mxu0 0.0
  %2032 = vmatprep.subr.mxu0 0.0
  %2033 = vmatpush1.msra.mxu0 0.0
  %2034 = vmatprep.subr.mxu0 0.0
  %2035 = vmatpush1.msra.mxu0 0.0
  %2036 = vmatprep.subr.mxu0 0.0
  %2037 = vmatpush1.msra.mxu0 0.0
  %2038 = vmatprep.subr.mxu0 0.0
  %2039 = vmatpush1.msra.mxu0 0.0
  %2040 = vmatprep.subr.mxu0 0.0
  %2041 = vmatpush1.msra.mxu0 0.0
  %2042 = vmatprep.subr.mxu0 0.0
  %2043 = vmatpush1.msra.mxu0 0.0
  %2044 = vmatprep.subr.mxu0 0.0
  %2045 = vmatpush1.msra.mxu0 0.0
  %2046 = vmatprep.subr.mxu0 0.0
  %2047 = vmatpush1.msra.mxu0 0.0
  %2048 = vmatprep.subr.mxu0 0.0
  %2049 = vmatpush1.msra.mxu0 0.0
  %2050 = vmatprep.subr.mxu0 0.0
  %2051 = vmatpush1.msra.mxu0 0.0
  %2052 = vmatprep.subr.mxu0 0.0
  %2053 = vmatpush1.msra.mxu0 0.0
  %2054 = vmatprep.subr.mxu0 0.0
  %2055 = vmatpush1.msra.mxu0 0.0
  %2056 = vmatprep.subr.mxu0 0.0
  %2057 = vmatpush1.msra.mxu0 0.0
  %2058 = vmatprep.subr.mxu0 0.0
  %2059 = vmatpush1.msra.mxu0 0.0
  %2060 = vmatprep.subr.mxu0 0.0
  %2061 = vmatpush1.msra.mxu0 0.0
  %2062 = vmatprep.mubr.f32.mxu0 0.0
  %2063 = vmatmul.mubr.f32.gmra.mrb[0].mxu0 %v1951
  %v2064 = vpop.f32.mrb[0].mxu0
  %v2065 = vadd.f32 0.0, %v2064
  %v2066 = vpop.f32.mrb[0].mxu0
  %2067 = vmatprep.mubr.f32.mxu0 0.0
  %2068 = vmatmul.mubr.f32.gmra.mrb[0].mxu0 %v1954
  %v2069 = vpop.f32.mrb[0].mxu0
  %v2070 = vadd.f32 0.0, %v2069
  %v2071 = vpop.f32.mrb[0].mxu0
  %2072 = vmatprep.mubr.f32.mxu0 0.0
  %2073 = vmatmul.mubr.f32.gmra.mrb[0].mxu0 %v1957
  %v2074 = vpop.f32.mrb[0].mxu0
  %v2075 = vadd.f32 0.0, %v2074
  %v2076 = vpop.f32.mrb[0].mxu0
  %2077 = vmatprep.mubr.f32.mxu0 0.0
  %2078 = vmatmul.mubr.f32.gmra.mrb[0].mxu0 %v1960
  %v2079 = vpop.f32.mrb[0].mxu0
  %v2080 = vadd.f32 0.0, %v2079
  %v2081 = vpop.f32.mrb[0].mxu0
  %2082 = vmatprep.mubr.f32.mxu0 0.0
  %2083 = vmatmul.mubr.f32.gmra.mrb[0].mxu0 %v1963
  %v2084 = vpop.f32.mrb[0].mxu0
  %v2085 = vadd.f32 0.0, %v2084
  %v2086 = vpop.f32.mrb[0].mxu0
  %2087 = vmatprep.mubr.f32.mxu0 0.0
  %2088 = vmatmul.mubr.f32.gmra.mrb[0].mxu0 %v1966
  %v2089 = vpop.f32.mrb[0].mxu0
  %v2090 = vadd.f32 0.0, %v2089
  %v2091 = vpop.f32.mrb[0].mxu0
  %2092 = vmatprep.mubr.f32.mxu0 0.0
  %2093 = vmatmul.mubr.f32.gmra.mrb[0].mxu0 %v1969
  %v2094 = vpop.f32.mrb[0].mxu0
  %v2095 = vadd.f32 0.0, %v2094
  %v2096 = vpop.f32.mrb[0].mxu0
  %2097 = vmatprep.mubr.f32.mxu0 0.0
  %2098 = vmatmul.mubr.f32.gmra.mrb[0].mxu0 %v1972
  %v2099 = vpop.f32.mrb[0].mxu0
  %v2100 = vadd.f32 0.0, %v2099
  %v2101 = vpop.f32.mrb[0].mxu0
  %2102 = vmatprep.mubr.f32.mxu0 0.0
  %2103 = vmatmul.mubr.f32.gmra.mrb[0].mxu0 %v1975
  %v2104 = vpop.f32.mrb[0].mxu0
  %v2105 = vadd.f32 0.0, %v2104
  %v2106 = vpop.f32.mrb[0].mxu0
  %2107 = vmatprep.mubr.f32.mxu0 0.0
  %2108 = vmatmul.mubr.f32.gmra.mrb[0].mxu0 %v1978
  %v2109 = vpop.f32.mrb[0].mxu0
  %v2110 = vadd.f32 0.0, %v2109
  %v2111 = vpop.f32.mrb[0].mxu0
  %2112 = vmatprep.mubr.f32.mxu0 0.0
  %2113 = vmatmul.mubr.f32.gmra.mrb[0].mxu0 %v1981
  %v2114 = vpop.f32.mrb[0].mxu0
  %v2115 = vadd.f32 0.0, %v2114
  %v2116 = vpop.f32.mrb[0].mxu0
  %2117 = vmatprep.mubr.f32.mxu0 0.0
  %2118 = vmatmul.mubr.f32.gmra.mrb[0].mxu0 %v1984
  %v2119 = vpop.f32.mrb[0].mxu0
  %v2120 = vadd.f32 0.0, %v2119
  %v2121 = vpop.f32.mrb[0].mxu0
  %2122 = vmatprep.mubr.f32.mxu0 0.0
  %2123 = vmatmul.mubr.f32.gmra.mrb[0].mxu0 %v1987
  %v2124 = vpop.f32.mrb[0].mxu0
  %v2125 = vadd.f32 0.0, %v2124
  %v2126 = vpop.f32.mrb[0].mxu0
  %2127 = vmatprep.mubr.f32.mxu0 0.0
  %2128 = vmatmul.mubr.f32.gmra.mrb[0].mxu0 %v1990
  %v2129 = vpop.f32.mrb[0].mxu0
  %v2130 = vadd.f32 0.0, %v2129
  %v2131 = vpop.f32.mrb[0].mxu0
  %2132 = vmatprep.mubr.f32.mxu0 0.0
  %2133 = vmatmul.mubr.f32.gmra.mrb[0].mxu0 %v1993
  %v2134 = vpop.f32.mrb[0].mxu0
  %v2135 = vadd.f32 0.0, %v2134
  %v2136 = vpop.f32.mrb[0].mxu0
  %2137 = vmatprep.mubr.f32.mxu0 0.0
  %2138 = vmatmul.mubr.f32.gmra.mrb[0].mxu0 %v1996
  %v2139 = vpop.f32.mrb[0].mxu0
  %v2140 = vadd.f32 0.0, %v2139
  %v2141 = vpop.f32.mrb[0].mxu0
  %2142 = vdwg.mxu0
  %v2144 = vsel %vm1496, %v1444, 0
  %v2147 = vsel %vm1496, %v1445, 0
  %v2150 = vsel %vm1496, %v1446, 0
  %v2153 = vsel %vm1496, %v1447, 0
  %v2156 = vsel %vm1496, %v1448, 0
  %v2159 = vsel %vm1496, %v1449, 0
  %v2162 = vsel %vm1496, %v1450, 0
  %v2165 = vsel %vm1496, %v1451, 0
  %v2168 = vsel %vm1496, %v1452, 0
  %v2171 = vsel %vm1496, %v1453, 0
  %v2174 = vsel %vm1496, %v1454, 0
  %v2177 = vsel %vm1496, %v1455, 0
  %v2180 = vsel %vm1496, %v1456, 0
  %v2183 = vsel %vm1496, %v1457, 0
  %v2186 = vsel %vm1496, %v1458, 0
  %v2189 = vsel %vm1496, %v1459, 0
  %2191 = vmatprep.subr.mxu0 0.0
  %2192 = vmatpush1.msra.mxu0 %v1942
  %2193 = vmatprep.subr.mxu0 0.0
  %2194 = vmatpush1.msra.mxu0 %v1947
  %2195 = vmatprep.subr.mxu0 0.0
  %2196 = vmatpush1.msra.mxu0 0.0
  %2197 = vmatprep.subr.mxu0 0.0
  %2198 = vmatpush1.msra.mxu0 0.0
  %2199 = vmatprep.subr.mxu0 0.0
  %2200 = vmatpush1.msra.mxu0 0.0
  %2201 = vmatprep.subr.mxu0 0.0
  %2202 = vmatpush1.msra.mxu0 0.0
  %2203 = vmatprep.subr.mxu0 0.0
  %2204 = vmatpush1.msra.mxu0 0.0
  %2205 = vmatprep.subr.mxu0 0.0
  %2206 = vmatpush1.msra.mxu0 0.0
  %2207 = vmatprep.subr.mxu0 0.0
  %2208 = vmatpush1.msra.mxu0 0.0
  %2209 = vmatprep.subr.mxu0 0.0
  %2210 = vmatpush1.msra.mxu0 0.0
  %2211 = vmatprep.subr.mxu0 0.0
  %2212 = vmatpush1.msra.mxu0 0.0
  %2213 = vmatprep.subr.mxu0 0.0
  %2214 = vmatpush1.msra.mxu0 0.0
  %2215 = vmatprep.subr.mxu0 0.0
  %2216 = vmatpush1.msra.mxu0 0.0
  %2217 = vmatprep.subr.mxu0 0.0
  %2218 = vmatpush1.msra.mxu0 0.0
  %2219 = vmatprep.subr.mxu0 0.0
  %2220 = vmatpush1.msra.mxu0 0.0
  %2221 = vmatprep.subr.mxu0 0.0
  %2222 = vmatpush1.msra.mxu0 0.0
  %2223 = vmatprep.subr.mxu0 0.0
  %2224 = vmatpush1.msra.mxu0 0.0
  %2225 = vmatprep.subr.mxu0 0.0
  %2226 = vmatpush1.msra.mxu0 0.0
  %2227 = vmatprep.subr.mxu0 0.0
  %2228 = vmatpush1.msra.mxu0 0.0
  %2229 = vmatprep.subr.mxu0 0.0
  %2230 = vmatpush1.msra.mxu0 0.0
  %2231 = vmatprep.subr.mxu0 0.0
  %2232 = vmatpush1.msra.mxu0 0.0
  %2233 = vmatprep.subr.mxu0 0.0
  %2234 = vmatpush1.msra.mxu0 0.0
  %2235 = vmatprep.subr.mxu0 0.0
  %2236 = vmatpush1.msra.mxu0 0.0
  %2237 = vmatprep.subr.mxu0 0.0
  %2238 = vmatpush1.msra.mxu0 0.0
  %2239 = vmatprep.subr.mxu0 0.0
  %2240 = vmatpush1.msra.mxu0 0.0
  %2241 = vmatprep.subr.mxu0 0.0
  %2242 = vmatpush1.msra.mxu0 0.0
  %2243 = vmatprep.subr.mxu0 0.0
  %2244 = vmatpush1.msra.mxu0 0.0
  %2245 = vmatprep.subr.mxu0 0.0
  %2246 = vmatpush1.msra.mxu0 0.0
  %2247 = vmatprep.subr.mxu0 0.0
  %2248 = vmatpush1.msra.mxu0 0.0
  %2249 = vmatprep.subr.mxu0 0.0
  %2250 = vmatpush1.msra.mxu0 0.0
  %2251 = vmatprep.subr.mxu0 0.0
  %2252 = vmatpush1.msra.mxu0 0.0
  %2253 = vmatprep.subr.mxu0 0.0
  %2254 = vmatpush1.msra.mxu0 0.0
  %2255 = vmatprep.mubr.f32.mxu0 0.0
  %2256 = vmatmul.mubr.f32.gmra.mrb[0].mxu0 %v2144
  %v2257 = vpop.f32.mrb[0].mxu0
  %v2258 = vadd.f32 0.0, %v2257
  %v2259 = vpop.f32.mrb[0].mxu0
  %2260 = vmatprep.mubr.f32.mxu0 0.0
  %2261 = vmatmul.mubr.f32.gmra.mrb[0].mxu0 %v2147
  %v2262 = vpop.f32.mrb[0].mxu0
  %v2263 = vadd.f32 0.0, %v2262
  %v2264 = vpop.f32.mrb[0].mxu0
  %2265 = vmatprep.mubr.f32.mxu0 0.0
  %2266 = vmatmul.mubr.f32.gmra.mrb[0].mxu0 %v2150
  %v2267 = vpop.f32.mrb[0].mxu0
  %v2268 = vadd.f32 0.0, %v2267
  %v2269 = vpop.f32.mrb[0].mxu0
  %2270 = vmatprep.mubr.f32.mxu0 0.0
  %2271 = vmatmul.mubr.f32.gmra.mrb[0].mxu0 %v2153
  %v2272 = vpop.f32.mrb[0].mxu0
  %v2273 = vadd.f32 0.0, %v2272
  %v2274 = vpop.f32.mrb[0].mxu0
  %2275 = vmatprep.mubr.f32.mxu0 0.0
  %2276 = vmatmul.mubr.f32.gmra.mrb[0].mxu0 %v2156
  %v2277 = vpop.f32.mrb[0].mxu0
  %v2278 = vadd.f32 0.0, %v2277
  %v2279 = vpop.f32.mrb[0].mxu0
  %2280 = vmatprep.mubr.f32.mxu0 0.0
  %2281 = vmatmul.mubr.f32.gmra.mrb[0].mxu0 %v2159
  %v2282 = vpop.f32.mrb[0].mxu0
  %v2283 = vadd.f32 0.0, %v2282
  %v2284 = vpop.f32.mrb[0].mxu0
  %2285 = vmatprep.mubr.f32.mxu0 0.0
  %2286 = vmatmul.mubr.f32.gmra.mrb[0].mxu0 %v2162
  %v2287 = vpop.f32.mrb[0].mxu0
  %v2288 = vadd.f32 0.0, %v2287
  %v2289 = vpop.f32.mrb[0].mxu0
  %2290 = vmatprep.mubr.f32.mxu0 0.0
  %2291 = vmatmul.mubr.f32.gmra.mrb[0].mxu0 %v2165
  %v2292 = vpop.f32.mrb[0].mxu0
  %v2293 = vadd.f32 0.0, %v2292
  %v2294 = vpop.f32.mrb[0].mxu0
  %2295 = vmatprep.mubr.f32.mxu0 0.0
  %2296 = vmatmul.mubr.f32.gmra.mrb[0].mxu0 %v2168
  %v2297 = vpop.f32.mrb[0].mxu0
  %v2298 = vadd.f32 0.0, %v2297
  %v2299 = vpop.f32.mrb[0].mxu0
  %2300 = vmatprep.mubr.f32.mxu0 0.0
  %2301 = vmatmul.mubr.f32.gmra.mrb[0].mxu0 %v2171
  %v2302 = vpop.f32.mrb[0].mxu0
  %v2303 = vadd.f32 0.0, %v2302
  %v2304 = vpop.f32.mrb[0].mxu0
  %2305 = vmatprep.mubr.f32.mxu0 0.0
  %2306 = vmatmul.mubr.f32.gmra.mrb[0].mxu0 %v2174
  %v2307 = vpop.f32.mrb[0].mxu0
  %v2308 = vadd.f32 0.0, %v2307
  %v2309 = vpop.f32.mrb[0].mxu0
  %2310 = vmatprep.mubr.f32.mxu0 0.0
  %2311 = vmatmul.mubr.f32.gmra.mrb[0].mxu0 %v2177
  %v2312 = vpop.f32.mrb[0].mxu0
  %v2313 = vadd.f32 0.0, %v2312
  %v2314 = vpop.f32.mrb[0].mxu0
  %2315 = vmatprep.mubr.f32.mxu0 0.0
  %2316 = vmatmul.mubr.f32.gmra.mrb[0].mxu0 %v2180
  %v2317 = vpop.f32.mrb[0].mxu0
  %v2318 = vadd.f32 0.0, %v2317
  %v2319 = vpop.f32.mrb[0].mxu0
  %2320 = vmatprep.mubr.f32.mxu0 0.0
  %2321 = vmatmul.mubr.f32.gmra.mrb[0].mxu0 %v2183
  %v2322 = vpop.f32.mrb[0].mxu0
  %v2323 = vadd.f32 0.0, %v2322
  %v2324 = vpop.f32.mrb[0].mxu0
  %2325 = vmatprep.mubr.f32.mxu0 0.0
  %2326 = vmatmul.mubr.f32.gmra.mrb[0].mxu0 %v2186
  %v2327 = vpop.f32.mrb[0].mxu0
  %v2328 = vadd.f32 0.0, %v2327
  %v2329 = vpop.f32.mrb[0].mxu0
  %2330 = vmatprep.mubr.f32.mxu0 0.0
  %2331 = vmatmul.mubr.f32.gmra.mrb[0].mxu0 %v2189
  %v2332 = vpop.f32.mrb[0].mxu0
  %v2333 = vadd.f32 0.0, %v2332
  %v2334 = vpop.f32.mrb[0].mxu0
  %2335 = vdwg.mxu0
  %v2336 = vmul.f32 %v2258, %v2065
  %v2337 = vmul.f32 %v2263, %v2070
  %v2338 = vmul.f32 %v2268, %v2075
  %v2339 = vmul.f32 %v2273, %v2080
  %v2340 = vmul.f32 %v2278, %v2085
  %v2341 = vmul.f32 %v2283, %v2090
  %v2342 = vmul.f32 %v2288, %v2095
  %v2343 = vmul.f32 %v2293, %v2100
  %v2344 = vmul.f32 %v2298, %v2105
  %v2345 = vmul.f32 %v2303, %v2110
  %v2346 = vmul.f32 %v2308, %v2115
  %v2347 = vmul.f32 %v2313, %v2120
  %v2348 = vmul.f32 %v2318, %v2125
  %v2349 = vmul.f32 %v2323, %v2130
  %v2350 = vmul.f32 %v2328, %v2135
  %v2351 = vmul.f32 %v2333, %v2140
  %2368 = vrot.lane.b32.xlu0 %v2258, 112
  %v2369 = vpop.permute.xlu0 %2368
  %2370 = vrot.lane.b32.xlu0 %v2263, 112
  %v2371 = vpop.permute.xlu0 %2370
  %2372 = vrot.lane.b32.xlu0 %v2268, 112
  %v2373 = vpop.permute.xlu0 %2372
  %2374 = vrot.lane.b32.xlu0 %v2273, 112
  %v2375 = vpop.permute.xlu0 %2374
  %2376 = vrot.lane.b32.xlu0 %v2278, 112
  %v2377 = vpop.permute.xlu0 %2376
  %2378 = vrot.lane.b32.xlu0 %v2283, 112
  %v2379 = vpop.permute.xlu0 %2378
  %2380 = vrot.lane.b32.xlu0 %v2288, 112
  %v2381 = vpop.permute.xlu0 %2380
  %2382 = vrot.lane.b32.xlu0 %v2293, 112
  %v2383 = vpop.permute.xlu0 %2382
  %2384 = vrot.lane.b32.xlu0 %v2298, 112
  %v2385 = vpop.permute.xlu0 %2384
  %2386 = vrot.lane.b32.xlu0 %v2303, 112
  %v2387 = vpop.permute.xlu0 %2386
  %2388 = vrot.lane.b32.xlu0 %v2308, 112
  %v2389 = vpop.permute.xlu0 %2388
  %2390 = vrot.lane.b32.xlu0 %v2313, 112
  %v2391 = vpop.permute.xlu0 %2390
  %2392 = vrot.lane.b32.xlu0 %v2318, 112
  %v2393 = vpop.permute.xlu0 %2392
  %2394 = vrot.lane.b32.xlu0 %v2323, 112
  %v2395 = vpop.permute.xlu0 %2394
  %2396 = vrot.lane.b32.xlu0 %v2328, 112
  %v2397 = vpop.permute.xlu0 %2396
  %2398 = vrot.lane.b32.xlu0 %v2333, 112
  %v2399 = vpop.permute.xlu0 %2398
  %v2416 = vadd.f32 %v2336, %v2369
  %v2417 = vadd.f32 %v2337, %v2371
  %v2418 = vadd.f32 %v2338, %v2373
  %v2419 = vadd.f32 %v2339, %v2375
  %v2420 = vadd.f32 %v2340, %v2377
  %v2421 = vadd.f32 %v2341, %v2379
  %v2422 = vadd.f32 %v2342, %v2381
  %v2423 = vadd.f32 %v2343, %v2383
  %v2424 = vadd.f32 %v2344, %v2385
  %v2425 = vadd.f32 %v2345, %v2387
  %v2426 = vadd.f32 %v2346, %v2389
  %v2427 = vadd.f32 %v2347, %v2391
  %v2428 = vadd.f32 %v2348, %v2393
  %v2429 = vadd.f32 %v2349, %v2395
  %v2430 = vadd.f32 %v2350, %v2397
  %v2431 = vadd.f32 %v2351, %v2399
  %v2432 = vld [vmem:[%s16] sm:$0xff]
  %v2433 = vld [vmem:[%s16 + $0x8] sm:$0xff]
  %v2434 = vld [vmem:[%s16 + $0x10] sm:$0xff]
  %v2435 = vld [vmem:[%s16 + $0x18] sm:$0xff]
  %v2436 = vunpack.c.l.bf16 %v2432
  %v2437 = vunpack.c.h.bf16 %v2432
  %v2438 = vunpack.c.l.bf16 %v2433
  %v2439 = vunpack.c.h.bf16 %v2433
  %v2440 = vunpack.c.l.bf16 %v2434
  %v2441 = vunpack.c.h.bf16 %v2434
  %v2442 = vunpack.c.l.bf16 %v2435
  %v2443 = vunpack.c.h.bf16 %v2435
  %v2444 = vld [vmem:[%s17] sm:$0xf]
  %v2446 = vlaneseq
  %v2447 = vshrl.u32 %v2446, 7
  %v2448 = vsub.s32 0, %v2447
  %v2449 = vrot.slane %v2444, %v2448
  %v2450 = vlaneseq
  %v2451 = vshrl.u32 %v2450, 7
  %v2452 = vsub.s32 1, %v2451
  %v2453 = vrot.slane %v2444, %v2452
  %v2454 = vlaneseq
  %v2455 = vshrl.u32 %v2454, 7
  %v2456 = vsub.s32 2, %v2455
  %v2457 = vrot.slane %v2444, %v2456
  %v2458 = vlaneseq
  %v2459 = vshrl.u32 %v2458, 7
  %v2460 = vsub.s32 3, %v2459
  %v2461 = vrot.slane %v2444, %v2460
  %v2467 = vsel %vm1496, %v2416, 0
  %v2470 = vsel %vm1496, %v2417, 0
  %v2473 = vsel %vm1496, %v2418, 0
  %v2476 = vsel %vm1496, %v2419, 0
  %v2479 = vsel %vm1496, %v2420, 0
  %v2482 = vsel %vm1496, %v2421, 0
  %v2485 = vsel %vm1496, %v2422, 0
  %v2488 = vsel %vm1496, %v2423, 0
  %v2491 = vsel %vm1496, %v2424, 0
  %v2494 = vsel %vm1496, %v2425, 0
  %v2497 = vsel %vm1496, %v2426, 0
  %v2500 = vsel %vm1496, %v2427, 0
  %v2503 = vsel %vm1496, %v2428, 0
  %v2506 = vsel %vm1496, %v2429, 0
  %v2509 = vsel %vm1496, %v2430, 0
  %v2512 = vsel %vm1496, %v2431, 0
  %2514 = vmatprep.subr.mxu0 %v2437
  %2515 = vmatpush1.msra.mxu0 %v2436
  %2516 = vmatprep.subr.mxu0 %v2441
  %2517 = vmatpush1.msra.mxu0 %v2440
  %2518 = vmatprep.subr.mxu0 0.0
  %2519 = vmatpush1.msra.mxu0 0.0
  %2520 = vmatprep.subr.mxu0 0.0
  %2521 = vmatpush1.msra.mxu0 0.0
  %2522 = vmatprep.subr.mxu0 0.0
  %2523 = vmatpush1.msra.mxu0 0.0
  %2524 = vmatprep.subr.mxu0 0.0
  %2525 = vmatpush1.msra.mxu0 0.0
  %2526 = vmatprep.subr.mxu0 0.0
  %2527 = vmatpush1.msra.mxu0 0.0
  %2528 = vmatprep.subr.mxu0 0.0
  %2529 = vmatpush1.msra.mxu0 0.0
  %2530 = vmatprep.subr.mxu0 0.0
  %2531 = vmatpush1.msra.mxu0 0.0
  %2532 = vmatprep.subr.mxu0 0.0
  %2533 = vmatpush1.msra.mxu0 0.0
  %2534 = vmatprep.subr.mxu0 0.0
  %2535 = vmatpush1.msra.mxu0 0.0
  %2536 = vmatprep.subr.mxu0 0.0
  %2537 = vmatpush1.msra.mxu0 0.0
  %2538 = vmatprep.subr.mxu0 0.0
  %2539 = vmatpush1.msra.mxu0 0.0
  %2540 = vmatprep.subr.mxu0 0.0
  %2541 = vmatpush1.msra.mxu0 0.0
  %2542 = vmatprep.subr.mxu0 0.0
  %2543 = vmatpush1.msra.mxu0 0.0
  %2544 = vmatprep.subr.mxu0 0.0
  %2545 = vmatpush1.msra.mxu0 0.0
  %2546 = vmatprep.subr.mxu0 0.0
  %2547 = vmatpush1.msra.mxu0 0.0
  %2548 = vmatprep.subr.mxu0 0.0
  %2549 = vmatpush1.msra.mxu0 0.0
  %2550 = vmatprep.subr.mxu0 0.0
  %2551 = vmatpush1.msra.mxu0 0.0
  %2552 = vmatprep.subr.mxu0 0.0
  %2553 = vmatpush1.msra.mxu0 0.0
  %2554 = vmatprep.subr.mxu0 0.0
  %2555 = vmatpush1.msra.mxu0 0.0
  %2556 = vmatprep.subr.mxu0 0.0
  %2557 = vmatpush1.msra.mxu0 0.0
  %2558 = vmatprep.subr.mxu0 0.0
  %2559 = vmatpush1.msra.mxu0 0.0
  %2560 = vmatprep.subr.mxu0 0.0
  %2561 = vmatpush1.msra.mxu0 0.0
  %2562 = vmatprep.subr.mxu0 0.0
  %2563 = vmatpush1.msra.mxu0 0.0
  %2564 = vmatprep.subr.mxu0 0.0
  %2565 = vmatpush1.msra.mxu0 0.0
  %2566 = vmatprep.subr.mxu0 0.0
  %2567 = vmatpush1.msra.mxu0 0.0
  %2568 = vmatprep.subr.mxu0 0.0
  %2569 = vmatpush1.msra.mxu0 0.0
  %2570 = vmatprep.subr.mxu0 0.0
  %2571 = vmatpush1.msra.mxu0 0.0
  %2572 = vmatprep.subr.mxu0 0.0
  %2573 = vmatpush1.msra.mxu0 0.0
  %2574 = vmatprep.subr.mxu0 0.0
  %2575 = vmatpush1.msra.mxu0 0.0
  %2576 = vmatprep.subr.mxu0 0.0
  %2577 = vmatpush1.msra.mxu0 0.0
  %2578 = vmatprep.mubr.f32.mxu0 0.0
  %2579 = vmatmul.mubr.f32.gmra.mrb[0].mxu0 %v2467
  %v2580 = vpop.f32.mrb[0].mxu0
  %v2581 = vadd.f32 %v2449, %v2580
  %v2582 = vpop.f32.mrb[0].mxu0
  %v2583 = vadd.f32 %v2453, %v2582
  %2584 = vmatprep.mubr.f32.mxu0 0.0
  %2585 = vmatmul.mubr.f32.gmra.mrb[0].mxu0 %v2470
  %v2586 = vpop.f32.mrb[0].mxu0
  %v2587 = vadd.f32 %v2449, %v2586
  %v2588 = vpop.f32.mrb[0].mxu0
  %v2589 = vadd.f32 %v2453, %v2588
  %2590 = vmatprep.mubr.f32.mxu0 0.0
  %2591 = vmatmul.mubr.f32.gmra.mrb[0].mxu0 %v2473
  %v2592 = vpop.f32.mrb[0].mxu0
  %v2593 = vadd.f32 %v2449, %v2592
  %v2594 = vpop.f32.mrb[0].mxu0
  %v2595 = vadd.f32 %v2453, %v2594
  %2596 = vmatprep.mubr.f32.mxu0 0.0
  %2597 = vmatmul.mubr.f32.gmra.mrb[0].mxu0 %v2476
  %v2598 = vpop.f32.mrb[0].mxu0
  %v2599 = vadd.f32 %v2449, %v2598
  %v2600 = vpop.f32.mrb[0].mxu0
  %v2601 = vadd.f32 %v2453, %v2600
  %2602 = vmatprep.mubr.f32.mxu0 0.0
  %2603 = vmatmul.mubr.f32.gmra.mrb[0].mxu0 %v2479
  %v2604 = vpop.f32.mrb[0].mxu0
  %v2605 = vadd.f32 %v2449, %v2604
  %v2606 = vpop.f32.mrb[0].mxu0
  %v2607 = vadd.f32 %v2453, %v2606
  %2608 = vmatprep.mubr.f32.mxu0 0.0
  %2609 = vmatmul.mubr.f32.gmra.mrb[0].mxu0 %v2482
  %v2610 = vpop.f32.mrb[0].mxu0
  %v2611 = vadd.f32 %v2449, %v2610
  %v2612 = vpop.f32.mrb[0].mxu0
  %v2613 = vadd.f32 %v2453, %v2612
  %2614 = vmatprep.mubr.f32.mxu0 0.0
  %2615 = vmatmul.mubr.f32.gmra.mrb[0].mxu0 %v2485
  %v2616 = vpop.f32.mrb[0].mxu0
  %v2617 = vadd.f32 %v2449, %v2616
  %v2618 = vpop.f32.mrb[0].mxu0
  %v2619 = vadd.f32 %v2453, %v2618
  %2620 = vmatprep.mubr.f32.mxu0 0.0
  %2621 = vmatmul.mubr.f32.gmra.mrb[0].mxu0 %v2488
  %v2622 = vpop.f32.mrb[0].mxu0
  %v2623 = vadd.f32 %v2449, %v2622
  %v2624 = vpop.f32.mrb[0].mxu0
  %v2625 = vadd.f32 %v2453, %v2624
  %2626 = vmatprep.mubr.f32.mxu0 0.0
  %2627 = vmatmul.mubr.f32.gmra.mrb[0].mxu0 %v2491
  %v2628 = vpop.f32.mrb[0].mxu0
  %v2629 = vadd.f32 %v2449, %v2628
  %v2630 = vpop.f32.mrb[0].mxu0
  %v2631 = vadd.f32 %v2453, %v2630
  %2632 = vmatprep.mubr.f32.mxu0 0.0
  %2633 = vmatmul.mubr.f32.gmra.mrb[0].mxu0 %v2494
  %v2634 = vpop.f32.mrb[0].mxu0
  %v2635 = vadd.f32 %v2449, %v2634
  %v2636 = vpop.f32.mrb[0].mxu0
  %v2637 = vadd.f32 %v2453, %v2636
  %2638 = vmatprep.mubr.f32.mxu0 0.0
  %2639 = vmatmul.mubr.f32.gmra.mrb[0].mxu0 %v2497
  %v2640 = vpop.f32.mrb[0].mxu0
  %v2641 = vadd.f32 %v2449, %v2640
  %v2642 = vpop.f32.mrb[0].mxu0
  %v2643 = vadd.f32 %v2453, %v2642
  %2644 = vmatprep.mubr.f32.mxu0 0.0
  %2645 = vmatmul.mubr.f32.gmra.mrb[0].mxu0 %v2500
  %v2646 = vpop.f32.mrb[0].mxu0
  %v2647 = vadd.f32 %v2449, %v2646
  %v2648 = vpop.f32.mrb[0].mxu0
  %v2649 = vadd.f32 %v2453, %v2648
  %2650 = vmatprep.mubr.f32.mxu0 0.0
  %2651 = vmatmul.mubr.f32.gmra.mrb[0].mxu0 %v2503
  %v2652 = vpop.f32.mrb[0].mxu0
  %v2653 = vadd.f32 %v2449, %v2652
  %v2654 = vpop.f32.mrb[0].mxu0
  %v2655 = vadd.f32 %v2453, %v2654
  %2656 = vmatprep.mubr.f32.mxu0 0.0
  %2657 = vmatmul.mubr.f32.gmra.mrb[0].mxu0 %v2506
  %v2658 = vpop.f32.mrb[0].mxu0
  %v2659 = vadd.f32 %v2449, %v2658
  %v2660 = vpop.f32.mrb[0].mxu0
  %v2661 = vadd.f32 %v2453, %v2660
  %2662 = vmatprep.mubr.f32.mxu0 0.0
  %2663 = vmatmul.mubr.f32.gmra.mrb[0].mxu0 %v2509
  %v2664 = vpop.f32.mrb[0].mxu0
  %v2665 = vadd.f32 %v2449, %v2664
  %v2666 = vpop.f32.mrb[0].mxu0
  %v2667 = vadd.f32 %v2453, %v2666
  %2668 = vmatprep.mubr.f32.mxu0 0.0
  %2669 = vmatmul.mubr.f32.gmra.mrb[0].mxu0 %v2512
  %v2670 = vpop.f32.mrb[0].mxu0
  %v2671 = vadd.f32 %v2449, %v2670
  %v2672 = vpop.f32.mrb[0].mxu0
  %v2673 = vadd.f32 %v2453, %v2672
  %2674 = vdwg.mxu0
  %2675 = vmatprep.subr.mxu0 %v2439
  %2676 = vmatpush1.msra.mxu0 %v2438
  %2677 = vmatprep.subr.mxu0 %v2443
  %2678 = vmatpush1.msra.mxu0 %v2442
  %2679 = vmatprep.subr.mxu0 0.0
  %2680 = vmatpush1.msra.mxu0 0.0
  %2681 = vmatprep.subr.mxu0 0.0
  %2682 = vmatpush1.msra.mxu0 0.0
  %2683 = vmatprep.subr.mxu0 0.0
  %2684 = vmatpush1.msra.mxu0 0.0
  %2685 = vmatprep.subr.mxu0 0.0
  %2686 = vmatpush1.msra.mxu0 0.0
  %2687 = vmatprep.subr.mxu0 0.0
  %2688 = vmatpush1.msra.mxu0 0.0
  %2689 = vmatprep.subr.mxu0 0.0
  %2690 = vmatpush1.msra.mxu0 0.0
  %2691 = vmatprep.subr.mxu0 0.0
  %2692 = vmatpush1.msra.mxu0 0.0
  %2693 = vmatprep.subr.mxu0 0.0
  %2694 = vmatpush1.msra.mxu0 0.0
  %2695 = vmatprep.subr.mxu0 0.0
  %2696 = vmatpush1.msra.mxu0 0.0
  %2697 = vmatprep.subr.mxu0 0.0
  %2698 = vmatpush1.msra.mxu0 0.0
  %2699 = vmatprep.subr.mxu0 0.0
  %2700 = vmatpush1.msra.mxu0 0.0
  %2701 = vmatprep.subr.mxu0 0.0
  %2702 = vmatpush1.msra.mxu0 0.0
  %2703 = vmatprep.subr.mxu0 0.0
  %2704 = vmatpush1.msra.mxu0 0.0
  %2705 = vmatprep.subr.mxu0 0.0
  %2706 = vmatpush1.msra.mxu0 0.0
  %2707 = vmatprep.subr.mxu0 0.0
  %2708 = vmatpush1.msra.mxu0 0.0
  %2709 = vmatprep.subr.mxu0 0.0
  %2710 = vmatpush1.msra.mxu0 0.0
  %2711 = vmatprep.subr.mxu0 0.0
  %2712 = vmatpush1.msra.mxu0 0.0
  %2713 = vmatprep.subr.mxu0 0.0
  %2714 = vmatpush1.msra.mxu0 0.0
  %2715 = vmatprep.subr.mxu0 0.0
  %2716 = vmatpush1.msra.mxu0 0.0
  %2717 = vmatprep.subr.mxu0 0.0
  %2718 = vmatpush1.msra.mxu0 0.0
  %2719 = vmatprep.subr.mxu0 0.0
  %2720 = vmatpush1.msra.mxu0 0.0
  %2721 = vmatprep.subr.mxu0 0.0
  %2722 = vmatpush1.msra.mxu0 0.0
  %2723 = vmatprep.subr.mxu0 0.0
  %2724 = vmatpush1.msra.mxu0 0.0
  %2725 = vmatprep.subr.mxu0 0.0
  %2726 = vmatpush1.msra.mxu0 0.0
  %2727 = vmatprep.subr.mxu0 0.0
  %2728 = vmatpush1.msra.mxu0 0.0
  %2729 = vmatprep.subr.mxu0 0.0
  %2730 = vmatpush1.msra.mxu0 0.0
  %2731 = vmatprep.subr.mxu0 0.0
  %2732 = vmatpush1.msra.mxu0 0.0
  %2733 = vmatprep.subr.mxu0 0.0
  %2734 = vmatpush1.msra.mxu0 0.0
  %2735 = vmatprep.subr.mxu0 0.0
  %2736 = vmatpush1.msra.mxu0 0.0
  %2737 = vmatprep.subr.mxu0 0.0
  %2738 = vmatpush1.msra.mxu0 0.0
  %2739 = vmatprep.mubr.f32.mxu0 0.0
  %2740 = vmatmul.mubr.f32.gmra.mrb[0].mxu0 %v2467
  %v2741 = vpop.f32.mrb[0].mxu0
  %v2742 = vadd.f32 %v2457, %v2741
  %v2743 = vpop.f32.mrb[0].mxu0
  %v2744 = vadd.f32 %v2461, %v2743
  %2745 = vmatprep.mubr.f32.mxu0 0.0
  %2746 = vmatmul.mubr.f32.gmra.mrb[0].mxu0 %v2470
  %v2747 = vpop.f32.mrb[0].mxu0
  %v2748 = vadd.f32 %v2457, %v2747
  %v2749 = vpop.f32.mrb[0].mxu0
  %v2750 = vadd.f32 %v2461, %v2749
  %2751 = vmatprep.mubr.f32.mxu0 0.0
  %2752 = vmatmul.mubr.f32.gmra.mrb[0].mxu0 %v2473
  %v2753 = vpop.f32.mrb[0].mxu0
  %v2754 = vadd.f32 %v2457, %v2753
  %v2755 = vpop.f32.mrb[0].mxu0
  %v2756 = vadd.f32 %v2461, %v2755
  %2757 = vmatprep.mubr.f32.mxu0 0.0
  %2758 = vmatmul.mubr.f32.gmra.mrb[0].mxu0 %v2476
  %v2759 = vpop.f32.mrb[0].mxu0
  %v2760 = vadd.f32 %v2457, %v2759
  %v2761 = vpop.f32.mrb[0].mxu0
  %v2762 = vadd.f32 %v2461, %v2761
  %2763 = vmatprep.mubr.f32.mxu0 0.0
  %2764 = vmatmul.mubr.f32.gmra.mrb[0].mxu0 %v2479
  %v2765 = vpop.f32.mrb[0].mxu0
  %v2766 = vadd.f32 %v2457, %v2765
  %v2767 = vpop.f32.mrb[0].mxu0
  %v2768 = vadd.f32 %v2461, %v2767
  %2769 = vmatprep.mubr.f32.mxu0 0.0
  %2770 = vmatmul.mubr.f32.gmra.mrb[0].mxu0 %v2482
  %v2771 = vpop.f32.mrb[0].mxu0
  %v2772 = vadd.f32 %v2457, %v2771
  %v2773 = vpop.f32.mrb[0].mxu0
  %v2774 = vadd.f32 %v2461, %v2773
  %2775 = vmatprep.mubr.f32.mxu0 0.0
  %2776 = vmatmul.mubr.f32.gmra.mrb[0].mxu0 %v2485
  %v2777 = vpop.f32.mrb[0].mxu0
  %v2778 = vadd.f32 %v2457, %v2777
  %v2779 = vpop.f32.mrb[0].mxu0
  %v2780 = vadd.f32 %v2461, %v2779
  %2781 = vmatprep.mubr.f32.mxu0 0.0
  %2782 = vmatmul.mubr.f32.gmra.mrb[0].mxu0 %v2488
  %v2783 = vpop.f32.mrb[0].mxu0
  %v2784 = vadd.f32 %v2457, %v2783
  %v2785 = vpop.f32.mrb[0].mxu0
  %v2786 = vadd.f32 %v2461, %v2785
  %2787 = vmatprep.mubr.f32.mxu0 0.0
  %2788 = vmatmul.mubr.f32.gmra.mrb[0].mxu0 %v2491
  %v2789 = vpop.f32.mrb[0].mxu0
  %v2790 = vadd.f32 %v2457, %v2789
  %v2791 = vpop.f32.mrb[0].mxu0
  %v2792 = vadd.f32 %v2461, %v2791
  %2793 = vmatprep.mubr.f32.mxu0 0.0
  %2794 = vmatmul.mubr.f32.gmra.mrb[0].mxu0 %v2494
  %v2795 = vpop.f32.mrb[0].mxu0
  %v2796 = vadd.f32 %v2457, %v2795
  %v2797 = vpop.f32.mrb[0].mxu0
  %v2798 = vadd.f32 %v2461, %v2797
  %2799 = vmatprep.mubr.f32.mxu0 0.0
  %2800 = vmatmul.mubr.f32.gmra.mrb[0].mxu0 %v2497
  %v2801 = vpop.f32.mrb[0].mxu0
  %v2802 = vadd.f32 %v2457, %v2801
  %v2803 = vpop.f32.mrb[0].mxu0
  %v2804 = vadd.f32 %v2461, %v2803
  %2805 = vmatprep.mubr.f32.mxu0 0.0
  %2806 = vmatmul.mubr.f32.gmra.mrb[0].mxu0 %v2500
  %v2807 = vpop.f32.mrb[0].mxu0
  %v2808 = vadd.f32 %v2457, %v2807
  %v2809 = vpop.f32.mrb[0].mxu0
  %v2810 = vadd.f32 %v2461, %v2809
  %2811 = vmatprep.mubr.f32.mxu0 0.0
  %2812 = vmatmul.mubr.f32.gmra.mrb[0].mxu0 %v2503
  %v2813 = vpop.f32.mrb[0].mxu0
  %v2814 = vadd.f32 %v2457, %v2813
  %v2815 = vpop.f32.mrb[0].mxu0
  %v2816 = vadd.f32 %v2461, %v2815
  %2817 = vmatprep.mubr.f32.mxu0 0.0
  %2818 = vmatmul.mubr.f32.gmra.mrb[0].mxu0 %v2506
  %v2819 = vpop.f32.mrb[0].mxu0
  %v2820 = vadd.f32 %v2457, %v2819
  %v2821 = vpop.f32.mrb[0].mxu0
  %v2822 = vadd.f32 %v2461, %v2821
  %2823 = vmatprep.mubr.f32.mxu0 0.0
  %2824 = vmatmul.mubr.f32.gmra.mrb[0].mxu0 %v2509
  %v2825 = vpop.f32.mrb[0].mxu0
  %v2826 = vadd.f32 %v2457, %v2825
  %v2827 = vpop.f32.mrb[0].mxu0
  %v2828 = vadd.f32 %v2461, %v2827
  %2829 = vmatprep.mubr.f32.mxu0 0.0
  %2830 = vmatmul.mubr.f32.gmra.mrb[0].mxu0 %v2512
  %v2831 = vpop.f32.mrb[0].mxu0
  %v2832 = vadd.f32 %v2457, %v2831
  %v2833 = vpop.f32.mrb[0].mxu0
  %v2834 = vadd.f32 %v2461, %v2833
  %2835 = vdwg.mxu0
  %v2836 = vmax.f32 %v2581, 0.0
  %v2837 = vmax.f32 %v2583, 0.0
  %v2838 = vmax.f32 %v2742, 0.0
  %v2839 = vmax.f32 %v2744, 0.0
  %v2840 = vmax.f32 %v2587, 0.0
  %v2841 = vmax.f32 %v2589, 0.0
  %v2842 = vmax.f32 %v2748, 0.0
  %v2843 = vmax.f32 %v2750, 0.0
  %v2844 = vmax.f32 %v2593, 0.0
  %v2845 = vmax.f32 %v2595, 0.0
  %v2846 = vmax.f32 %v2754, 0.0
  %v2847 = vmax.f32 %v2756, 0.0
  %v2848 = vmax.f32 %v2599, 0.0
  %v2849 = vmax.f32 %v2601, 0.0
  %v2850 = vmax.f32 %v2760, 0.0
  %v2851 = vmax.f32 %v2762, 0.0
  %v2852 = vmax.f32 %v2605, 0.0
  %v2853 = vmax.f32 %v2607, 0.0
  %v2854 = vmax.f32 %v2766, 0.0
  %v2855 = vmax.f32 %v2768, 0.0
  %v2856 = vmax.f32 %v2611, 0.0
  %v2857 = vmax.f32 %v2613, 0.0
  %v2858 = vmax.f32 %v2772, 0.0
  %v2859 = vmax.f32 %v2774, 0.0
  %v2860 = vmax.f32 %v2617, 0.0
  %v2861 = vmax.f32 %v2619, 0.0
  %v2862 = vmax.f32 %v2778, 0.0
  %v2863 = vmax.f32 %v2780, 0.0
  %v2864 = vmax.f32 %v2623, 0.0
  %v2865 = vmax.f32 %v2625, 0.0
  %v2866 = vmax.f32 %v2784, 0.0
  %v2867 = vmax.f32 %v2786, 0.0
  %v2868 = vmax.f32 %v2629, 0.0
  %v2869 = vmax.f32 %v2631, 0.0
  %v2870 = vmax.f32 %v2790, 0.0
  %v2871 = vmax.f32 %v2792, 0.0
  %v2872 = vmax.f32 %v2635, 0.0
  %v2873 = vmax.f32 %v2637, 0.0
  %v2874 = vmax.f32 %v2796, 0.0
  %v2875 = vmax.f32 %v2798, 0.0
  %v2876 = vmax.f32 %v2641, 0.0
  %v2877 = vmax.f32 %v2643, 0.0
  %v2878 = vmax.f32 %v2802, 0.0
  %v2879 = vmax.f32 %v2804, 0.0
  %v2880 = vmax.f32 %v2647, 0.0
  %v2881 = vmax.f32 %v2649, 0.0
  %v2882 = vmax.f32 %v2808, 0.0
  %v2883 = vmax.f32 %v2810, 0.0
  %v2884 = vmax.f32 %v2653, 0.0
  %v2885 = vmax.f32 %v2655, 0.0
  %v2886 = vmax.f32 %v2814, 0.0
  %v2887 = vmax.f32 %v2816, 0.0
  %v2888 = vmax.f32 %v2659, 0.0
  %v2889 = vmax.f32 %v2661, 0.0
  %v2890 = vmax.f32 %v2820, 0.0
  %v2891 = vmax.f32 %v2822, 0.0
  %v2892 = vmax.f32 %v2665, 0.0
  %v2893 = vmax.f32 %v2667, 0.0
  %v2894 = vmax.f32 %v2826, 0.0
  %v2895 = vmax.f32 %v2828, 0.0
  %v2896 = vmax.f32 %v2671, 0.0
  %v2897 = vmax.f32 %v2673, 0.0
  %v2898 = vmax.f32 %v2832, 0.0
  %v2899 = vmax.f32 %v2834, 0.0
  %v2900 = vld [vmem:[%s18] sm:$0xf]
  %v2901 = vld [vmem:[%s18 + $0x4] sm:$0xf]
  %v2902 = vld [vmem:[%s18 + $0x8] sm:$0xf]
  %v2903 = vld [vmem:[%s18 + $0xc] sm:$0xf]
  %v2904 = vld [vmem:[%s18 + $0x10] sm:$0xf]
  %v2905 = vld [vmem:[%s18 + $0x14] sm:$0xf]
  %v2906 = vld [vmem:[%s18 + $0x18] sm:$0xf]
  %v2907 = vld [vmem:[%s18 + $0x1c] sm:$0xf]
  %v2908 = vld [vmem:[%s18 + $0x20] sm:$0xf]
  %v2909 = vld [vmem:[%s18 + $0x24] sm:$0xf]
  %v2910 = vld [vmem:[%s18 + $0x28] sm:$0xf]
  %v2911 = vld [vmem:[%s18 + $0x2c] sm:$0xf]
  %v2912 = vld [vmem:[%s18 + $0x30] sm:$0xf]
  %v2913 = vld [vmem:[%s18 + $0x34] sm:$0xf]
  %v2914 = vld [vmem:[%s18 + $0x38] sm:$0xf]
  %v2915 = vld [vmem:[%s18 + $0x3c] sm:$0xf]
  %v2916 = vld [vmem:[%s18 + $0x40] sm:$0xf]
  %v2917 = vld [vmem:[%s18 + $0x44] sm:$0xf]
  %v2918 = vld [vmem:[%s18 + $0x48] sm:$0xf]
  %v2919 = vld [vmem:[%s18 + $0x4c] sm:$0xf]
  %v2920 = vld [vmem:[%s18 + $0x50] sm:$0xf]
  %v2921 = vld [vmem:[%s18 + $0x54] sm:$0xf]
  %v2922 = vld [vmem:[%s18 + $0x58] sm:$0xf]
  %v2923 = vld [vmem:[%s18 + $0x5c] sm:$0xf]
  %v2924 = vld [vmem:[%s18 + $0x60] sm:$0xf]
  %v2925 = vld [vmem:[%s18 + $0x64] sm:$0xf]
  %v2926 = vld [vmem:[%s18 + $0x68] sm:$0xf]
  %v2927 = vld [vmem:[%s18 + $0x6c] sm:$0xf]
  %v2928 = vld [vmem:[%s18 + $0x70] sm:$0xf]
  %v2929 = vld [vmem:[%s18 + $0x74] sm:$0xf]
  %v2930 = vld [vmem:[%s18 + $0x78] sm:$0xf]
  %v2931 = vld [vmem:[%s18 + $0x7c] sm:$0xf]
  %v2932 = vld [vmem:[%s18 + $0x80] sm:$0xf]
  %v2933 = vld [vmem:[%s18 + $0x84] sm:$0xf]
  %v2934 = vld [vmem:[%s18 + $0x88] sm:$0xf]
  %v2935 = vld [vmem:[%s18 + $0x8c] sm:$0xf]
  %v2936 = vld [vmem:[%s18 + $0x90] sm:$0xf]
  %v2937 = vld [vmem:[%s18 + $0x94] sm:$0xf]
  %v2938 = vld [vmem:[%s18 + $0x98] sm:$0xf]
  %v2939 = vld [vmem:[%s18 + $0x9c] sm:$0xf]
  %v2940 = vld [vmem:[%s18 + $0xa0] sm:$0xf]
  %v2941 = vld [vmem:[%s18 + $0xa4] sm:$0xf]
  %v2942 = vld [vmem:[%s18 + $0xa8] sm:$0xf]
  %v2943 = vld [vmem:[%s18 + $0xac] sm:$0xf]
  %v2944 = vld [vmem:[%s18 + $0xb0] sm:$0xf]
  %v2945 = vld [vmem:[%s18 + $0xb4] sm:$0xf]
  %v2946 = vld [vmem:[%s18 + $0xb8] sm:$0xf]
  %v2947 = vld [vmem:[%s18 + $0xbc] sm:$0xf]
  %v2948 = vld [vmem:[%s18 + $0xc0] sm:$0xf]
  %v2949 = vld [vmem:[%s18 + $0xc4] sm:$0xf]
  %v2950 = vld [vmem:[%s18 + $0xc8] sm:$0xf]
  %v2951 = vld [vmem:[%s18 + $0xcc] sm:$0xf]
  %v2952 = vld [vmem:[%s18 + $0xd0] sm:$0xf]
  %v2953 = vld [vmem:[%s18 + $0xd4] sm:$0xf]
  %v2954 = vld [vmem:[%s18 + $0xd8] sm:$0xf]
  %v2955 = vld [vmem:[%s18 + $0xdc] sm:$0xf]
  %v2956 = vld [vmem:[%s18 + $0xe0] sm:$0xf]
  %v2957 = vld [vmem:[%s18 + $0xe4] sm:$0xf]
  %v2958 = vld [vmem:[%s18 + $0xe8] sm:$0xf]
  %v2959 = vld [vmem:[%s18 + $0xec] sm:$0xf]
  %v2960 = vld [vmem:[%s18 + $0xf0] sm:$0xf]
  %v2961 = vld [vmem:[%s18 + $0xf4] sm:$0xf]
  %v2962 = vld [vmem:[%s18 + $0xf8] sm:$0xf]
  %v2963 = vld [vmem:[%s18 + $0xfc] sm:$0xf]
  %v2964 = vunpack.c.l.bf16 %v2900
  %v2965 = vunpack.c.l.bf16 %v2901
  %v2966 = vunpack.c.l.bf16 %v2902
  %v2967 = vunpack.c.l.bf16 %v2903
  %v2968 = vunpack.c.l.bf16 %v2904
  %v2969 = vunpack.c.l.bf16 %v2905
  %v2970 = vunpack.c.l.bf16 %v2906
  %v2971 = vunpack.c.l.bf16 %v2907
  %v2972 = vunpack.c.l.bf16 %v2908
  %v2973 = vunpack.c.l.bf16 %v2909
  %v2974 = vunpack.c.l.bf16 %v2910
  %v2975 = vunpack.c.l.bf16 %v2911
  %v2976 = vunpack.c.l.bf16 %v2912
  %v2977 = vunpack.c.l.bf16 %v2913
  %v2978 = vunpack.c.l.bf16 %v2914
  %v2979 = vunpack.c.l.bf16 %v2915
  %v2980 = vunpack.c.l.bf16 %v2916
  %v2981 = vunpack.c.l.bf16 %v2917
  %v2982 = vunpack.c.l.bf16 %v2918
  %v2983 = vunpack.c.l.bf16 %v2919
  %v2984 = vunpack.c.l.bf16 %v2920
  %v2985 = vunpack.c.l.bf16 %v2921
  %v2986 = vunpack.c.l.bf16 %v2922
  %v2987 = vunpack.c.l.bf16 %v2923
  %v2988 = vunpack.c.l.bf16 %v2924
  %v2989 = vunpack.c.l.bf16 %v2925
  %v2990 = vunpack.c.l.bf16 %v2926
  %v2991 = vunpack.c.l.bf16 %v2927
  %v2992 = vunpack.c.l.bf16 %v2928
  %v2993 = vunpack.c.l.bf16 %v2929
  %v2994 = vunpack.c.l.bf16 %v2930
  %v2995 = vunpack.c.l.bf16 %v2931
  %v2996 = vunpack.c.l.bf16 %v2932
  %v2997 = vunpack.c.l.bf16 %v2933
  %v2998 = vunpack.c.l.bf16 %v2934
  %v2999 = vunpack.c.l.bf16 %v2935
  %v3000 = vunpack.c.l.bf16 %v2936
  %v3001 = vunpack.c.l.bf16 %v2937
  %v3002 = vunpack.c.l.bf16 %v2938
  %v3003 = vunpack.c.l.bf16 %v2939
  %v3004 = vunpack.c.l.bf16 %v2940
  %v3005 = vunpack.c.l.bf16 %v2941
  %v3006 = vunpack.c.l.bf16 %v2942
  %v3007 = vunpack.c.l.bf16 %v2943
  %v3008 = vunpack.c.l.bf16 %v2944
  %v3009 = vunpack.c.l.bf16 %v2945
  %v3010 = vunpack.c.l.bf16 %v2946
  %v3011 = vunpack.c.l.bf16 %v2947
  %v3012 = vunpack.c.l.bf16 %v2948
  %v3013 = vunpack.c.l.bf16 %v2949
  %v3014 = vunpack.c.l.bf16 %v2950
  %v3015 = vunpack.c.l.bf16 %v2951
  %v3016 = vunpack.c.l.bf16 %v2952
  %v3017 = vunpack.c.l.bf16 %v2953
  %v3018 = vunpack.c.l.bf16 %v2954
  %v3019 = vunpack.c.l.bf16 %v2955
  %v3020 = vunpack.c.l.bf16 %v2956
  %v3021 = vunpack.c.l.bf16 %v2957
  %v3022 = vunpack.c.l.bf16 %v2958
  %v3023 = vunpack.c.l.bf16 %v2959
  %v3024 = vunpack.c.l.bf16 %v2960
  %v3025 = vunpack.c.l.bf16 %v2961
  %v3026 = vunpack.c.l.bf16 %v2962
  %v3027 = vunpack.c.l.bf16 %v2963
  %v3028 = vld [vmem:[%s19] sm:$0x1]
  %v3030 = vlaneseq
  %v3031 = vshrl.u32 %v3030, 7
  %v3032 = vsub.s32 0, %v3031
  %v3033 = vrot.slane %v3028, %v3032
  %3035 = vmatprep.subr.mxu0 0.0
  %3036 = vmatpush1.msra.mxu0 %v2964
  %3037 = vmatprep.subr.mxu0 0.0
  %3038 = vmatpush1.msra.mxu0 %v2965
  %3039 = vmatprep.subr.mxu0 0.0
  %3040 = vmatpush1.msra.mxu0 %v2966
  %3041 = vmatprep.subr.mxu0 0.0
  %3042 = vmatpush1.msra.mxu0 %v2967
  %3043 = vmatprep.subr.mxu0 0.0
  %3044 = vmatpush1.msra.mxu0 %v2968
  %3045 = vmatprep.subr.mxu0 0.0
  %3046 = vmatpush1.msra.mxu0 %v2969
  %3047 = vmatprep.subr.mxu0 0.0
  %3048 = vmatpush1.msra.mxu0 %v2970
  %3049 = vmatprep.subr.mxu0 0.0
  %3050 = vmatpush1.msra.mxu0 %v2971
  %3051 = vmatprep.subr.mxu0 0.0
  %3052 = vmatpush1.msra.mxu0 %v2972
  %3053 = vmatprep.subr.mxu0 0.0
  %3054 = vmatpush1.msra.mxu0 %v2973
  %3055 = vmatprep.subr.mxu0 0.0
  %3056 = vmatpush1.msra.mxu0 %v2974
  %3057 = vmatprep.subr.mxu0 0.0
  %3058 = vmatpush1.msra.mxu0 %v2975
  %3059 = vmatprep.subr.mxu0 0.0
  %3060 = vmatpush1.msra.mxu0 %v2976
  %3061 = vmatprep.subr.mxu0 0.0
  %3062 = vmatpush1.msra.mxu0 %v2977
  %3063 = vmatprep.subr.mxu0 0.0
  %3064 = vmatpush1.msra.mxu0 %v2978
  %3065 = vmatprep.subr.mxu0 0.0
  %3066 = vmatpush1.msra.mxu0 %v2979
  %3067 = vmatprep.subr.mxu0 0.0
  %3068 = vmatpush1.msra.mxu0 %v2980
  %3069 = vmatprep.subr.mxu0 0.0
  %3070 = vmatpush1.msra.mxu0 %v2981
  %3071 = vmatprep.subr.mxu0 0.0
  %3072 = vmatpush1.msra.mxu0 %v2982
  %3073 = vmatprep.subr.mxu0 0.0
  %3074 = vmatpush1.msra.mxu0 %v2983
  %3075 = vmatprep.subr.mxu0 0.0
  %3076 = vmatpush1.msra.mxu0 %v2984
  %3077 = vmatprep.subr.mxu0 0.0
  %3078 = vmatpush1.msra.mxu0 %v2985
  %3079 = vmatprep.subr.mxu0 0.0
  %3080 = vmatpush1.msra.mxu0 %v2986
  %3081 = vmatprep.subr.mxu0 0.0
  %3082 = vmatpush1.msra.mxu0 %v2987
  %3083 = vmatprep.subr.mxu0 0.0
  %3084 = vmatpush1.msra.mxu0 %v2988
  %3085 = vmatprep.subr.mxu0 0.0
  %3086 = vmatpush1.msra.mxu0 %v2989
  %3087 = vmatprep.subr.mxu0 0.0
  %3088 = vmatpush1.msra.mxu0 %v2990
  %3089 = vmatprep.subr.mxu0 0.0
  %3090 = vmatpush1.msra.mxu0 %v2991
  %3091 = vmatprep.subr.mxu0 0.0
  %3092 = vmatpush1.msra.mxu0 %v2992
  %3093 = vmatprep.subr.mxu0 0.0
  %3094 = vmatpush1.msra.mxu0 %v2993
  %3095 = vmatprep.subr.mxu0 0.0
  %3096 = vmatpush1.msra.mxu0 %v2994
  %3097 = vmatprep.subr.mxu0 0.0
  %3098 = vmatpush1.msra.mxu0 %v2995
  %3099 = vmatprep.mubr.f32.mxu0 %v2837
  %3100 = vmatmul.mubr.f32.gmra.mrb[0].mxu0 %v2836
  %v3101 = vpop.f32.mrb[0].mxu0
  %v3102 = vadd.f32 %v3033, %v3101
  %v3103 = vpop.f32.mrb[0].mxu0
  %3104 = vmatprep.mubr.f32.mxu0 %v2841
  %3105 = vmatmul.mubr.f32.gmra.mrb[0].mxu0 %v2840
  %v3106 = vpop.f32.mrb[0].mxu0
  %v3107 = vadd.f32 %v3033, %v3106
  %v3108 = vpop.f32.mrb[0].mxu0
  %3109 = vmatprep.mubr.f32.mxu0 %v2845
  %3110 = vmatmul.mubr.f32.gmra.mrb[0].mxu0 %v2844
  %v3111 = vpop.f32.mrb[0].mxu0
  %v3112 = vadd.f32 %v3033, %v3111
  %v3113 = vpop.f32.mrb[0].mxu0
  %3114 = vmatprep.mubr.f32.mxu0 %v2849
  %3115 = vmatmul.mubr.f32.gmra.mrb[0].mxu0 %v2848
  %v3116 = vpop.f32.mrb[0].mxu0
  %v3117 = vadd.f32 %v3033, %v3116
  %v3118 = vpop.f32.mrb[0].mxu0
  %3119 = vmatprep.mubr.f32.mxu0 %v2853
  %3120 = vmatmul.mubr.f32.gmra.mrb[0].mxu0 %v2852
  %v3121 = vpop.f32.mrb[0].mxu0
  %v3122 = vadd.f32 %v3033, %v3121
  %v3123 = vpop.f32.mrb[0].mxu0
  %3124 = vmatprep.mubr.f32.mxu0 %v2857
  %3125 = vmatmul.mubr.f32.gmra.mrb[0].mxu0 %v2856
  %v3126 = vpop.f32.mrb[0].mxu0
  %v3127 = vadd.f32 %v3033, %v3126
  %v3128 = vpop.f32.mrb[0].mxu0
  %3129 = vmatprep.mubr.f32.mxu0 %v2861
  %3130 = vmatmul.mubr.f32.gmra.mrb[0].mxu0 %v2860
  %v3131 = vpop.f32.mrb[0].mxu0
  %v3132 = vadd.f32 %v3033, %v3131
  %v3133 = vpop.f32.mrb[0].mxu0
  %3134 = vmatprep.mubr.f32.mxu0 %v2865
  %3135 = vmatmul.mubr.f32.gmra.mrb[0].mxu0 %v2864
  %v3136 = vpop.f32.mrb[0].mxu0
  %v3137 = vadd.f32 %v3033, %v3136
  %v3138 = vpop.f32.mrb[0].mxu0
  %3139 = vmatprep.mubr.f32.mxu0 %v2869
  %3140 = vmatmul.mubr.f32.gmra.mrb[0].mxu0 %v2868
  %v3141 = vpop.f32.mrb[0].mxu0
  %v3142 = vadd.f32 %v3033, %v3141
  %v3143 = vpop.f32.mrb[0].mxu0
  %3144 = vmatprep.mubr.f32.mxu0 %v2873
  %3145 = vmatmul.mubr.f32.gmra.mrb[0].mxu0 %v2872
  %v3146 = vpop.f32.mrb[0].mxu0
  %v3147 = vadd.f32 %v3033, %v3146
  %v3148 = vpop.f32.mrb[0].mxu0
  %3149 = vmatprep.mubr.f32.mxu0 %v2877
  %3150 = vmatmul.mubr.f32.gmra.mrb[0].mxu0 %v2876
  %v3151 = vpop.f32.mrb[0].mxu0
  %v3152 = vadd.f32 %v3033, %v3151
  %v3153 = vpop.f32.mrb[0].mxu0
  %3154 = vmatprep.mubr.f32.mxu0 %v2881
  %3155 = vmatmul.mubr.f32.gmra.mrb[0].mxu0 %v2880
  %v3156 = vpop.f32.mrb[0].mxu0
  %v3157 = vadd.f32 %v3033, %v3156
  %v3158 = vpop.f32.mrb[0].mxu0
  %3159 = vmatprep.mubr.f32.mxu0 %v2885
  %3160 = vmatmul.mubr.f32.gmra.mrb[0].mxu0 %v2884
  %v3161 = vpop.f32.mrb[0].mxu0
  %v3162 = vadd.f32 %v3033, %v3161
  %v3163 = vpop.f32.mrb[0].mxu0
  %3164 = vmatprep.mubr.f32.mxu0 %v2889
  %3165 = vmatmul.mubr.f32.gmra.mrb[0].mxu0 %v2888
  %v3166 = vpop.f32.mrb[0].mxu0
  %v3167 = vadd.f32 %v3033, %v3166
  %v3168 = vpop.f32.mrb[0].mxu0
  %3169 = vmatprep.mubr.f32.mxu0 %v2893
  %3170 = vmatmul.mubr.f32.gmra.mrb[0].mxu0 %v2892
  %v3171 = vpop.f32.mrb[0].mxu0
  %v3172 = vadd.f32 %v3033, %v3171
  %v3173 = vpop.f32.mrb[0].mxu0
  %3174 = vmatprep.mubr.f32.mxu0 %v2897
  %3175 = vmatmul.mubr.f32.gmra.mrb[0].mxu0 %v2896
  %v3176 = vpop.f32.mrb[0].mxu0
  %v3177 = vadd.f32 %v3033, %v3176
  %v3178 = vpop.f32.mrb[0].mxu0
  %3179 = vdwg.mxu0
  %3180 = vmatprep.subr.mxu0 0.0
  %3181 = vmatpush1.msra.mxu0 %v2996
  %3182 = vmatprep.subr.mxu0 0.0
  %3183 = vmatpush1.msra.mxu0 %v2997
  %3184 = vmatprep.subr.mxu0 0.0
  %3185 = vmatpush1.msra.mxu0 %v2998
  %3186 = vmatprep.subr.mxu0 0.0
  %3187 = vmatpush1.msra.mxu0 %v2999
  %3188 = vmatprep.subr.mxu0 0.0
  %3189 = vmatpush1.msra.mxu0 %v3000
  %3190 = vmatprep.subr.mxu0 0.0
  %3191 = vmatpush1.msra.mxu0 %v3001
  %3192 = vmatprep.subr.mxu0 0.0
  %3193 = vmatpush1.msra.mxu0 %v3002
  %3194 = vmatprep.subr.mxu0 0.0
  %3195 = vmatpush1.msra.mxu0 %v3003
  %3196 = vmatprep.subr.mxu0 0.0
  %3197 = vmatpush1.msra.mxu0 %v3004
  %3198 = vmatprep.subr.mxu0 0.0
  %3199 = vmatpush1.msra.mxu0 %v3005
  %3200 = vmatprep.subr.mxu0 0.0
  %3201 = vmatpush1.msra.mxu0 %v3006
  %3202 = vmatprep.subr.mxu0 0.0
  %3203 = vmatpush1.msra.mxu0 %v3007
  %3204 = vmatprep.subr.mxu0 0.0
  %3205 = vmatpush1.msra.mxu0 %v3008
  %3206 = vmatprep.subr.mxu0 0.0
  %3207 = vmatpush1.msra.mxu0 %v3009
  %3208 = vmatprep.subr.mxu0 0.0
  %3209 = vmatpush1.msra.mxu0 %v3010
  %3210 = vmatprep.subr.mxu0 0.0
  %3211 = vmatpush1.msra.mxu0 %v3011
  %3212 = vmatprep.subr.mxu0 0.0
  %3213 = vmatpush1.msra.mxu0 %v3012
  %3214 = vmatprep.subr.mxu0 0.0
  %3215 = vmatpush1.msra.mxu0 %v3013
  %3216 = vmatprep.subr.mxu0 0.0
  %3217 = vmatpush1.msra.mxu0 %v3014
  %3218 = vmatprep.subr.mxu0 0.0
  %3219 = vmatpush1.msra.mxu0 %v3015
  %3220 = vmatprep.subr.mxu0 0.0
  %3221 = vmatpush1.msra.mxu0 %v3016
  %3222 = vmatprep.subr.mxu0 0.0
  %3223 = vmatpush1.msra.mxu0 %v3017
  %3224 = vmatprep.subr.mxu0 0.0
  %3225 = vmatpush1.msra.mxu0 %v3018
  %3226 = vmatprep.subr.mxu0 0.0
  %3227 = vmatpush1.msra.mxu0 %v3019
  %3228 = vmatprep.subr.mxu0 0.0
  %3229 = vmatpush1.msra.mxu0 %v3020
  %3230 = vmatprep.subr.mxu0 0.0
  %3231 = vmatpush1.msra.mxu0 %v3021
  %3232 = vmatprep.subr.mxu0 0.0
  %3233 = vmatpush1.msra.mxu0 %v3022
  %3234 = vmatprep.subr.mxu0 0.0
  %3235 = vmatpush1.msra.mxu0 %v3023
  %3236 = vmatprep.subr.mxu0 0.0
  %3237 = vmatpush1.msra.mxu0 %v3024
  %3238 = vmatprep.subr.mxu0 0.0
  %3239 = vmatpush1.msra.mxu0 %v3025
  %3240 = vmatprep.subr.mxu0 0.0
  %3241 = vmatpush1.msra.mxu0 %v3026
  %3242 = vmatprep.subr.mxu0 0.0
  %3243 = vmatpush1.msra.mxu0 %v3027
  %3244 = vmatprep.mubr.f32.mxu0 %v2839
  %3245 = vmatmul.mubr.f32.gmra.mrb[0].mxu0 %v2838
  %v3246 = vpop.f32.mrb[0].mxu0
  %v3247 = vadd.f32 %v3102, %v3246
  %v3248 = vpop.f32.mrb[0].mxu0
  %3249 = vmatprep.mubr.f32.mxu0 %v2843
  %3250 = vmatmul.mubr.f32.gmra.mrb[0].mxu0 %v2842
  %v3251 = vpop.f32.mrb[0].mxu0
  %v3252 = vadd.f32 %v3107, %v3251
  %v3253 = vpop.f32.mrb[0].mxu0
  %3254 = vmatprep.mubr.f32.mxu0 %v2847
  %3255 = vmatmul.mubr.f32.gmra.mrb[0].mxu0 %v2846
  %v3256 = vpop.f32.mrb[0].mxu0
  %v3257 = vadd.f32 %v3112, %v3256
  %v3258 = vpop.f32.mrb[0].mxu0
  %3259 = vmatprep.mubr.f32.mxu0 %v2851
  %3260 = vmatmul.mubr.f32.gmra.mrb[0].mxu0 %v2850
  %v3261 = vpop.f32.mrb[0].mxu0
  %v3262 = vadd.f32 %v3117, %v3261
  %v3263 = vpop.f32.mrb[0].mxu0
  %3264 = vmatprep.mubr.f32.mxu0 %v2855
  %3265 = vmatmul.mubr.f32.gmra.mrb[0].mxu0 %v2854
  %v3266 = vpop.f32.mrb[0].mxu0
  %v3267 = vadd.f32 %v3122, %v3266
  %v3268 = vpop.f32.mrb[0].mxu0
  %3269 = vmatprep.mubr.f32.mxu0 %v2859
  %3270 = vmatmul.mubr.f32.gmra.mrb[0].mxu0 %v2858
  %v3271 = vpop.f32.mrb[0].mxu0
  %v3272 = vadd.f32 %v3127, %v3271
  %v3273 = vpop.f32.mrb[0].mxu0
  %3274 = vmatprep.mubr.f32.mxu0 %v2863
  %3275 = vmatmul.mubr.f32.gmra.mrb[0].mxu0 %v2862
  %v3276 = vpop.f32.mrb[0].mxu0
  %v3277 = vadd.f32 %v3132, %v3276
  %v3278 = vpop.f32.mrb[0].mxu0
  %3279 = vmatprep.mubr.f32.mxu0 %v2867
  %3280 = vmatmul.mubr.f32.gmra.mrb[0].mxu0 %v2866
  %v3281 = vpop.f32.mrb[0].mxu0
  %v3282 = vadd.f32 %v3137, %v3281
  %v3283 = vpop.f32.mrb[0].mxu0
  %3284 = vmatprep.mubr.f32.mxu0 %v2871
  %3285 = vmatmul.mubr.f32.gmra.mrb[0].mxu0 %v2870
  %v3286 = vpop.f32.mrb[0].mxu0
  %v3287 = vadd.f32 %v3142, %v3286
  %v3288 = vpop.f32.mrb[0].mxu0
  %3289 = vmatprep.mubr.f32.mxu0 %v2875
  %3290 = vmatmul.mubr.f32.gmra.mrb[0].mxu0 %v2874
  %v3291 = vpop.f32.mrb[0].mxu0
  %v3292 = vadd.f32 %v3147, %v3291
  %v3293 = vpop.f32.mrb[0].mxu0
  %3294 = vmatprep.mubr.f32.mxu0 %v2879
  %3295 = vmatmul.mubr.f32.gmra.mrb[0].mxu0 %v2878
  %v3296 = vpop.f32.mrb[0].mxu0
  %v3297 = vadd.f32 %v3152, %v3296
  %v3298 = vpop.f32.mrb[0].mxu0
  %3299 = vmatprep.mubr.f32.mxu0 %v2883
  %3300 = vmatmul.mubr.f32.gmra.mrb[0].mxu0 %v2882
  %v3301 = vpop.f32.mrb[0].mxu0
  %v3302 = vadd.f32 %v3157, %v3301
  %v3303 = vpop.f32.mrb[0].mxu0
  %3304 = vmatprep.mubr.f32.mxu0 %v2887
  %3305 = vmatmul.mubr.f32.gmra.mrb[0].mxu0 %v2886
  %v3306 = vpop.f32.mrb[0].mxu0
  %v3307 = vadd.f32 %v3162, %v3306
  %v3308 = vpop.f32.mrb[0].mxu0
  %3309 = vmatprep.mubr.f32.mxu0 %v2891
  %3310 = vmatmul.mubr.f32.gmra.mrb[0].mxu0 %v2890
  %v3311 = vpop.f32.mrb[0].mxu0
  %v3312 = vadd.f32 %v3167, %v3311
  %v3313 = vpop.f32.mrb[0].mxu0
  %3314 = vmatprep.mubr.f32.mxu0 %v2895
  %3315 = vmatmul.mubr.f32.gmra.mrb[0].mxu0 %v2894
  %v3316 = vpop.f32.mrb[0].mxu0
  %v3317 = vadd.f32 %v3172, %v3316
  %v3318 = vpop.f32.mrb[0].mxu0
  %3319 = vmatprep.mubr.f32.mxu0 %v2899
  %3320 = vmatmul.mubr.f32.gmra.mrb[0].mxu0 %v2898
  %v3321 = vpop.f32.mrb[0].mxu0
  %v3322 = vadd.f32 %v3177, %v3321
  %v3323 = vpop.f32.mrb[0].mxu0
  %3324 = vdwg.mxu0
  %3325 = vmatprep.subr.mxu0 0.0
  %3326 = vmatpush1.msra.mxu0 %v3247
  %3327 = vmatprep.subr.mxu0 0.0
  %3328 = vmatpush1.msra.mxu0 %v3252
  %3329 = vmatprep.subr.mxu0 0.0
  %3330 = vmatpush1.msra.mxu0 %v3257
  %3331 = vmatprep.subr.mxu0 0.0
  %3332 = vmatpush1.msra.mxu0 %v3262
  %3333 = vmatprep.subr.mxu0 0.0
  %3334 = vmatpush1.msra.mxu0 %v3267
  %3335 = vmatprep.subr.mxu0 0.0
  %3336 = vmatpush1.msra.mxu0 %v3272
  %3337 = vmatprep.subr.mxu0 0.0
  %3338 = vmatpush1.msra.mxu0 %v3277
  %3339 = vmatprep.subr.mxu0 0.0
  %3340 = vmatpush1.msra.mxu0 %v3282
  %3341 = vmatprep.subr.mxu0 0.0
  %3342 = vmatpush1.msra.mxu0 %v3287
  %3343 = vmatprep.subr.mxu0 0.0
  %3344 = vmatpush1.msra.mxu0 %v3292
  %3345 = vmatprep.subr.mxu0 0.0
  %3346 = vmatpush1.msra.mxu0 %v3297
  %3347 = vmatprep.subr.mxu0 0.0
  %3348 = vmatpush1.msra.mxu0 %v3302
  %3349 = vmatprep.subr.mxu0 0.0
  %3350 = vmatpush1.msra.mxu0 %v3307
  %3351 = vmatprep.subr.mxu0 0.0
  %3352 = vmatpush1.msra.mxu0 %v3312
  %3353 = vmatprep.subr.mxu0 0.0
  %3354 = vmatpush1.msra.mxu0 %v3317
  %3355 = vmatprep.subr.mxu0 0.0
  %3356 = vmatpush1.msra.mxu0 %v3322
  %3357 = vmatprep.subr.mxu0 0.0
  %3358 = vmatpush1.msra.mxu0 0.0
  %3359 = vmatprep.subr.mxu0 0.0
  %3360 = vmatpush1.msra.mxu0 0.0
  %3361 = vmatprep.subr.mxu0 0.0
  %3362 = vmatpush1.msra.mxu0 0.0
  %3363 = vmatprep.subr.mxu0 0.0
  %3364 = vmatpush1.msra.mxu0 0.0
  %3365 = vmatprep.subr.mxu0 0.0
  %3366 = vmatpush1.msra.mxu0 0.0
  %3367 = vmatprep.subr.mxu0 0.0
  %3368 = vmatpush1.msra.mxu0 0.0
  %3369 = vmatprep.subr.mxu0 0.0
  %3370 = vmatpush1.msra.mxu0 0.0
  %3371 = vmatprep.subr.mxu0 0.0
  %3372 = vmatpush1.msra.mxu0 0.0
  %3373 = vmatprep.subr.mxu0 0.0
  %3374 = vmatpush1.msra.mxu0 0.0
  %3375 = vmatprep.subr.mxu0 0.0
  %3376 = vmatpush1.msra.mxu0 0.0
  %3377 = vmatprep.subr.mxu0 0.0
  %3378 = vmatpush1.msra.mxu0 0.0
  %3379 = vmatprep.subr.mxu0 0.0
  %3380 = vmatpush1.msra.mxu0 0.0
  %3381 = vmatprep.subr.mxu0 0.0
  %3382 = vmatpush1.msra.mxu0 0.0
  %3383 = vmatprep.subr.mxu0 0.0
  %3384 = vmatpush1.msra.mxu0 0.0
  %3385 = vmatprep.subr.mxu0 0.0
  %3386 = vmatpush1.msra.mxu0 0.0
  %3387 = vmatprep.subr.mxu0 0.0
  %3388 = vmatpush1.msra.mxu0 0.0
  %3389 = vmatprep.mubr.f32.mxu0 0.0
  %3390 = vmatmul.mubr.f32.gmra.mrb[0].mxu0 %v1460
  %v3391 = vpop.f32.mrb[0].mxu0
  %v3392 = vadd.f32 0.0, %v3391
  %v3393 = vpop.f32.mrb[0].mxu0
  %3394 = vmatprep.mubr.f32.mxu0 0.0
  %3395 = vmatmul.mubr.f32.gmra.mrb[0].mxu0 %v1461
  %v3396 = vpop.f32.mrb[0].mxu0
  %v3397 = vadd.f32 0.0, %v3396
  %v3398 = vpop.f32.mrb[0].mxu0
  %3399 = vdwg.mxu0
  %v3400 = vld [vmem:[%s21] sm:$0xff]
  %v3401 = vld [vmem:[%s21 + $0x8] sm:$0xff]
  %v3402 = vld [vmem:[%s22] sm:$0x1]
  %v3404 = vlaneseq
  %v3405 = vshrl.u32 %v3404, 7
  %v3406 = vsub.s32 0, %v3405
  %v3407 = vrot.slane %v3402, %v3406
  %v3410 = vsel %vm1496, %v3392, 0
  %v3413 = vsel %vm1496, %v3397, 0
  %3415 = vmatprep.subr.mxu0 0.0
  %3416 = vmatpush1.msra.mxu0 %v3400
  %3417 = vmatprep.subr.mxu0 0.0
  %3418 = vmatpush1.msra.mxu0 %v3401
  %3419 = vmatprep.subr.mxu0 0.0
  %3420 = vmatpush1.msra.mxu0 0.0
  %3421 = vmatprep.subr.mxu0 0.0
  %3422 = vmatpush1.msra.mxu0 0.0
  %3423 = vmatprep.subr.mxu0 0.0
  %3424 = vmatpush1.msra.mxu0 0.0
  %3425 = vmatprep.subr.mxu0 0.0
  %3426 = vmatpush1.msra.mxu0 0.0
  %3427 = vmatprep.subr.mxu0 0.0
  %3428 = vmatpush1.msra.mxu0 0.0
  %3429 = vmatprep.subr.mxu0 0.0
  %3430 = vmatpush1.msra.mxu0 0.0
  %3431 = vmatprep.subr.mxu0 0.0
  %3432 = vmatpush1.msra.mxu0 0.0
  %3433 = vmatprep.subr.mxu0 0.0
  %3434 = vmatpush1.msra.mxu0 0.0
  %3435 = vmatprep.subr.mxu0 0.0
  %3436 = vmatpush1.msra.mxu0 0.0
  %3437 = vmatprep.subr.mxu0 0.0
  %3438 = vmatpush1.msra.mxu0 0.0
  %3439 = vmatprep.subr.mxu0 0.0
  %3440 = vmatpush1.msra.mxu0 0.0
  %3441 = vmatprep.subr.mxu0 0.0
  %3442 = vmatpush1.msra.mxu0 0.0
  %3443 = vmatprep.subr.mxu0 0.0
  %3444 = vmatpush1.msra.mxu0 0.0
  %3445 = vmatprep.subr.mxu0 0.0
  %3446 = vmatpush1.msra.mxu0 0.0
  %3447 = vmatprep.subr.mxu0 0.0
  %3448 = vmatpush1.msra.mxu0 0.0
  %3449 = vmatprep.subr.mxu0 0.0
  %3450 = vmatpush1.msra.mxu0 0.0
  %3451 = vmatprep.subr.mxu0 0.0
  %3452 = vmatpush1.msra.mxu0 0.0
  %3453 = vmatprep.subr.mxu0 0.0
  %3454 = vmatpush1.msra.mxu0 0.0
  %3455 = vmatprep.subr.mxu0 0.0
  %3456 = vmatpush1.msra.mxu0 0.0
  %3457 = vmatprep.subr.mxu0 0.0
  %3458 = vmatpush1.msra.mxu0 0.0
  %3459 = vmatprep.subr.mxu0 0.0
  %3460 = vmatpush1.msra.mxu0 0.0
  %3461 = vmatprep.subr.mxu0 0.0
  %3462 = vmatpush1.msra.mxu0 0.0
  %3463 = vmatprep.subr.mxu0 0.0
  %3464 = vmatpush1.msra.mxu0 0.0
  %3465 = vmatprep.subr.mxu0 0.0
  %3466 = vmatpush1.msra.mxu0 0.0
  %3467 = vmatprep.subr.mxu0 0.0
  %3468 = vmatpush1.msra.mxu0 0.0
  %3469 = vmatprep.subr.mxu0 0.0
  %3470 = vmatpush1.msra.mxu0 0.0
  %3471 = vmatprep.subr.mxu0 0.0
  %3472 = vmatpush1.msra.mxu0 0.0
  %3473 = vmatprep.subr.mxu0 0.0
  %3474 = vmatpush1.msra.mxu0 0.0
  %3475 = vmatprep.subr.mxu0 0.0
  %3476 = vmatpush1.msra.mxu0 0.0
  %3477 = vmatprep.subr.mxu0 0.0
  %3478 = vmatpush1.msra.mxu0 0.0
  %3479 = vmatprep.mubr.f32.mxu0 0.0
  %3480 = vmatmul.mubr.f32.gmra.mrb[0].mxu0 %v3410
  %v3481 = vpop.f32.mrb[0].mxu0
  %v3482 = vadd.f32 %v3407, %v3481
  %v3483 = vpop.f32.mrb[0].mxu0
  %3484 = vmatprep.mubr.f32.mxu0 0.0
  %3485 = vmatmul.mubr.f32.gmra.mrb[0].mxu0 %v3413
  %v3486 = vpop.f32.mrb[0].mxu0
  %v3487 = vadd.f32 %v3407, %v3486
  %v3488 = vpop.f32.mrb[0].mxu0
  %3489 = vdwg.mxu0
  %vm3490 = vcmask 39936
  %3491 = vst.msk [vmem:[%s23] sm:$0xff] %vm3490, %v3482
  %3492 = vst.msk [vmem:[%s23 + $0x8] sm:$0xff] %vm3490, %v3487
  // Predicated region
  $region94: #{exchangeable_decoder.1} parent=0 // pred_check
    _
  $region95: #{exchangeable_decoder.1} parent=0 // pred_check_branch
    %3494 = sbr.rel (0) target = $region97
  $region96: #{exchangeable_decoder.1} parent=0 // pred_region
    _
  $region97: #{exchangeable_decoder.1} parent=0 // pred_fallthru
    _
  // Predicated region
  $region98: #{exchangeable_decoder.1} parent=0 // pred_check
    _
  $region99: #{exchangeable_decoder.1} parent=0 // pred_check_branch
    %3496 = sbr.rel (0) target = $region101
  $region100: #{exchangeable_decoder.1} parent=0 // pred_region
    _
  $region101: #{exchangeable_decoder.1} parent=0 // pred_fallthru
    _

</llo_original>
